<compile_context>
chip_gen: v5e
topology: v5e:2x2
jax: 0.10.0
libtpu: 0.0.40
codegen_flags: <defaults>
</compile_context>

<pallas_src>
import functools

import jax
import jax.numpy as jnp
import numpy as np
from jax.experimental import pallas as pl
from jax.experimental.pallas import tpu as pltpu

BN_EPS = 1e-5


# ----------------------------------------------------------------------------
# Pallas kernel: out = act((x @ w) * scale + shift), scale/shift per column
# ----------------------------------------------------------------------------
def _matmul_scale_act_kernel(x_ref, w_ref, s_ref, t_ref, o_ref, *, act):
    acc = jnp.dot(x_ref[...], w_ref[...], preferred_element_type=jnp.float32)
    acc = acc * s_ref[...] + t_ref[...]          # (1, TN) broadcasts over rows
    if act == "relu":
        acc = jnp.maximum(acc, 0.0)
    elif act == "tanh":
        acc = jnp.tanh(acc)
    o_ref[...] = acc.astype(o_ref.dtype)


def matmul_scale_act(x, w, scale, shift, *, act, out_dtype=jnp.float32,
                     tm=256, tn=1024):
    """x:(M,K), w:(K,N), scale/shift:(N,) -> act((x@w)*scale+shift) : (M,N)."""
    M, K = x.shape
    Kw, N = w.shape
    assert K == Kw
    TM = M if M <= tm else tm            # tm is a multiple of 8
    TN = N if N <= tn else tn            # tn is a multiple of 128
    grid = (pl.cdiv(M, TM), pl.cdiv(N, TN))

    xb = x.astype(jnp.bfloat16)
    wb = w.astype(jnp.bfloat16)
    s2 = scale.reshape(1, N).astype(jnp.float32)
    t2 = shift.reshape(1, N).astype(jnp.float32)

    cost = pl.CostEstimate(
        flops=2 * M * N * K,
        transcendentals=M * N if act == "tanh" else 0,
        bytes_accessed=(M * K + K * N) * 2 + 2 * N * 4
                       + M * N * jnp.dtype(out_dtype).itemsize)

    kernel = functools.partial(_matmul_scale_act_kernel, act=act)
    return pl.pallas_call(
        kernel,
        out_shape=jax.ShapeDtypeStruct((M, N), out_dtype),
        grid=grid,
        in_specs=[
            pl.BlockSpec((TM, K), lambda i, j: (i, 0)),
            pl.BlockSpec((K, TN), lambda i, j: (0, j)),
            pl.BlockSpec((1, TN), lambda i, j: (0, j)),
            pl.BlockSpec((1, TN), lambda i, j: (0, j)),
        ],
        out_specs=pl.BlockSpec((TM, TN), lambda i, j: (i, j)),
        compiler_params=pltpu.CompilerParams(
            dimension_semantics=("parallel", "parallel")),
        cost_estimate=cost,
    )(xb, wb, s2, t2)


# ----------------------------------------------------------------------------
# Wrapper glue (plain JAX): patch extraction, NHWC, K order = (dh, dw, cin)
# ----------------------------------------------------------------------------
def im2col_nhwc(x, *, patch, stride, pad, n_pos):
    b, _, _, c = x.shape
    xp = jnp.pad(x, ((0, 0), (pad, pad), (pad, pad), (0, 0)))
    cols = []
    for dh in range(patch):
        for dw in range(patch):
            cols.append(xp[:, dh:dh + stride * n_pos:stride,
                           dw:dw + stride * n_pos:stride, :])
    pat = jnp.stack(cols, axis=3)                # (B, n, n, patch*patch, C)
    return pat.reshape(b * n_pos * n_pos, patch * patch * c)


# ----------------------------------------------------------------------------
# One-time weight prep: ConvTranspose2d(k=4, s=2, p=1) -> dense matmul weight
# ----------------------------------------------------------------------------
def convt_superpixel_weight(w, block):
    """PyTorch ConvTranspose2d weight (Cin, Cout, 4, 4) -> matrix of shape
    (patch*patch*Cin, block*block*Cout), where each matmul row produces a
    block x block output super-pixel from a patch x patch window of the
    zero-padded input (patch = block//2 + 2). Rows ordered (dh, dw, ci) to
    match im2col_nhwc; columns ordered (u, v, co)."""
    w = np.asarray(w, np.float32)
    cin, cout, k, _ = w.shape
    patch = block // 2 + 2
    mat = np.zeros((patch * patch * cin, block * block * cout), np.float32)
    for u in range(block):
        for v in range(block):
            for dh in range(patch):
                for dw in range(patch):
                    kh = u - 2 * dh + 3
                    kw = v - 2 * dw + 3
                    if 0 <= kh < k and 0 <= kw < k:
                        r0 = (dh * patch + dw) * cin
                        c0 = (u * block + v) * cout
                        mat[r0:r0 + cin, c0:c0 + cout] = w[:, :, kh, kw]
    return jnp.asarray(mat)


def prepare_params(params):
    """Fold BatchNorm / biases into per-column scale+shift and pre-shuffle all
    weights once so the forward pass has no activation-layout work."""
    prep = {}
    # fc + BatchNorm1d fold; permute columns so fc output is NHWC (h, w, c)
    s = params["bn1_gamma"] * jax.lax.rsqrt(params["bn1_var"] + BN_EPS)
    t = (params["bfc"] - params["bn1_mean"]) * s + params["bn1_beta"]
    perm = np.transpose(np.arange(128 * 7 * 7).reshape(128, 7, 7),
                        (1, 2, 0)).reshape(-1)
    w = jnp.transpose(params["wfc"])             # (L, 6272), feature = (c,h,w)
    prep["w_fc"] = jnp.take(w, perm, axis=1)
    prep["s_fc"] = jnp.take(s, perm)
    prep["t_fc"] = jnp.take(t, perm)
    # ConvTranspose2d(128->64) + BatchNorm2d fold (2x2 output super-pixel)
    s1 = params["bn2_gamma"] * jax.lax.rsqrt(params["bn2_var"] + BN_EPS)
    t1 = (params["bt1"] - params["bn2_mean"]) * s1 + params["bn2_beta"]
    prep["w_t1"] = convt_superpixel_weight(params["wt1"], block=2)   # (1152, 256)
    prep["s_t1"] = jnp.tile(s1, 4)
    prep["t_t1"] = jnp.tile(t1, 4)
    # ConvTranspose2d(64->1) + Tanh (4x4 output super-pixel)
    prep["w_t2"] = convt_superpixel_weight(params["wt2"], block=4)   # (1024, 16)
    prep["s_t2"] = jnp.ones((16,), jnp.float32)
    prep["t_t2"] = jnp.tile(params["bt2"], 16)
    return prep


# ----------------------------------------------------------------------------
# Generator forward
# ----------------------------------------------------------------------------
def generator_forward(z, prep):
    B = z.shape[0]
    # fc + BN1d + ReLU -> (B, 7*7*128), already in NHWC (h, w, c) order
    h0 = matmul_scale_act(z, prep["w_fc"], prep["s_fc"], prep["t_fc"],
                          act="relu", out_dtype=jnp.bfloat16, tn=896)
    h0 = h0.reshape(B, 7, 7, 128)

    # ConvT(128->64, k4 s2 p1) + BN2d + ReLU : 2x2 output super-pixel matmul
    p1 = im2col_nhwc(h0, patch=3, stride=1, pad=1, n_pos=7)        # (B*49, 1152)
    y1 = matmul_scale_act(p1, prep["w_t1"], prep["s_t1"], prep["t_t1"],
                          act="relu", out_dtype=jnp.bfloat16)      # (B*49, 256)
    h1 = y1.reshape(B, 7, 7, 2, 2, 64)
    h1 = jnp.transpose(h1, (0, 1, 3, 2, 4, 5)).reshape(B, 14, 14, 64)

    # ConvT(64->1, k4 s2 p1) + Tanh : 4x4 output super-pixel matmul
    p2 = im2col_nhwc(h1, patch=4, stride=2, pad=1, n_pos=7)        # (B*49, 1024)
    y2 = matmul_scale_act(p2, prep["w_t2"], prep["s_t2"], prep["t_t2"],
                          act="tanh", out_dtype=jnp.float32)       # (B*49, 16)
    img = y2.reshape(B, 7, 7, 4, 4)
    img = jnp.transpose(img, (0, 1, 3, 2, 4)).reshape(B, 1, 28, 28)
    return img


# ----------------------------------------------------------------------------
# Pure-JAX reference for sanity checking
# ----------------------------------------------------------------------------
def _conv_transpose_ref(x, w, b, stride=2, padding=1):
    k = w.shape[2]
    w_conv = jnp.transpose(w, (1, 0, 2, 3))[:, :, ::-1, ::-1]
    y = jax.lax.conv_general_dilated(
        x, w_conv, window_strides=(1, 1),
        padding=[(k - 1 - padding, k - 1 - padding)] * 2,
        lhs_dilation=(stride, stride),
        dimension_numbers=("NCHW", "OIHW", "NCHW"),
        precision=jax.lax.Precision.HIGHEST)
    return y + b[None, :, None, None]


def reference_forward(z, params):
    a = jnp.dot(z, params["wfc"].T,
                precision=jax.lax.Precision.HIGHEST) + params["bfc"]
    a = ((a - params["bn1_mean"]) * jax.lax.rsqrt(params["bn1_var"] + BN_EPS)
         * params["bn1_gamma"] + params["bn1_beta"])
    a = jnp.maximum(a, 0.0)
    x = a.reshape(-1, 128, 7, 7)
    y = _conv_transpose_ref(x, params["wt1"], params["bt1"])
    y = ((y - params["bn2_mean"][None, :, None, None])
         * jax.lax.rsqrt(params["bn2_var"] + BN_EPS)[None, :, None, None]
         * params["bn2_gamma"][None, :, None, None]
         + params["bn2_beta"][None, :, None, None])
    y = jnp.maximum(y, 0.0)
    y = _conv_transpose_ref(y, params["wt2"], params["bt2"])
    return jnp.tanh(y)


# ----------------------------------------------------------------------------
# Deterministic parameter init (PyTorch-layout weights)
# ----------------------------------------------------------------------------
def init_params(key, latent_dim):
    ks = jax.random.split(key, 14)

    def u(k, shape, bound):
        return jax.random.uniform(k, shape, jnp.float32, -bound, bound)

    f = 128 * 7 * 7
    b_fc = 1.0 / np.sqrt(latent_dim)
    b_t1 = 1.0 / np.sqrt(128 * 4 * 4)
    b_t2 = 1.0 / np.sqrt(64 * 4 * 4)
    return {
        "wfc": u(ks[0], (f, latent_dim), b_fc),
        "bfc": u(ks[1], (f,), b_fc),
        "bn1_gamma": jax.random.uniform(ks[2], (f,), jnp.float32, 0.5, 1.5),
        "bn1_beta":  u(ks[3], (f,), 0.1),
        "bn1_mean":  u(ks[4], (f,), 0.1),
        "bn1_var":   jax.random.uniform(ks[5], (f,), jnp.float32, 0.5, 1.5),
        "wt1": u(ks[6], (128, 64, 4, 4), b_t1),
        "bt1": u(ks[7], (64,), b_t1),
        "bn2_gamma": jax.random.uniform(ks[8], (64,), jnp.float32, 0.5, 1.5),
        "bn2_beta":  u(ks[9], (64,), 0.1),
        "bn2_mean":  u(ks[10], (64,), 0.1),
        "bn2_var":   jax.random.uniform(ks[11], (64,), jnp.float32, 0.5, 1.5),
        "wt2": u(ks[12], (64, 1, 4, 4), b_t2),
        "bt2": u(ks[13], (1,), b_t2),
    }


if __name__ == "__main__":
    key = jax.random.PRNGKey(0)
    latent_dim, batch = 64, 2
    k_params, k_z = jax.random.split(key)
    params = init_params(k_params, latent_dim)
    prep = prepare_params(params)      # one-time weight-side layout/BN folding

    z = jax.random.normal(k_z, (batch, latent_dim), dtype=jnp.float32)

    fwd = jax.jit(generator_forward)
    img = jax.block_until_ready(fwd(z, prep))
    assert img.shape == (batch, 1, 28, 28), img.shape

    ref = jax.block_until_ready(reference_forward(z, params))
    np.testing.assert_allclose(np.asarray(img), np.asarray(ref),
                               rtol=2e-2, atol=2e-2)
    print("KERNEL_OK")
</pallas_src>

<mosaic_0001>
module attributes {stable_mosaic.version = 11 : i64} {
  func.func @_matmul_scale_act_kernel(%arg0: i32, %arg1: i32, %arg2: memref<2x64xbf16, #tpu.memory_space<vmem>>, %arg3: memref<64x896xbf16, #tpu.memory_space<vmem>>, %arg4: memref<1x896xf32, #tpu.memory_space<vmem>>, %arg5: memref<1x896xf32, #tpu.memory_space<vmem>>, %arg6: memref<2x896xbf16, #tpu.memory_space<vmem>>) attributes {dimension_semantics = [#tpu.dimension_semantics<parallel>, #tpu.dimension_semantics<parallel>], iteration_bounds = array<i64: 1, 7>, scalar_prefetch = 0 : i64, scratch_operands = 0 : i64, tpu.core_type = #tpu.core_type<tc>, window_params = [{transform_indices = @transform_0, window_bounds = array<i64: 2, 64>}, {transform_indices = @transform_1, window_bounds = array<i64: 64, 896>}, {transform_indices = @transform_2, window_bounds = array<i64: 1, 896>}, {transform_indices = @transform_3, window_bounds = array<i64: 1, 896>}, {transform_indices = @transform_4, window_bounds = array<i64: 2, 896>}]} {
    %c0 = arith.constant 0 : index
    %c0_0 = arith.constant 0 : index
    %0 = vector.load %arg2[%c0, %c0_0] : memref<2x64xbf16, #tpu.memory_space<vmem>>, vector<2x64xbf16>
    %c0_1 = arith.constant 0 : index
    %c0_2 = arith.constant 0 : index
    %1 = vector.load %arg3[%c0_1, %c0_2] : memref<64x896xbf16, #tpu.memory_space<vmem>>, vector<64x896xbf16>
    %cst = arith.constant dense<0.000000e+00> : vector<2x896xf32>
    %2 = tpu.matmul %0, %1, %cst {dimension_numbers = #tpu.dot_dimension_numbers<[1], [0], [0], [1], [0, 0, 1, 1], [], []>} : vector<2x64xbf16>, vector<64x896xbf16>, vector<2x896xf32> -> vector<2x896xf32>
    %c0_3 = arith.constant 0 : index
    %c0_4 = arith.constant 0 : index
    %3 = vector.load %arg4[%c0_3, %c0_4] : memref<1x896xf32, #tpu.memory_space<vmem>>, vector<1x896xf32>
    %4 = vector.broadcast %3 : vector<1x896xf32> to vector<2x896xf32>
    %5 = arith.mulf %2, %4 : vector<2x896xf32>
    %c0_5 = arith.constant 0 : index
    %c0_6 = arith.constant 0 : index
    %6 = vector.load %arg5[%c0_5, %c0_6] : memref<1x896xf32, #tpu.memory_space<vmem>>, vector<1x896xf32>
    %7 = vector.broadcast %6 : vector<1x896xf32> to vector<2x896xf32>
    %8 = arith.addf %5, %7 : vector<2x896xf32>
    %cst_7 = arith.constant 0.000000e+00 : f32
    %9 = vector.broadcast %cst_7 : f32 to vector<2x896xf32>
    %10 = arith.maximumf %8, %9 : vector<2x896xf32>
    %11 = arith.truncf %10 : vector<2x896xf32> to vector<2x896xbf16>
    %c0_8 = arith.constant 0 : index
    %c0_9 = arith.constant 0 : index
    %12 = vector.load %arg6[%c0_8, %c0_9] : memref<2x896xbf16, #tpu.memory_space<vmem>>, vector<2x896xbf16>
    tpu.vector_store %arg6[%c0_8, %c0_9], %11 {strides = array<i32>} : memref<2x896xbf16, #tpu.memory_space<vmem>>, vector<2x896xbf16>,
    return
  }
  func.func @transform_0(%arg0: i32, %arg1: i32) -> (i32, i32) {
    %c0_i32 = arith.constant 0 : i32
    %c0_i32_0 = arith.constant 0 : i32
    return %arg0, %c0_i32 : i32, i32
  }
  func.func @transform_1(%arg0: i32, %arg1: i32) -> (i32, i32) {
    %c0_i32 = arith.constant 0 : i32
    %c0_i32_0 = arith.constant 0 : i32
    return %c0_i32, %arg1 : i32, i32
  }
  func.func @transform_2(%arg0: i32, %arg1: i32) -> (i32, i32) {
    %c0_i32 = arith.constant 0 : i32
    %c0_i32_0 = arith.constant 0 : i32
    return %c0_i32, %arg1 : i32, i32
  }
  func.func @transform_3(%arg0: i32, %arg1: i32) -> (i32, i32) {
    %c0_i32 = arith.constant 0 : i32
    %c0_i32_0 = arith.constant 0 : i32
    return %c0_i32, %arg1 : i32, i32
  }
  func.func @transform_4(%arg0: i32, %arg1: i32) -> (i32, i32) {
    %c0_i32 = arith.constant 0 : i32
    return %arg0, %arg1 : i32, i32
  }
}

module attributes {stable_mosaic.version = 11 : i64} {
  func.func @_matmul_scale_act_kernel(%arg0: i32, %arg1: i32, %arg2: memref<98x1152xbf16, #tpu.memory_space<vmem>>, %arg3: memref<1152x256xbf16, #tpu.memory_space<vmem>>, %arg4: memref<1x256xf32, #tpu.memory_space<vmem>>, %arg5: memref<1x256xf32, #tpu.memory_space<vmem>>, %arg6: memref<98x256xbf16, #tpu.memory_space<vmem>>) attributes {dimension_semantics = [#tpu.dimension_semantics<parallel>, #tpu.dimension_semantics<parallel>], iteration_bounds = array<i64: 1, 1>, scalar_prefetch = 0 : i64, scratch_operands = 0 : i64, tpu.core_type = #tpu.core_type<tc>, window_params = [{transform_indices = @transform_0, window_bounds = array<i64: 98, 1152>}, {transform_indices = @transform_1, window_bounds = array<i64: 1152, 256>}, {transform_indices = @transform_2, window_bounds = array<i64: 1, 256>}, {transform_indices = @transform_3, window_bounds = array<i64: 1, 256>}, {transform_indices = @transform_4, window_bounds = array<i64: 98, 256>}]} {
    %c0 = arith.constant 0 : index
    %c0_0 = arith.constant 0 : index
    %0 = vector.load %arg2[%c0, %c0_0] : memref<98x1152xbf16, #tpu.memory_space<vmem>>, vector<98x1152xbf16>
    %c0_1 = arith.constant 0 : index
    %c0_2 = arith.constant 0 : index
    %1 = vector.load %arg3[%c0_1, %c0_2] : memref<1152x256xbf16, #tpu.memory_space<vmem>>, vector<1152x256xbf16>
    %cst = arith.constant dense<0.000000e+00> : vector<98x256xf32>
    %2 = tpu.matmul %0, %1, %cst {dimension_numbers = #tpu.dot_dimension_numbers<[1], [0], [0], [1], [0, 0, 1, 1], [], []>} : vector<98x1152xbf16>, vector<1152x256xbf16>, vector<98x256xf32> -> vector<98x256xf32>
    %c0_3 = arith.constant 0 : index
    %c0_4 = arith.constant 0 : index
    %3 = vector.load %arg4[%c0_3, %c0_4] : memref<1x256xf32, #tpu.memory_space<vmem>>, vector<1x256xf32>
    %4 = vector.broadcast %3 : vector<1x256xf32> to vector<98x256xf32>
    %5 = arith.mulf %2, %4 : vector<98x256xf32>
    %c0_5 = arith.constant 0 : index
    %c0_6 = arith.constant 0 : index
    %6 = vector.load %arg5[%c0_5, %c0_6] : memref<1x256xf32, #tpu.memory_space<vmem>>, vector<1x256xf32>
    %7 = vector.broadcast %6 : vector<1x256xf32> to vector<98x256xf32>
    %8 = arith.addf %5, %7 : vector<98x256xf32>
    %cst_7 = arith.constant 0.000000e+00 : f32
    %9 = vector.broadcast %cst_7 : f32 to vector<98x256xf32>
    %10 = arith.maximumf %8, %9 : vector<98x256xf32>
    %11 = arith.truncf %10 : vector<98x256xf32> to vector<98x256xbf16>
    %c0_8 = arith.constant 0 : index
    %c0_9 = arith.constant 0 : index
    %12 = vector.load %arg6[%c0_8, %c0_9] : memref<98x256xbf16, #tpu.memory_space<vmem>>, vector<98x256xbf16>
    tpu.vector_store %arg6[%c0_8, %c0_9], %11 {strides = array<i32>} : memref<98x256xbf16, #tpu.memory_space<vmem>>, vector<98x256xbf16>,
    return
  }
  func.func @transform_0(%arg0: i32, %arg1: i32) -> (i32, i32) {
    %c0_i32 = arith.constant 0 : i32
    %c0_i32_0 = arith.constant 0 : i32
    return %arg0, %c0_i32 : i32, i32
  }
  func.func @transform_1(%arg0: i32, %arg1: i32) -> (i32, i32) {
    %c0_i32 = arith.constant 0 : i32
    %c0_i32_0 = arith.constant 0 : i32
    return %c0_i32, %arg1 : i32, i32
  }
  func.func @transform_2(%arg0: i32, %arg1: i32) -> (i32, i32) {
    %c0_i32 = arith.constant 0 : i32
    %c0_i32_0 = arith.constant 0 : i32
    return %c0_i32, %arg1 : i32, i32
  }
  func.func @transform_3(%arg0: i32, %arg1: i32) -> (i32, i32) {
    %c0_i32 = arith.constant 0 : i32
    %c0_i32_0 = arith.constant 0 : i32
    return %c0_i32, %arg1 : i32, i32
  }
  func.func @transform_4(%arg0: i32, %arg1: i32) -> (i32, i32) {
    %c0_i32 = arith.constant 0 : i32
    return %arg0, %arg1 : i32, i32
  }
}

module attributes {stable_mosaic.version = 11 : i64} {
  func.func @_matmul_scale_act_kernel(%arg0: i32, %arg1: i32, %arg2: memref<98x1024xbf16, #tpu.memory_space<vmem>>, %arg3: memref<1024x16xbf16, #tpu.memory_space<vmem>>, %arg4: memref<1x16xf32, #tpu.memory_space<vmem>>, %arg5: memref<1x16xf32, #tpu.memory_space<vmem>>, %arg6: memref<98x16xf32, #tpu.memory_space<vmem>>) attributes {dimension_semantics = [#tpu.dimension_semantics<parallel>, #tpu.dimension_semantics<parallel>], iteration_bounds = array<i64: 1, 1>, scalar_prefetch = 0 : i64, scratch_operands = 0 : i64, tpu.core_type = #tpu.core_type<tc>, window_params = [{transform_indices = @transform_0, window_bounds = array<i64: 98, 1024>}, {transform_indices = @transform_1, window_bounds = array<i64: 1024, 16>}, {transform_indices = @transform_2, window_bounds = array<i64: 1, 16>}, {transform_indices = @transform_3, window_bounds = array<i64: 1, 16>}, {transform_indices = @transform_4, window_bounds = array<i64: 98, 16>}]} {
    %c0 = arith.constant 0 : index
    %c0_0 = arith.constant 0 : index
    %0 = vector.load %arg2[%c0, %c0_0] : memref<98x1024xbf16, #tpu.memory_space<vmem>>, vector<98x1024xbf16>
    %c0_1 = arith.constant 0 : index
    %c0_2 = arith.constant 0 : index
    %1 = vector.load %arg3[%c0_1, %c0_2] : memref<1024x16xbf16, #tpu.memory_space<vmem>>, vector<1024x16xbf16>
    %cst = arith.constant dense<0.000000e+00> : vector<98x16xf32>
    %2 = tpu.matmul %0, %1, %cst {dimension_numbers = #tpu.dot_dimension_numbers<[1], [0], [0], [1], [0, 0, 1, 1], [], []>} : vector<98x1024xbf16>, vector<1024x16xbf16>, vector<98x16xf32> -> vector<98x16xf32>
    %c0_3 = arith.constant 0 : index
    %c0_4 = arith.constant 0 : index
    %3 = vector.load %arg4[%c0_3, %c0_4] : memref<1x16xf32, #tpu.memory_space<vmem>>, vector<1x16xf32>
    %4 = vector.broadcast %3 : vector<1x16xf32> to vector<98x16xf32>
    %5 = arith.mulf %2, %4 : vector<98x16xf32>
    %c0_5 = arith.constant 0 : index
    %c0_6 = arith.constant 0 : index
    %6 = vector.load %arg5[%c0_5, %c0_6] : memref<1x16xf32, #tpu.memory_space<vmem>>, vector<1x16xf32>
    %7 = vector.broadcast %6 : vector<1x16xf32> to vector<98x16xf32>
    %8 = arith.addf %5, %7 : vector<98x16xf32>
    %9 = math.tanh %8 : vector<98x16xf32>
    %c0_7 = arith.constant 0 : index
    %c0_8 = arith.constant 0 : index
    %10 = vector.load %arg6[%c0_7, %c0_8] : memref<98x16xf32, #tpu.memory_space<vmem>>, vector<98x16xf32>
    tpu.vector_store %arg6[%c0_7, %c0_8], %9 {strides = array<i32>} : memref<98x16xf32, #tpu.memory_space<vmem>>, vector<98x16xf32>,
    return
  }
  func.func @transform_0(%arg0: i32, %arg1: i32) -> (i32, i32) {
    %c0_i32 = arith.constant 0 : i32
    %c0_i32_0 = arith.constant 0 : i32
    return %arg0, %c0_i32 : i32, i32
  }
  func.func @transform_1(%arg0: i32, %arg1: i32) -> (i32, i32) {
    %c0_i32 = arith.constant 0 : i32
    %c0_i32_0 = arith.constant 0 : i32
    return %c0_i32, %arg1 : i32, i32
  }
  func.func @transform_2(%arg0: i32, %arg1: i32) -> (i32, i32) {
    %c0_i32 = arith.constant 0 : i32
    %c0_i32_0 = arith.constant 0 : i32
    return %c0_i32, %arg1 : i32, i32
  }
  func.func @transform_3(%arg0: i32, %arg1: i32) -> (i32, i32) {
    %c0_i32 = arith.constant 0 : i32
    %c0_i32_0 = arith.constant 0 : i32
    return %c0_i32, %arg1 : i32, i32
  }
  func.func @transform_4(%arg0: i32, %arg1: i32) -> (i32, i32) {
    %c0_i32 = arith.constant 0 : i32
    return %arg0, %arg1 : i32, i32
  }
}

</mosaic_0001>

<llo_original>
// kernel: generator_forward.3
$region0: #{generator_forward.3}
  #allocation0 [shape = 'u32[]', space=smem, size = 0x4, offset = 0x4, fixed_abs, tag = 'smem constant byte address 0x4 - core index']
  #allocation1 [shape = 'u32[72,128]{1,0:T(1,128)}', space=vmem, size = 0x9000, scoped, tag = 'internal scratch']
  %s0 = inlined_call_operand.vmem [shape: bf16[2,64], index: 0, kind: input, shape index: {}]
  %s1 = inlined_call_operand.vmem [shape: bf16[64,6272], index: 1, kind: input, shape index: {}]
  %s2 = inlined_call_operand.vmem [shape: f32[1,6272], index: 2, kind: input, shape index: {}]
  %s3 = inlined_call_operand.vmem [shape: f32[1,6272], index: 3, kind: input, shape index: {}]
  %s4 = inlined_call_operand.vmem [shape: bf16[2,6272], index: 4, kind: output, shape index: {}]
  %s5 = sld [smem:[#allocation0]]
  $region75: #{generator_forward.3} parent=0
    _
  %s7 = ssub.s32 1, %s5
  %s8 = scalar_select 0, %s7, %s5
  $region1: #{generator_forward.3} parent=0
    #allocation2 [shape = 'u8[229376]{0}', space=vmem, size = 0x38000, scoped, tag = 'input window, operand 1']
    loop: start=0, step=1, limit=9
    $region2: #{generator_forward.3} parent=1 // loop_pre_header
      _
    $region3: #{generator_forward.3} parent=1 // loop_header
      %s10 = sphi 0, %s14
      %p11 = scmp.ge.s32.totalorder %s10, 9
      %s17 = sphi 0, %s29
      %s18 = sphi 0, %s25
      %s19 = sphi 0, %s17
      %s20 = sphi 0, %s18
      %s21 = sphi 0, %s19
      %s22 = sphi 0, %s20
      %s32 = sphi 0, %s34
      %s35 = sphi 0, %s32
      %s36 = sphi 0, %s35
      %s52 = sphi 0, %s36
      %s58 = sphi 0, %s60
      %s61 = sphi 0, %s58
      %s62 = sphi 0, %s61
      %s78 = sphi 0, %s62
      %s84 = sphi 0, %s86
      %s87 = sphi 0, %s84
      %s88 = sphi 0, %s87
      %s104 = sphi 0, %s88
      %s110 = sphi 0, %s112
      %s113 = sphi 0, %s110
      %s114 = sphi 0, %s113
      %s130 = sphi 0, %s114
      %s138 = sphi 0, %s140
      %s141 = sphi 0, %s138
      %s142 = sphi 0, %s141
      %s158 = sphi 0, %s142
    $region4: #{generator_forward.3} parent=1 // loop_header_branch
      %13 = sbr.rel (%p11) target = $region8
    $region5: #{generator_forward.3} parent=1 // loop_body
      %s15 = ssub.s32 %s10, 1
      %s16 = ssub.s32 %s10, 2
      %s23 = sadd.s32 1, %s18
      %p24 = scmp.ge.s32.totalorder %s23, 7
      %s25 = scalar_select %p24, 0, %s23
      %s26 = sadd.s32 1, %s17
      %s27 = scalar_select %p24, %s26, %s17
      %p28 = scmp.ge.s32.totalorder %s27, 1
      %s29 = scalar_select %p28, 0, %s27
      %s30 = ssub.s32 %s17, %s29
      %p31 = scmp.eq.s32.totalorder %s30, 0
      %s33 = sadd.s32 %s32, 1
      %s34 = scalar_select %p31, %s32, %s33
      %p37 = pneg %p31
      %p38 = scmp.eq.s32.totalorder %s10, 6
      %p39 = por %p37, %p38
      %p40 = scmp.ne.s32.totalorder %s32, %s35
      %p41 = scmp.eq.s32.totalorder %s10, 0
      %p42 = por %p40, %p41
      %p43 = scmp.ne.s32.totalorder %s32, %s35
      %p44 = scmp.eq.s32.totalorder %s15, 6
      %p45 = por %p43, %p44
      %p46 = scmp.ne.s32.totalorder %s35, %s36
      %p47 = scmp.eq.s32.totalorder %s15, 0
      %p48 = por %p46, %p47
      %p49 = scmp.ne.s32.totalorder %s35, %s36
      %p50 = scmp.eq.s32.totalorder %s16, 6
      %p51 = por %p49, %p50
      %p53 = scmp.ne.s32.totalorder %s36, %s52
      %p54 = scmp.eq.s32.totalorder %s16, 0
      %p55 = por %p53, %p54
      %s56 = ssub.s32 %s18, %s25
      %p57 = scmp.eq.s32.totalorder %s56, 0
      %s59 = sadd.s32 %s58, 1
      %s60 = scalar_select %p57, %s58, %s59
      %p63 = pneg %p57
      %p64 = scmp.eq.s32.totalorder %s10, 6
      %p65 = por %p63, %p64
      %p66 = scmp.ne.s32.totalorder %s58, %s61
      %p67 = scmp.eq.s32.totalorder %s10, 0
      %p68 = por %p66, %p67
      %p69 = scmp.ne.s32.totalorder %s58, %s61
      %p70 = scmp.eq.s32.totalorder %s15, 6
      %p71 = por %p69, %p70
      %p72 = scmp.ne.s32.totalorder %s61, %s62
      %p73 = scmp.eq.s32.totalorder %s15, 0
      %p74 = por %p72, %p73
      %p75 = scmp.ne.s32.totalorder %s61, %s62
      %p76 = scmp.eq.s32.totalorder %s16, 6
      %p77 = por %p75, %p76
      %p79 = scmp.ne.s32.totalorder %s62, %s78
      %p80 = scmp.eq.s32.totalorder %s16, 0
      %p81 = por %p79, %p80
      %s82 = ssub.s32 %s18, %s25
      %p83 = scmp.eq.s32.totalorder %s82, 0
      %s85 = sadd.s32 %s84, 1
      %s86 = scalar_select %p83, %s84, %s85
      %p89 = pneg %p83
      %p90 = scmp.eq.s32.totalorder %s10, 6
      %p91 = por %p89, %p90
      %p92 = scmp.ne.s32.totalorder %s84, %s87
      %p93 = scmp.eq.s32.totalorder %s10, 0
      %p94 = por %p92, %p93
      %p95 = scmp.ne.s32.totalorder %s84, %s87
      %p96 = scmp.eq.s32.totalorder %s15, 6
      %p97 = por %p95, %p96
      %p98 = scmp.ne.s32.totalorder %s87, %s88
      %p99 = scmp.eq.s32.totalorder %s15, 0
      %p100 = por %p98, %p99
      %p101 = scmp.ne.s32.totalorder %s87, %s88
      %p102 = scmp.eq.s32.totalorder %s16, 6
      %p103 = por %p101, %p102
      %p105 = scmp.ne.s32.totalorder %s88, %s104
      %p106 = scmp.eq.s32.totalorder %s16, 0
      %p107 = por %p105, %p106
      %s108 = ssub.s32 %s18, %s25
      %p109 = scmp.eq.s32.totalorder %s108, 0
      %s111 = sadd.s32 %s110, 1
      %s112 = scalar_select %p109, %s110, %s111
      %p115 = pneg %p109
      %p116 = scmp.eq.s32.totalorder %s10, 6
      %p117 = por %p115, %p116
      %p118 = scmp.ne.s32.totalorder %s110, %s113
      %p119 = scmp.eq.s32.totalorder %s10, 0
      %p120 = por %p118, %p119
      %p121 = scmp.ne.s32.totalorder %s110, %s113
      %p122 = scmp.eq.s32.totalorder %s15, 6
      %p123 = por %p121, %p122
      %p124 = scmp.ne.s32.totalorder %s113, %s114
      %p125 = scmp.eq.s32.totalorder %s15, 0
      %p126 = por %p124, %p125
      %p127 = scmp.ne.s32.totalorder %s113, %s114
      %p128 = scmp.eq.s32.totalorder %s16, 6
      %p129 = por %p127, %p128
      %p131 = scmp.ne.s32.totalorder %s114, %s130
      %p132 = scmp.eq.s32.totalorder %s16, 0
      %p133 = por %p131, %p132
      %s134 = ssub.s32 %s17, %s29
      %s135 = ssub.s32 %s18, %s25
      %s136 = sor.u32 %s134, %s135
      %p137 = scmp.eq.s32.totalorder %s136, 0
      %s139 = sadd.s32 %s138, 1
      %s140 = scalar_select %p137, %s138, %s139
      %p143 = pneg %p137
      %p144 = scmp.eq.s32.totalorder %s10, 6
      %p145 = por %p143, %p144
      %p146 = scmp.ne.s32.totalorder %s138, %s141
      %p147 = scmp.eq.s32.totalorder %s10, 0
      %p148 = por %p146, %p147
      %p149 = scmp.ne.s32.totalorder %s138, %s141
      %p150 = scmp.eq.s32.totalorder %s15, 6
      %p151 = por %p149, %p150
      %p152 = scmp.ne.s32.totalorder %s141, %s142
      %p153 = scmp.eq.s32.totalorder %s15, 0
      %p154 = por %p152, %p153
      %p155 = scmp.ne.s32.totalorder %s141, %s142
      %p156 = scmp.eq.s32.totalorder %s16, 6
      %p157 = por %p155, %p156
      %p159 = scmp.ne.s32.totalorder %s142, %s158
      %p160 = scmp.eq.s32.totalorder %s16, 0
      %p161 = por %p159, %p160
      %p162 = scmp.le.s32.totalorder 1, %s10
      %p163 = scmp.lt.s32.totalorder %s10, 8
      %p164 = pnand %p162, %p163
      %p165 = pneg %p164
      // Predicated region
      $region9: #{generator_forward.3} parent=5 // pred_check
        _
      $region10: #{generator_forward.3} parent=5 // pred_check_branch
        %167 = sbr.rel (%p164) target = $region12
      $region11: #{generator_forward.3} parent=5 // pred_region
        %s168 = ssub.s32 %s10, 1
        // Predicated region
        $region13: #{generator_forward.3} parent=11 // pred_check
          %p169 = pneg %p48
        $region14: #{generator_forward.3} parent=11 // pred_check_branch
          %171 = sbr.rel (%p169) target = $region16
        $region15: #{generator_forward.3} parent=11 // pred_region
          %p172 = scmp.lt.s32.totalorder %s19, 0
          %s173 = scalar_select %p172, %s19, 0
          %s174 = scalar_lea.vmem %s0, %s173
        $region16: #{generator_forward.3} parent=11 // pred_fallthru
          _
      $region12: #{generator_forward.3} parent=5 // pred_fallthru
        _
      %p175 = scmp.lt.s32.totalorder %s10, 7
      // Predicated region
      $region17: #{generator_forward.3} parent=5 // pred_check
        %p176 = pneg %p175
      $region18: #{generator_forward.3} parent=5 // pred_check_branch
        %178 = sbr.rel (%p176) target = $region20
      $region19: #{generator_forward.3} parent=5 // pred_region
        // Predicated region
        $region21: #{generator_forward.3} parent=19 // pred_check
          %p179 = pneg %p68
        $region22: #{generator_forward.3} parent=19 // pred_check_branch
          %181 = sbr.rel (%p179) target = $region24
        $region23: #{generator_forward.3} parent=19 // pred_region
          %s182 = sand.u32 %s58, 1
          %s183 = sand.u32 %s58, 1
          %s184 = smul.addr %s183, 224
          %s185 = scalar_lea.vmem [#allocation2], %s184
          %s186 = smul.u32 7, %s18
          %s187 = smul.addr %s186, 4
          %s188 = scalar_lea.vmem %s1, %s187
          // Predicated region
          $region25: #{generator_forward.3} parent=23 // pred_check
            _
          $region26: #{generator_forward.3} parent=23 // pred_check_branch
            %190 = sbr.rel (0) target = $region28
          $region27: #{generator_forward.3} parent=23 // pred_region
            // Predicated region
            $region29: #{generator_forward.3} parent=27 // pred_check
              _
            $region30: #{generator_forward.3} parent=27 // pred_check_branch
              %192 = sbr.rel (0) target = $region32
            $region31: #{generator_forward.3} parent=27 // pred_region
              %s193 = scalar_lea.vmem %s188, 24
              %s194 = scalar_lea.vmem %s185, 24 [#allocation2]
              loop: start=0, step=1, limit=1
              $region33: #{generator_forward.3} parent=31 // loop_pre_header
                _
              $region34: #{generator_forward.3} parent=31 // loop_header
                %s196 = sphi 0, %s200
                %p197 = scmp.ge.s32.totalorder %s196, 1
                %s201 = sphi %s188, %s188
                %s202 = sphi %s185, %s185
              $region35: #{generator_forward.3} parent=31 // loop_header_branch
                %199 = sbr.rel (%p197) target = $region39
              $region36: #{generator_forward.3} parent=31 // loop_body
                %v203 = vld [vmem:[%s201] sm:$0xff]
                %204 = vst [vmem:[%s202] sm:$0xff] %v203
                %v205 = vld [vmem:[%s201 + $0x8] sm:$0xff]
                %206 = vst [vmem:[%s202 + $0x8] sm:$0xff] %v205
                %v207 = vld [vmem:[%s201 + $0x10] sm:$0xff]
                %208 = vst [vmem:[%s202 + $0x10] sm:$0xff] %v207
                %v209 = vld [vmem:[%s201 + $0xc4] sm:$0xff]
                %210 = vst [vmem:[%s202 + $0x1c] sm:$0xff] %v209
                %v211 = vld [vmem:[%s201 + $0xcc] sm:$0xff]
                %212 = vst [vmem:[%s202 + $0x24] sm:$0xff] %v211
                %v213 = vld [vmem:[%s201 + $0xd4] sm:$0xff]
                %214 = vst [vmem:[%s202 + $0x2c] sm:$0xff] %v213
                %v215 = vld [vmem:[%s201 + $0x188] sm:$0xff]
                %216 = vst [vmem:[%s202 + $0x38] sm:$0xff] %v215
                %v217 = vld [vmem:[%s201 + $0x190] sm:$0xff]
                %218 = vst [vmem:[%s202 + $0x40] sm:$0xff] %v217
                %v219 = vld [vmem:[%s201 + $0x198] sm:$0xff]
                %220 = vst [vmem:[%s202 + $0x48] sm:$0xff] %v219
                %v221 = vld [vmem:[%s201 + $0x24c] sm:$0xff]
                %222 = vst [vmem:[%s202 + $0x54] sm:$0xff] %v221
                %v223 = vld [vmem:[%s201 + $0x254] sm:$0xff]
                %224 = vst [vmem:[%s202 + $0x5c] sm:$0xff] %v223
                %v225 = vld [vmem:[%s201 + $0x25c] sm:$0xff]
                %226 = vst [vmem:[%s202 + $0x64] sm:$0xff] %v225
                %v227 = vld [vmem:[%s201 + $0x310] sm:$0xff]
                %228 = vst [vmem:[%s202 + $0x70] sm:$0xff] %v227
                %v229 = vld [vmem:[%s201 + $0x318] sm:$0xff]
                %230 = vst [vmem:[%s202 + $0x78] sm:$0xff] %v229
                %v231 = vld [vmem:[%s201 + $0x320] sm:$0xff]
                %232 = vst [vmem:[%s202 + $0x80] sm:$0xff] %v231
                %v233 = vld [vmem:[%s201 + $0x3d4] sm:$0xff]
                %234 = vst [vmem:[%s202 + $0x8c] sm:$0xff] %v233
                %v235 = vld [vmem:[%s201 + $0x3dc] sm:$0xff]
                %236 = vst [vmem:[%s202 + $0x94] sm:$0xff] %v235
                %v237 = vld [vmem:[%s201 + $0x3e4] sm:$0xff]
                %238 = vst [vmem:[%s202 + $0x9c] sm:$0xff] %v237
                %v239 = vld [vmem:[%s201 + $0x498] sm:$0xff]
                %240 = vst [vmem:[%s202 + $0xa8] sm:$0xff] %v239
                %v241 = vld [vmem:[%s201 + $0x4a0] sm:$0xff]
                %242 = vst [vmem:[%s202 + $0xb0] sm:$0xff] %v241
                %v243 = vld [vmem:[%s201 + $0x4a8] sm:$0xff]
                %244 = vst [vmem:[%s202 + $0xb8] sm:$0xff] %v243
                %v245 = vld [vmem:[%s201 + $0x55c] sm:$0xff]
                %246 = vst [vmem:[%s202 + $0xc4] sm:$0xff] %v245
                %v247 = vld [vmem:[%s201 + $0x564] sm:$0xff]
                %248 = vst [vmem:[%s202 + $0xcc] sm:$0xff] %v247
                %v249 = vld [vmem:[%s201 + $0x56c] sm:$0xff]
                %250 = vst [vmem:[%s202 + $0xd4] sm:$0xff] %v249
              $region37: #{generator_forward.3} parent=31 // loop_footer
                %s200 = sadd.s32 1, %s196
              $region38: #{generator_forward.3} parent=31 // loop_footer_branch
                %195 = sbr.rel target = $region34
              $region39: #{generator_forward.3} parent=31 // loop_exit
                _
              %s252 = ssub.s32 16, 1
              loop: start=0, step=1, limit=1
              $region40: #{generator_forward.3} parent=31 // loop_pre_header
                _
              $region41: #{generator_forward.3} parent=31 // loop_header
                %s254 = sphi 0, %s258
                %p255 = scmp.ge.s32.totalorder %s254, 1
                %s259 = sphi %s193, %s193
                %s260 = sphi %s194, %s194
              $region42: #{generator_forward.3} parent=31 // loop_header_branch
                %257 = sbr.rel (%p255) target = $region46
              $region43: #{generator_forward.3} parent=31 // loop_body
                %v261 = vld [vmem:[%s259] sm:%s252]
                %262 = vst [vmem:[%s260] sm:%s252] %v261
                %v263 = vld [vmem:[%s259 + $0xc4] sm:%s252]
                %264 = vst [vmem:[%s260 + $0x1c] sm:%s252] %v263
                %v265 = vld [vmem:[%s259 + $0x188] sm:%s252]
                %266 = vst [vmem:[%s260 + $0x38] sm:%s252] %v265
                %v267 = vld [vmem:[%s259 + $0x24c] sm:%s252]
                %268 = vst [vmem:[%s260 + $0x54] sm:%s252] %v267
                %v269 = vld [vmem:[%s259 + $0x310] sm:%s252]
                %270 = vst [vmem:[%s260 + $0x70] sm:%s252] %v269
                %v271 = vld [vmem:[%s259 + $0x3d4] sm:%s252]
                %272 = vst [vmem:[%s260 + $0x8c] sm:%s252] %v271
                %v273 = vld [vmem:[%s259 + $0x498] sm:%s252]
                %274 = vst [vmem:[%s260 + $0xa8] sm:%s252] %v273
                %v275 = vld [vmem:[%s259 + $0x55c] sm:%s252]
                %276 = vst [vmem:[%s260 + $0xc4] sm:%s252] %v275
              $region44: #{generator_forward.3} parent=31 // loop_footer
                %s258 = sadd.s32 1, %s254
              $region45: #{generator_forward.3} parent=31 // loop_footer_branch
                %253 = sbr.rel target = $region41
              $region46: #{generator_forward.3} parent=31 // loop_exit
                _
            $region32: #{generator_forward.3} parent=27 // pred_fallthru
              _
          $region28: #{generator_forward.3} parent=23 // pred_fallthru
            _
          %277 = vnop
        $region24: #{generator_forward.3} parent=19 // pred_fallthru
          _
        // Predicated region
        $region47: #{generator_forward.3} parent=19 // pred_check
          %p278 = pneg %p94
        $region48: #{generator_forward.3} parent=19 // pred_check_branch
          %280 = sbr.rel (%p278) target = $region50
        $region49: #{generator_forward.3} parent=19 // pred_region
          %s281 = smul.u32 7, %s18
          %p282 = scmp.lt.s32.totalorder %s281, 48
          %s283 = scalar_select %p282, %s281, 48
          %s284 = scalar_lea.vmem %s2, %s283
          %s285 = smul.u32 7, %s18
        $region50: #{generator_forward.3} parent=19 // pred_fallthru
          _
        // Predicated region
        $region51: #{generator_forward.3} parent=19 // pred_check
          %p286 = pneg %p120
        $region52: #{generator_forward.3} parent=19 // pred_check_branch
          %288 = sbr.rel (%p286) target = $region54
        $region53: #{generator_forward.3} parent=19 // pred_region
          %s289 = smul.u32 7, %s18
          %p290 = scmp.lt.s32.totalorder %s289, 48
          %s291 = scalar_select %p290, %s289, 48
          %s292 = scalar_lea.vmem %s3, %s291
          %s293 = smul.u32 7, %s18
        $region54: #{generator_forward.3} parent=19 // pred_fallthru
          _
      $region20: #{generator_forward.3} parent=5 // pred_fallthru
        _
      %p294 = scmp.le.s32.totalorder 1, %s10
      %p295 = scmp.lt.s32.totalorder %s10, 8
      %p296 = pnand %p294, %p295
      %p297 = pneg %p296
      // Predicated region
      $region55: #{generator_forward.3} parent=5 // pred_check
        _
      $region56: #{generator_forward.3} parent=5 // pred_check_branch
        %299 = sbr.rel (%p296) target = $region58
      $region57: #{generator_forward.3} parent=5 // pred_region
        %s300 = ssub.s32 %s10, 1
        %s301 = sand.u32 %s61, 1
        %s302 = sand.u32 %s61, 1
        %s303 = smul.addr %s302, 224
        %s304 = scalar_lea.vmem [#allocation2], %s303
        // Predicated region
        $region59: #{generator_forward.3} parent=57 // pred_check
          %p305 = pneg %p74
        $region60: #{generator_forward.3} parent=57 // pred_check_branch
          %307 = sbr.rel (%p305) target = $region62
        $region61: #{generator_forward.3} parent=57 // pred_region
          _
        $region62: #{generator_forward.3} parent=57 // pred_fallthru
          _
        %p308 = scmp.lt.s32.totalorder %s19, 0
        %s309 = scalar_select %p308, %s19, 0
        %s310 = scalar_lea.vmem %s0, %s309
        %p311 = pneg %p48
        %p312 = pneg %p45
        %s313 = sand.u32 %s61, 1
        %s314 = sand.u32 %s61, 1
        %s315 = smul.addr %s314, 224
        %s316 = scalar_lea.vmem [#allocation2], %s315
        %p317 = pneg %p74
        %p318 = pneg %p71
        %s319 = smul.u32 7, %s20
        %p320 = scmp.lt.s32.totalorder %s319, 48
        %s321 = scalar_select %p320, %s319, 48
        %s322 = scalar_lea.vmem %s2, %s321
        %p323 = pneg %p100
        %p324 = pneg %p97
        %s325 = smul.u32 7, %s20
        %p326 = scmp.lt.s32.totalorder %s325, 48
        %s327 = scalar_select %p326, %s325, 48
        %s328 = scalar_lea.vmem %s3, %s327
        %p329 = pneg %p126
        %p330 = pneg %p123
        %p331 = pneg %p154
        %p332 = pneg %p151
        %s333 = smul.u32 7, %s20
        %p334 = scmp.lt.s32.totalorder %s19, 0
        %s335 = scalar_select %p334, %s19, 0
        %p336 = scmp.lt.s32.totalorder %s333, 48
        %s337 = scalar_select %p336, %s333, 48
        %s338 = smul.addr %s335, 49
        %s339 = sadd.s32 %s337, %s338
        %s340 = scalar_lea.vmem %s4, %s339
        %p341 = scmp.lt.s32.totalorder %s19, 0
        %s342 = scalar_select %p341, %s19, 0
        %s343 = scalar_lea.vmem %s0, %s342
        %s344 = smul.u32 7, %s20
        %s345 = smul.u32 7, %s20
        %p346 = scmp.lt.s32.totalorder %s345, 48
        %s347 = scalar_select %p346, %s345, 48
        %s348 = scalar_lea.vmem %s2, %s347
        %s349 = smul.u32 7, %s20
        %s350 = smul.u32 7, %s20
        %p351 = scmp.lt.s32.totalorder %s350, 48
        %s352 = scalar_select %p351, %s350, 48
        %s353 = scalar_lea.vmem %s3, %s352
        %s354 = smul.u32 7, %s20
        %s355 = smul.u32 7, %s20
        %p356 = scmp.lt.s32.totalorder %s19, 0
        %s357 = scalar_select %p356, %s19, 0
        %p358 = scmp.lt.s32.totalorder %s355, 48
        %s359 = scalar_select %p358, %s355, 48
        %s360 = smul.addr %s357, 49
        %s361 = sadd.s32 %s359, %s360
        %s362 = scalar_lea.vmem %s4, %s361
        %s363 = smul.u32 7, %s20
        %v365 = vld [vmem:[%s343] sm:$0x1]
        %v366 = vld [vmem:[%s304] sm:$0xff]
        %v367 = vld [vmem:[%s304 + $0x8] sm:$0xff]
        %v368 = vld [vmem:[%s304 + $0x10] sm:$0xff]
        %v369 = vld [vmem:[%s304 + $0x18] sm:$0xf]
        %v370 = vld [vmem:[%s304 + $0x1c] sm:$0xff]
        %v371 = vld [vmem:[%s304 + $0x24] sm:$0xff]
        %v372 = vld [vmem:[%s304 + $0x2c] sm:$0xff]
        %v373 = vld [vmem:[%s304 + $0x34] sm:$0xf]
        %v374 = vld [vmem:[%s304 + $0x38] sm:$0xff]
        %v375 = vld [vmem:[%s304 + $0x40] sm:$0xff]
        %v376 = vld [vmem:[%s304 + $0x48] sm:$0xff]
        %v377 = vld [vmem:[%s304 + $0x50] sm:$0xf]
        %v378 = vld [vmem:[%s304 + $0x54] sm:$0xff]
        %v379 = vld [vmem:[%s304 + $0x5c] sm:$0xff]
        %v380 = vld [vmem:[%s304 + $0x64] sm:$0xff]
        %v381 = vld [vmem:[%s304 + $0x6c] sm:$0xf]
        %v382 = vld [vmem:[%s304 + $0x70] sm:$0xff]
        %v383 = vld [vmem:[%s304 + $0x78] sm:$0xff]
        %v384 = vld [vmem:[%s304 + $0x80] sm:$0xff]
        %v385 = vld [vmem:[%s304 + $0x88] sm:$0xf]
        %v386 = vld [vmem:[%s304 + $0x8c] sm:$0xff]
        %v387 = vld [vmem:[%s304 + $0x94] sm:$0xff]
        %v388 = vld [vmem:[%s304 + $0x9c] sm:$0xff]
        %v389 = vld [vmem:[%s304 + $0xa4] sm:$0xf]
        %v390 = vld [vmem:[%s304 + $0xa8] sm:$0xff]
        %v391 = vld [vmem:[%s304 + $0xb0] sm:$0xff]
        %v392 = vld [vmem:[%s304 + $0xb8] sm:$0xff]
        %v393 = vld [vmem:[%s304 + $0xc0] sm:$0xf]
        %v394 = vld [vmem:[%s304 + $0xc4] sm:$0xff]
        %v395 = vld [vmem:[%s304 + $0xcc] sm:$0xff]
        %v396 = vld [vmem:[%s304 + $0xd4] sm:$0xff]
        %v397 = vld [vmem:[%s304 + $0xdc] sm:$0xf]
        %v430 = vunpack.c.l.b16 %v366
        %v431 = vunpack.c.h.b16 %v366
        %v432 = vunpack.c.l.b16 %v367
        %v433 = vunpack.c.h.b16 %v367
        %v434 = vunpack.c.l.b16 %v368
        %v435 = vunpack.c.h.b16 %v368
        %v436 = vunpack.c.l.b16 %v369
        %v437 = vunpack.c.l.b16 %v370
        %v438 = vunpack.c.h.b16 %v370
        %v439 = vunpack.c.l.b16 %v371
        %v440 = vunpack.c.h.b16 %v371
        %v441 = vunpack.c.l.b16 %v372
        %v442 = vunpack.c.h.b16 %v372
        %v443 = vunpack.c.l.b16 %v373
        %v444 = vunpack.c.l.b16 %v374
        %v445 = vunpack.c.h.b16 %v374
        %v446 = vunpack.c.l.b16 %v375
        %v447 = vunpack.c.h.b16 %v375
        %v448 = vunpack.c.l.b16 %v376
        %v449 = vunpack.c.h.b16 %v376
        %v450 = vunpack.c.l.b16 %v377
        %v451 = vunpack.c.l.b16 %v378
        %v452 = vunpack.c.h.b16 %v378
        %v453 = vunpack.c.l.b16 %v379
        %v454 = vunpack.c.h.b16 %v379
        %v455 = vunpack.c.l.b16 %v380
        %v456 = vunpack.c.h.b16 %v380
        %v457 = vunpack.c.l.b16 %v381
        %v458 = vunpack.c.l.b16 %v382
        %v459 = vunpack.c.h.b16 %v382
        %v460 = vunpack.c.l.b16 %v383
        %v461 = vunpack.c.h.b16 %v383
        %v462 = vunpack.c.l.b16 %v384
        %v463 = vunpack.c.h.b16 %v384
        %v464 = vunpack.c.l.b16 %v385
        %v465 = vunpack.c.l.b16 %v386
        %v466 = vunpack.c.h.b16 %v386
        %v467 = vunpack.c.l.b16 %v387
        %v468 = vunpack.c.h.b16 %v387
        %v469 = vunpack.c.l.b16 %v388
        %v470 = vunpack.c.h.b16 %v388
        %v471 = vunpack.c.l.b16 %v389
        %v472 = vunpack.c.l.b16 %v390
        %v473 = vunpack.c.h.b16 %v390
        %v474 = vunpack.c.l.b16 %v391
        %v475 = vunpack.c.h.b16 %v391
        %v476 = vunpack.c.l.b16 %v392
        %v477 = vunpack.c.h.b16 %v392
        %v478 = vunpack.c.l.b16 %v393
        %v479 = vunpack.c.l.b16 %v394
        %v480 = vunpack.c.h.b16 %v394
        %v481 = vunpack.c.l.b16 %v395
        %v482 = vunpack.c.h.b16 %v395
        %v483 = vunpack.c.l.b16 %v396
        %v484 = vunpack.c.h.b16 %v396
        %v485 = vunpack.c.l.b16 %v397
        %v486 = vpack.c.b16 %v437, %v430
        %v487 = vpack.c.b16 %v438, %v431
        %v488 = vpack.c.b16 %v439, %v432
        %v489 = vpack.c.b16 %v440, %v433
        %v490 = vpack.c.b16 %v441, %v434
        %v491 = vpack.c.b16 %v442, %v435
        %v492 = vpack.c.b16 %v443, %v436
        %v493 = vpack.c.b16 %v451, %v444
        %v494 = vpack.c.b16 %v452, %v445
        %v495 = vpack.c.b16 %v453, %v446
        %v496 = vpack.c.b16 %v454, %v447
        %v497 = vpack.c.b16 %v455, %v448
        %v498 = vpack.c.b16 %v456, %v449
        %v499 = vpack.c.b16 %v457, %v450
        %v500 = vpack.c.b16 %v465, %v458
        %v501 = vpack.c.b16 %v466, %v459
        %v502 = vpack.c.b16 %v467, %v460
        %v503 = vpack.c.b16 %v468, %v461
        %v504 = vpack.c.b16 %v469, %v462
        %v505 = vpack.c.b16 %v470, %v463
        %v506 = vpack.c.b16 %v471, %v464
        %v507 = vpack.c.b16 %v479, %v472
        %v508 = vpack.c.b16 %v480, %v473
        %v509 = vpack.c.b16 %v481, %v474
        %v510 = vpack.c.b16 %v482, %v475
        %v511 = vpack.c.b16 %v483, %v476
        %v512 = vpack.c.b16 %v484, %v477
        %v513 = vpack.c.b16 %v485, %v478
        %vm542 = vcmask 523264
        %v544 = vsel %vm542, %v365, 0
        %546 = vmatpush.bf16.msra.mxu0 0
        %547 = vmatpush.bf16.msra.mxu0 0
        %548 = vmatpush.bf16.msra.mxu0 0
        %549 = vmatpush.bf16.msra.mxu0 0
        %550 = vmatpush.bf16.msra.mxu0 %v507
        %551 = vmatpush.bf16.msra.mxu0 %v500
        %552 = vmatpush.bf16.msra.mxu0 %v493
        %553 = vmatpush.bf16.msra.mxu0 %v486
        %554 = vmatmul.bf16.gmra.mxu0 %v544
        %v555 = vpop.f32.mrf.mxu0
        %v556 = vadd.f32 0.0, %v555
        %v557 = vpop.f32.mrf.mxu0
        %558 = vdwg.mxu0
        %559 = vmatpush.bf16.msra.mxu0 0
        %560 = vmatpush.bf16.msra.mxu0 0
        %561 = vmatpush.bf16.msra.mxu0 0
        %562 = vmatpush.bf16.msra.mxu0 0
        %563 = vmatpush.bf16.msra.mxu0 %v508
        %564 = vmatpush.bf16.msra.mxu0 %v501
        %565 = vmatpush.bf16.msra.mxu0 %v494
        %566 = vmatpush.bf16.msra.mxu0 %v487
        %567 = vmatmul.bf16.gmra.mxu0 %v544
        %v568 = vpop.f32.mrf.mxu0
        %v569 = vadd.f32 0.0, %v568
        %v570 = vpop.f32.mrf.mxu0
        %571 = vdwg.mxu0
        %572 = vmatpush.bf16.msra.mxu0 0
        %573 = vmatpush.bf16.msra.mxu0 0
        %574 = vmatpush.bf16.msra.mxu0 0
        %575 = vmatpush.bf16.msra.mxu0 0
        %576 = vmatpush.bf16.msra.mxu0 %v509
        %577 = vmatpush.bf16.msra.mxu0 %v502
        %578 = vmatpush.bf16.msra.mxu0 %v495
        %579 = vmatpush.bf16.msra.mxu0 %v488
        %580 = vmatmul.bf16.gmra.mxu0 %v544
        %v581 = vpop.f32.mrf.mxu0
        %v582 = vadd.f32 0.0, %v581
        %v583 = vpop.f32.mrf.mxu0
        %584 = vdwg.mxu0
        %585 = vmatpush.bf16.msra.mxu0 0
        %586 = vmatpush.bf16.msra.mxu0 0
        %587 = vmatpush.bf16.msra.mxu0 0
        %588 = vmatpush.bf16.msra.mxu0 0
        %589 = vmatpush.bf16.msra.mxu0 %v510
        %590 = vmatpush.bf16.msra.mxu0 %v503
        %591 = vmatpush.bf16.msra.mxu0 %v496
        %592 = vmatpush.bf16.msra.mxu0 %v489
        %593 = vmatmul.bf16.gmra.mxu0 %v544
        %v594 = vpop.f32.mrf.mxu0
        %v595 = vadd.f32 0.0, %v594
        %v596 = vpop.f32.mrf.mxu0
        %597 = vdwg.mxu0
        %598 = vmatpush.bf16.msra.mxu0 0
        %599 = vmatpush.bf16.msra.mxu0 0
        %600 = vmatpush.bf16.msra.mxu0 0
        %601 = vmatpush.bf16.msra.mxu0 0
        %602 = vmatpush.bf16.msra.mxu0 %v511
        %603 = vmatpush.bf16.msra.mxu0 %v504
        %604 = vmatpush.bf16.msra.mxu0 %v497
        %605 = vmatpush.bf16.msra.mxu0 %v490
        %606 = vmatmul.bf16.gmra.mxu0 %v544
        %v607 = vpop.f32.mrf.mxu0
        %v608 = vadd.f32 0.0, %v607
        %v609 = vpop.f32.mrf.mxu0
        %610 = vdwg.mxu0
        %611 = vmatpush.bf16.msra.mxu0 0
        %612 = vmatpush.bf16.msra.mxu0 0
        %613 = vmatpush.bf16.msra.mxu0 0
        %614 = vmatpush.bf16.msra.mxu0 0
        %615 = vmatpush.bf16.msra.mxu0 %v512
        %616 = vmatpush.bf16.msra.mxu0 %v505
        %617 = vmatpush.bf16.msra.mxu0 %v498
        %618 = vmatpush.bf16.msra.mxu0 %v491
        %619 = vmatmul.bf16.gmra.mxu0 %v544
        %v620 = vpop.f32.mrf.mxu0
        %v621 = vadd.f32 0.0, %v620
        %v622 = vpop.f32.mrf.mxu0
        %623 = vdwg.mxu0
        %624 = vmatpush.bf16.msra.mxu0 0
        %625 = vmatpush.bf16.msra.mxu0 0
        %626 = vmatpush.bf16.msra.mxu0 0
        %627 = vmatpush.bf16.msra.mxu0 0
        %628 = vmatpush.bf16.msra.mxu0 %v513
        %629 = vmatpush.bf16.msra.mxu0 %v506
        %630 = vmatpush.bf16.msra.mxu0 %v499
        %631 = vmatpush.bf16.msra.mxu0 %v492
        %632 = vmatmul.bf16.gmra.mxu0 %v544
        %v633 = vpop.f32.mrf.mxu0
        %v634 = vadd.f32 0.0, %v633
        %v635 = vpop.f32.mrf.mxu0
        %636 = vdwg.mxu0
        %v637 = vld [vmem:[%s348] sm:$0xff]
        %v639 = vperm.slane %v637, 0
        %v640 = vperm.slane %v637, 1
        %v641 = vperm.slane %v637, 2
        %v642 = vperm.slane %v637, 3
        %v643 = vperm.slane %v637, 4
        %v644 = vperm.slane %v637, 5
        %v645 = vperm.slane %v637, 6
        %v653 = vmul.f32 %v556, %v639
        %v654 = vmul.f32 %v569, %v640
        %v655 = vmul.f32 %v582, %v641
        %v656 = vmul.f32 %v595, %v642
        %v657 = vmul.f32 %v608, %v643
        %v658 = vmul.f32 %v621, %v644
        %v659 = vmul.f32 %v634, %v645
        %v660 = vld [vmem:[%s353] sm:$0xff]
        %v662 = vperm.slane %v660, 0
        %v663 = vperm.slane %v660, 1
        %v664 = vperm.slane %v660, 2
        %v665 = vperm.slane %v660, 3
        %v666 = vperm.slane %v660, 4
        %v667 = vperm.slane %v660, 5
        %v668 = vperm.slane %v660, 6
        %v676 = vadd.f32 %v653, %v662
        %v677 = vadd.f32 %v654, %v663
        %v678 = vadd.f32 %v655, %v664
        %v679 = vadd.f32 %v656, %v665
        %v680 = vadd.f32 %v657, %v666
        %v681 = vadd.f32 %v658, %v667
        %v682 = vadd.f32 %v659, %v668
        %v683 = vmax.f32 %v676, 0.0
        %v684 = vmax.f32 %v677, 0.0
        %v685 = vmax.f32 %v678, 0.0
        %v686 = vmax.f32 %v679, 0.0
        %v687 = vmax.f32 %v680, 0.0
        %v688 = vmax.f32 %v681, 0.0
        %v689 = vmax.f32 %v682, 0.0
        %v690 = vpack.c.bf16 %v684, %v683
        %v691 = vpack.c.bf16 %v686, %v685
        %v692 = vpack.c.bf16 %v688, %v687
        %v693 = vpack.c.bf16 %v689, %v689
        %v698 = vrot.slane %v690, 3
        %v699 = vrot.slane %v691, 6
        %v700 = vrot.slane %v691, 1
        %v701 = vrot.slane %v692, 4
        %v702 = vrot.slane %v692, 7
        %v703 = vrot.slane %v693, 2
        %v704 = vrot.slane %v693, 5
        %vm705 = vcmask 1040384
        %v708 = vsel %vm705, %v690, %v698
        %vm709 = vcmask 1042434
        %v712 = vsel %vm709, %v699, %v700
        %vm713 = vcmask 1041408
        %v714 = vsel %vm713, %v708, %v712
        %vm715 = vcmask 1044484
        %v718 = vsel %vm715, %v701, %v702
        %vm719 = vcmask 1046534
        %v722 = vsel %vm719, %v703, %v704
        %vm723 = vcmask 1045508
        %v724 = vsel %vm723, %v718, %v722
        %vm725 = vcmask 1043456
        %v726 = vsel %vm725, %v714, %v724
        %728 = vst [vmem:[%s362] sm:$0x7f] %v726
        %s729 = smul.u32 7, %s20
        %p730 = scmp.lt.s32.totalorder %s19, 0
        %s731 = scalar_select %p730, %s19, 0
        %p732 = scmp.lt.s32.totalorder %s729, 48
        %s733 = scalar_select %p732, %s729, 48
        %s734 = smul.addr %s731, 49
        %s735 = sadd.s32 %s733, %s734
        %s736 = scalar_lea.vmem %s4, %s735
        // Predicated region
        $region63: #{generator_forward.3} parent=57 // pred_check
          %p737 = pneg %p151
        $region64: #{generator_forward.3} parent=57 // pred_check_branch
          %739 = sbr.rel (%p737) target = $region66
        $region65: #{generator_forward.3} parent=57 // pred_region
          %s740 = smul.u32 7, %s20
        $region66: #{generator_forward.3} parent=57 // pred_fallthru
          _
      $region58: #{generator_forward.3} parent=5 // pred_fallthru
        _
      %p741 = scmp.le.s32.totalorder 2, %s10
      // Predicated region
      $region67: #{generator_forward.3} parent=5 // pred_check
        %p742 = pneg %p741
      $region68: #{generator_forward.3} parent=5 // pred_check_branch
        %744 = sbr.rel (%p742) target = $region70
      $region69: #{generator_forward.3} parent=5 // pred_region
        %s745 = ssub.s32 %s10, 2
        // Predicated region
        $region71: #{generator_forward.3} parent=69 // pred_check
          %p746 = pneg %p157
        $region72: #{generator_forward.3} parent=69 // pred_check_branch
          %748 = sbr.rel (%p746) target = $region74
        $region73: #{generator_forward.3} parent=69 // pred_region
          %s749 = smul.u32 7, %s22
          %p750 = scmp.lt.s32.totalorder %s21, 0
          %s751 = scalar_select %p750, %s21, 0
          %p752 = scmp.lt.s32.totalorder %s749, 48
          %s753 = scalar_select %p752, %s749, 48
          %s754 = smul.addr %s751, 49
          %s755 = sadd.s32 %s753, %s754
          %s756 = scalar_lea.vmem %s4, %s755
        $region74: #{generator_forward.3} parent=69 // pred_fallthru
          _
      $region70: #{generator_forward.3} parent=5 // pred_fallthru
        _
    $region6: #{generator_forward.3} parent=1 // loop_footer
      %s14 = sadd.s32 1, %s10
    $region7: #{generator_forward.3} parent=1 // loop_footer_branch
      %9 = sbr.rel target = $region3
    $region8: #{generator_forward.3} parent=1 // loop_exit
      _

// kernel: generator_forward.4
$region0: #{generator_forward.4}
  #allocation0 [shape = 'u32[]', space=smem, size = 0x4, offset = 0x4, fixed_abs, tag = 'smem constant byte address 0x4 - core index']
  #allocation1 [shape = 'u32[72,128]{1,0:T(1,128)}', space=vmem, size = 0x9000, scoped, tag = 'internal scratch']
  %s0 = inlined_call_operand.vmem [shape: bf16[98,1152], index: 0, kind: input, shape index: {}]
  %s1 = inlined_call_operand.vmem [shape: bf16[1152,256], index: 1, kind: input, shape index: {}]
  %s2 = inlined_call_operand.vmem [shape: f32[1,256], index: 2, kind: input, shape index: {}]
  %s3 = inlined_call_operand.vmem [shape: f32[1,256], index: 3, kind: input, shape index: {}]
  %s4 = inlined_call_operand.vmem [shape: bf16[98,256], index: 4, kind: output, shape index: {}]
  %s5 = sld [smem:[#allocation0]]
  $region26: #{generator_forward.4} parent=0
    _
  %s7 = ssub.s32 1, %s5
  %s8 = scalar_select 0, %s7, %s5
  // Predicated region
  $region2: #{generator_forward.4} parent=0 // pred_check
    _
  $region3: #{generator_forward.4} parent=0 // pred_check_branch
    %10 = sbr.rel (0) target = $region5
  $region4: #{generator_forward.4} parent=0 // pred_region
    _
  $region5: #{generator_forward.4} parent=0 // pred_fallthru
    _
  // Predicated region
  $region6: #{generator_forward.4} parent=0 // pred_check
    _
  $region7: #{generator_forward.4} parent=0 // pred_check_branch
    %12 = sbr.rel (0) target = $region9
  $region8: #{generator_forward.4} parent=0 // pred_region
    _
  $region9: #{generator_forward.4} parent=0 // pred_fallthru
    _
  // Predicated region
  $region10: #{generator_forward.4} parent=0 // pred_check
    _
  $region11: #{generator_forward.4} parent=0 // pred_check_branch
    %14 = sbr.rel (0) target = $region13
  $region12: #{generator_forward.4} parent=0 // pred_region
    _
  $region13: #{generator_forward.4} parent=0 // pred_fallthru
    _
  // Predicated region
  $region14: #{generator_forward.4} parent=0 // pred_check
    _
  $region15: #{generator_forward.4} parent=0 // pred_check_branch
    %16 = sbr.rel (0) target = $region17
  $region16: #{generator_forward.4} parent=0 // pred_region
    _
  $region17: #{generator_forward.4} parent=0 // pred_fallthru
    _
  %v17 = vld [vmem:[%s0] sm:$0xff]
  %v18 = vld [vmem:[%s0 + $0x8] sm:$0xff]
  %v19 = vld [vmem:[%s0 + $0x10] sm:$0xff]
  %v20 = vld [vmem:[%s0 + $0x18] sm:$0xff]
  %v21 = vld [vmem:[%s0 + $0x20] sm:$0xf]
  %v22 = vld [vmem:[%s0 + $0x24] sm:$0xff]
  %v23 = vld [vmem:[%s0 + $0x2c] sm:$0xff]
  %v24 = vld [vmem:[%s0 + $0x34] sm:$0xff]
  %v25 = vld [vmem:[%s0 + $0x3c] sm:$0xff]
  %v26 = vld [vmem:[%s0 + $0x44] sm:$0xf]
  %v27 = vld [vmem:[%s0 + $0x48] sm:$0xff]
  %v28 = vld [vmem:[%s0 + $0x50] sm:$0xff]
  %v29 = vld [vmem:[%s0 + $0x58] sm:$0xff]
  %v30 = vld [vmem:[%s0 + $0x60] sm:$0xff]
  %v31 = vld [vmem:[%s0 + $0x68] sm:$0xf]
  %v32 = vld [vmem:[%s0 + $0x6c] sm:$0xff]
  %v33 = vld [vmem:[%s0 + $0x74] sm:$0xff]
  %v34 = vld [vmem:[%s0 + $0x7c] sm:$0xff]
  %v35 = vld [vmem:[%s0 + $0x84] sm:$0xff]
  %v36 = vld [vmem:[%s0 + $0x8c] sm:$0xf]
  %v37 = vld [vmem:[%s0 + $0x90] sm:$0xff]
  %v38 = vld [vmem:[%s0 + $0x98] sm:$0xff]
  %v39 = vld [vmem:[%s0 + $0xa0] sm:$0xff]
  %v40 = vld [vmem:[%s0 + $0xa8] sm:$0xff]
  %v41 = vld [vmem:[%s0 + $0xb0] sm:$0xf]
  %v42 = vld [vmem:[%s0 + $0xb4] sm:$0xff]
  %v43 = vld [vmem:[%s0 + $0xbc] sm:$0xff]
  %v44 = vld [vmem:[%s0 + $0xc4] sm:$0xff]
  %v45 = vld [vmem:[%s0 + $0xcc] sm:$0xff]
  %v46 = vld [vmem:[%s0 + $0xd4] sm:$0xf]
  %v47 = vld [vmem:[%s0 + $0xd8] sm:$0xff]
  %v48 = vld [vmem:[%s0 + $0xe0] sm:$0xff]
  %v49 = vld [vmem:[%s0 + $0xe8] sm:$0xff]
  %v50 = vld [vmem:[%s0 + $0xf0] sm:$0xff]
  %v51 = vld [vmem:[%s0 + $0xf8] sm:$0xf]
  %v52 = vld [vmem:[%s0 + $0xfc] sm:$0xff]
  %v53 = vld [vmem:[%s0 + $0x104] sm:$0xff]
  %v54 = vld [vmem:[%s0 + $0x10c] sm:$0xff]
  %v55 = vld [vmem:[%s0 + $0x114] sm:$0xff]
  %v56 = vld [vmem:[%s0 + $0x11c] sm:$0xf]
  %v57 = vld [vmem:[%s0 + $0x120] sm:$0xff]
  %v58 = vld [vmem:[%s0 + $0x128] sm:$0xff]
  %v59 = vld [vmem:[%s0 + $0x130] sm:$0xff]
  %v60 = vld [vmem:[%s0 + $0x138] sm:$0xff]
  %v61 = vld [vmem:[%s0 + $0x140] sm:$0xf]
  %v62 = vld [vmem:[%s0 + $0x144] sm:$0xff]
  %v63 = vld [vmem:[%s0 + $0x14c] sm:$0xff]
  %v64 = vld [vmem:[%s0 + $0x154] sm:$0xff]
  %v65 = vld [vmem:[%s0 + $0x15c] sm:$0xff]
  %v66 = vld [vmem:[%s0 + $0x164] sm:$0xf]
  %v67 = vld [vmem:[%s0 + $0x168] sm:$0xff]
  %v68 = vld [vmem:[%s0 + $0x170] sm:$0xff]
  %v69 = vld [vmem:[%s0 + $0x178] sm:$0xff]
  %v70 = vld [vmem:[%s0 + $0x180] sm:$0xff]
  %v71 = vld [vmem:[%s0 + $0x188] sm:$0xf]
  %v72 = vld [vmem:[%s0 + $0x18c] sm:$0xff]
  %v73 = vld [vmem:[%s0 + $0x194] sm:$0xff]
  %v74 = vld [vmem:[%s0 + $0x19c] sm:$0xff]
  %v75 = vld [vmem:[%s0 + $0x1a4] sm:$0xff]
  %v76 = vld [vmem:[%s0 + $0x1ac] sm:$0xf]
  %v77 = vld [vmem:[%s0 + $0x1b0] sm:$0x11]
  %v78 = vld [vmem:[%s0 + $0x1b8] sm:$0x11]
  %v79 = vld [vmem:[%s0 + $0x1c0] sm:$0x11]
  %v80 = vld [vmem:[%s0 + $0x1c8] sm:$0x11]
  %v81 = vld [vmem:[%s0 + $0x1d0] sm:$0x1]
  %v82 = vld [vmem:[%s1] sm:$0xff]
  %v83 = vld [vmem:[%s1 + $0x8] sm:$0xff]
  %v84 = vld [vmem:[%s1 + $0x10] sm:$0xff]
  %v85 = vld [vmem:[%s1 + $0x18] sm:$0xff]
  %v86 = vld [vmem:[%s1 + $0x20] sm:$0xff]
  %v87 = vld [vmem:[%s1 + $0x28] sm:$0xff]
  %v88 = vld [vmem:[%s1 + $0x30] sm:$0xff]
  %v89 = vld [vmem:[%s1 + $0x38] sm:$0xff]
  %v90 = vld [vmem:[%s1 + $0x40] sm:$0xff]
  %v91 = vld [vmem:[%s1 + $0x48] sm:$0xff]
  %v92 = vld [vmem:[%s1 + $0x50] sm:$0xff]
  %v93 = vld [vmem:[%s1 + $0x58] sm:$0xff]
  %v94 = vld [vmem:[%s1 + $0x60] sm:$0xff]
  %v95 = vld [vmem:[%s1 + $0x68] sm:$0xff]
  %v96 = vld [vmem:[%s1 + $0x70] sm:$0xff]
  %v97 = vld [vmem:[%s1 + $0x78] sm:$0xff]
  %v98 = vld [vmem:[%s1 + $0x80] sm:$0xff]
  %v99 = vld [vmem:[%s1 + $0x88] sm:$0xff]
  %v100 = vld [vmem:[%s1 + $0x90] sm:$0xff]
  %v101 = vld [vmem:[%s1 + $0x98] sm:$0xff]
  %v102 = vld [vmem:[%s1 + $0xa0] sm:$0xff]
  %v103 = vld [vmem:[%s1 + $0xa8] sm:$0xff]
  %v104 = vld [vmem:[%s1 + $0xb0] sm:$0xff]
  %v105 = vld [vmem:[%s1 + $0xb8] sm:$0xff]
  %v106 = vld [vmem:[%s1 + $0xc0] sm:$0xff]
  %v107 = vld [vmem:[%s1 + $0xc8] sm:$0xff]
  %v108 = vld [vmem:[%s1 + $0xd0] sm:$0xff]
  %v109 = vld [vmem:[%s1 + $0xd8] sm:$0xff]
  %v110 = vld [vmem:[%s1 + $0xe0] sm:$0xff]
  %v111 = vld [vmem:[%s1 + $0xe8] sm:$0xff]
  %v112 = vld [vmem:[%s1 + $0xf0] sm:$0xff]
  %v113 = vld [vmem:[%s1 + $0xf8] sm:$0xff]
  %v114 = vld [vmem:[%s1 + $0x100] sm:$0xff]
  %v115 = vld [vmem:[%s1 + $0x108] sm:$0xff]
  %v116 = vld [vmem:[%s1 + $0x110] sm:$0xff]
  %v117 = vld [vmem:[%s1 + $0x118] sm:$0xff]
  %v118 = vld [vmem:[%s1 + $0x120] sm:$0xff]
  %v119 = vld [vmem:[%s1 + $0x128] sm:$0xff]
  %v120 = vld [vmem:[%s1 + $0x130] sm:$0xff]
  %v121 = vld [vmem:[%s1 + $0x138] sm:$0xff]
  %v122 = vld [vmem:[%s1 + $0x140] sm:$0xff]
  %v123 = vld [vmem:[%s1 + $0x148] sm:$0xff]
  %v124 = vld [vmem:[%s1 + $0x150] sm:$0xff]
  %v125 = vld [vmem:[%s1 + $0x158] sm:$0xff]
  %v126 = vld [vmem:[%s1 + $0x160] sm:$0xff]
  %v127 = vld [vmem:[%s1 + $0x168] sm:$0xff]
  %v128 = vld [vmem:[%s1 + $0x170] sm:$0xff]
  %v129 = vld [vmem:[%s1 + $0x178] sm:$0xff]
  %v130 = vld [vmem:[%s1 + $0x180] sm:$0xff]
  %v131 = vld [vmem:[%s1 + $0x188] sm:$0xff]
  %v132 = vld [vmem:[%s1 + $0x190] sm:$0xff]
  %v133 = vld [vmem:[%s1 + $0x198] sm:$0xff]
  %v134 = vld [vmem:[%s1 + $0x1a0] sm:$0xff]
  %v135 = vld [vmem:[%s1 + $0x1a8] sm:$0xff]
  %v136 = vld [vmem:[%s1 + $0x1b0] sm:$0xff]
  %v137 = vld [vmem:[%s1 + $0x1b8] sm:$0xff]
  %v138 = vld [vmem:[%s1 + $0x1c0] sm:$0xff]
  %v139 = vld [vmem:[%s1 + $0x1c8] sm:$0xff]
  %v140 = vld [vmem:[%s1 + $0x1d0] sm:$0xff]
  %v141 = vld [vmem:[%s1 + $0x1d8] sm:$0xff]
  %v142 = vld [vmem:[%s1 + $0x1e0] sm:$0xff]
  %v143 = vld [vmem:[%s1 + $0x1e8] sm:$0xff]
  %v144 = vld [vmem:[%s1 + $0x1f0] sm:$0xff]
  %v145 = vld [vmem:[%s1 + $0x1f8] sm:$0xff]
  %v146 = vld [vmem:[%s1 + $0x200] sm:$0xff]
  %v147 = vld [vmem:[%s1 + $0x208] sm:$0xff]
  %v148 = vld [vmem:[%s1 + $0x210] sm:$0xff]
  %v149 = vld [vmem:[%s1 + $0x218] sm:$0xff]
  %v150 = vld [vmem:[%s1 + $0x220] sm:$0xff]
  %v151 = vld [vmem:[%s1 + $0x228] sm:$0xff]
  %v152 = vld [vmem:[%s1 + $0x230] sm:$0xff]
  %v153 = vld [vmem:[%s1 + $0x238] sm:$0xff]
  %v154 = vld [vmem:[%s1 + $0x240] sm:$0xff]
  %v155 = vld [vmem:[%s1 + $0x248] sm:$0xff]
  %v156 = vld [vmem:[%s1 + $0x250] sm:$0xff]
  %v157 = vld [vmem:[%s1 + $0x258] sm:$0xff]
  %v158 = vld [vmem:[%s1 + $0x260] sm:$0xff]
  %v159 = vld [vmem:[%s1 + $0x268] sm:$0xff]
  %v160 = vld [vmem:[%s1 + $0x270] sm:$0xff]
  %v161 = vld [vmem:[%s1 + $0x278] sm:$0xff]
  %v162 = vld [vmem:[%s1 + $0x280] sm:$0xff]
  %v163 = vld [vmem:[%s1 + $0x288] sm:$0xff]
  %v164 = vld [vmem:[%s1 + $0x290] sm:$0xff]
  %v165 = vld [vmem:[%s1 + $0x298] sm:$0xff]
  %v166 = vld [vmem:[%s1 + $0x2a0] sm:$0xff]
  %v167 = vld [vmem:[%s1 + $0x2a8] sm:$0xff]
  %v168 = vld [vmem:[%s1 + $0x2b0] sm:$0xff]
  %v169 = vld [vmem:[%s1 + $0x2b8] sm:$0xff]
  %v170 = vld [vmem:[%s1 + $0x2c0] sm:$0xff]
  %v171 = vld [vmem:[%s1 + $0x2c8] sm:$0xff]
  %v172 = vld [vmem:[%s1 + $0x2d0] sm:$0xff]
  %v173 = vld [vmem:[%s1 + $0x2d8] sm:$0xff]
  %v174 = vld [vmem:[%s1 + $0x2e0] sm:$0xff]
  %v175 = vld [vmem:[%s1 + $0x2e8] sm:$0xff]
  %v176 = vld [vmem:[%s1 + $0x2f0] sm:$0xff]
  %v177 = vld [vmem:[%s1 + $0x2f8] sm:$0xff]
  %v178 = vld [vmem:[%s1 + $0x300] sm:$0xff]
  %v179 = vld [vmem:[%s1 + $0x308] sm:$0xff]
  %v180 = vld [vmem:[%s1 + $0x310] sm:$0xff]
  %v181 = vld [vmem:[%s1 + $0x318] sm:$0xff]
  %v182 = vld [vmem:[%s1 + $0x320] sm:$0xff]
  %v183 = vld [vmem:[%s1 + $0x328] sm:$0xff]
  %v184 = vld [vmem:[%s1 + $0x330] sm:$0xff]
  %v185 = vld [vmem:[%s1 + $0x338] sm:$0xff]
  %v186 = vld [vmem:[%s1 + $0x340] sm:$0xff]
  %v187 = vld [vmem:[%s1 + $0x348] sm:$0xff]
  %v188 = vld [vmem:[%s1 + $0x350] sm:$0xff]
  %v189 = vld [vmem:[%s1 + $0x358] sm:$0xff]
  %v190 = vld [vmem:[%s1 + $0x360] sm:$0xff]
  %v191 = vld [vmem:[%s1 + $0x368] sm:$0xff]
  %v192 = vld [vmem:[%s1 + $0x370] sm:$0xff]
  %v193 = vld [vmem:[%s1 + $0x378] sm:$0xff]
  %v194 = vld [vmem:[%s1 + $0x380] sm:$0xff]
  %v195 = vld [vmem:[%s1 + $0x388] sm:$0xff]
  %v196 = vld [vmem:[%s1 + $0x390] sm:$0xff]
  %v197 = vld [vmem:[%s1 + $0x398] sm:$0xff]
  %v198 = vld [vmem:[%s1 + $0x3a0] sm:$0xff]
  %v199 = vld [vmem:[%s1 + $0x3a8] sm:$0xff]
  %v200 = vld [vmem:[%s1 + $0x3b0] sm:$0xff]
  %v201 = vld [vmem:[%s1 + $0x3b8] sm:$0xff]
  %v202 = vld [vmem:[%s1 + $0x3c0] sm:$0xff]
  %v203 = vld [vmem:[%s1 + $0x3c8] sm:$0xff]
  %v204 = vld [vmem:[%s1 + $0x3d0] sm:$0xff]
  %v205 = vld [vmem:[%s1 + $0x3d8] sm:$0xff]
  %v206 = vld [vmem:[%s1 + $0x3e0] sm:$0xff]
  %v207 = vld [vmem:[%s1 + $0x3e8] sm:$0xff]
  %v208 = vld [vmem:[%s1 + $0x3f0] sm:$0xff]
  %v209 = vld [vmem:[%s1 + $0x3f8] sm:$0xff]
  %v210 = vld [vmem:[%s1 + $0x400] sm:$0xff]
  %v211 = vld [vmem:[%s1 + $0x408] sm:$0xff]
  %v212 = vld [vmem:[%s1 + $0x410] sm:$0xff]
  %v213 = vld [vmem:[%s1 + $0x418] sm:$0xff]
  %v214 = vld [vmem:[%s1 + $0x420] sm:$0xff]
  %v215 = vld [vmem:[%s1 + $0x428] sm:$0xff]
  %v216 = vld [vmem:[%s1 + $0x430] sm:$0xff]
  %v217 = vld [vmem:[%s1 + $0x438] sm:$0xff]
  %v218 = vld [vmem:[%s1 + $0x440] sm:$0xff]
  %v219 = vld [vmem:[%s1 + $0x448] sm:$0xff]
  %v220 = vld [vmem:[%s1 + $0x450] sm:$0xff]
  %v221 = vld [vmem:[%s1 + $0x458] sm:$0xff]
  %v222 = vld [vmem:[%s1 + $0x460] sm:$0xff]
  %v223 = vld [vmem:[%s1 + $0x468] sm:$0xff]
  %v224 = vld [vmem:[%s1 + $0x470] sm:$0xff]
  %v225 = vld [vmem:[%s1 + $0x478] sm:$0xff]
  %v291 = vunpack.c.l.b16 %v17
  %v292 = vunpack.c.h.b16 %v17
  %v293 = vunpack.c.l.b16 %v18
  %v294 = vunpack.c.h.b16 %v18
  %v295 = vunpack.c.l.b16 %v19
  %v296 = vunpack.c.h.b16 %v19
  %v297 = vunpack.c.l.b16 %v20
  %v298 = vunpack.c.h.b16 %v20
  %v299 = vunpack.c.l.b16 %v21
  %v300 = vunpack.c.l.b16 %v22
  %v301 = vunpack.c.h.b16 %v22
  %v302 = vunpack.c.l.b16 %v23
  %v303 = vunpack.c.h.b16 %v23
  %v304 = vunpack.c.l.b16 %v24
  %v305 = vunpack.c.h.b16 %v24
  %v306 = vunpack.c.l.b16 %v25
  %v307 = vunpack.c.h.b16 %v25
  %v308 = vunpack.c.l.b16 %v26
  %v309 = vunpack.c.l.b16 %v27
  %v310 = vunpack.c.h.b16 %v27
  %v311 = vunpack.c.l.b16 %v28
  %v312 = vunpack.c.h.b16 %v28
  %v313 = vunpack.c.l.b16 %v29
  %v314 = vunpack.c.h.b16 %v29
  %v315 = vunpack.c.l.b16 %v30
  %v316 = vunpack.c.h.b16 %v30
  %v317 = vunpack.c.l.b16 %v31
  %v318 = vunpack.c.l.b16 %v32
  %v319 = vunpack.c.h.b16 %v32
  %v320 = vunpack.c.l.b16 %v33
  %v321 = vunpack.c.h.b16 %v33
  %v322 = vunpack.c.l.b16 %v34
  %v323 = vunpack.c.h.b16 %v34
  %v324 = vunpack.c.l.b16 %v35
  %v325 = vunpack.c.h.b16 %v35
  %v326 = vunpack.c.l.b16 %v36
  %v327 = vunpack.c.l.b16 %v37
  %v328 = vunpack.c.h.b16 %v37
  %v329 = vunpack.c.l.b16 %v38
  %v330 = vunpack.c.h.b16 %v38
  %v331 = vunpack.c.l.b16 %v39
  %v332 = vunpack.c.h.b16 %v39
  %v333 = vunpack.c.l.b16 %v40
  %v334 = vunpack.c.h.b16 %v40
  %v335 = vunpack.c.l.b16 %v41
  %v336 = vunpack.c.l.b16 %v42
  %v337 = vunpack.c.h.b16 %v42
  %v338 = vunpack.c.l.b16 %v43
  %v339 = vunpack.c.h.b16 %v43
  %v340 = vunpack.c.l.b16 %v44
  %v341 = vunpack.c.h.b16 %v44
  %v342 = vunpack.c.l.b16 %v45
  %v343 = vunpack.c.h.b16 %v45
  %v344 = vunpack.c.l.b16 %v46
  %v345 = vunpack.c.l.b16 %v47
  %v346 = vunpack.c.h.b16 %v47
  %v347 = vunpack.c.l.b16 %v48
  %v348 = vunpack.c.h.b16 %v48
  %v349 = vunpack.c.l.b16 %v49
  %v350 = vunpack.c.h.b16 %v49
  %v351 = vunpack.c.l.b16 %v50
  %v352 = vunpack.c.h.b16 %v50
  %v353 = vunpack.c.l.b16 %v51
  %v354 = vunpack.c.l.b16 %v52
  %v355 = vunpack.c.h.b16 %v52
  %v356 = vunpack.c.l.b16 %v53
  %v357 = vunpack.c.h.b16 %v53
  %v358 = vunpack.c.l.b16 %v54
  %v359 = vunpack.c.h.b16 %v54
  %v360 = vunpack.c.l.b16 %v55
  %v361 = vunpack.c.h.b16 %v55
  %v362 = vunpack.c.l.b16 %v56
  %v363 = vunpack.c.l.b16 %v57
  %v364 = vunpack.c.h.b16 %v57
  %v365 = vunpack.c.l.b16 %v58
  %v366 = vunpack.c.h.b16 %v58
  %v367 = vunpack.c.l.b16 %v59
  %v368 = vunpack.c.h.b16 %v59
  %v369 = vunpack.c.l.b16 %v60
  %v370 = vunpack.c.h.b16 %v60
  %v371 = vunpack.c.l.b16 %v61
  %v372 = vunpack.c.l.b16 %v62
  %v373 = vunpack.c.h.b16 %v62
  %v374 = vunpack.c.l.b16 %v63
  %v375 = vunpack.c.h.b16 %v63
  %v376 = vunpack.c.l.b16 %v64
  %v377 = vunpack.c.h.b16 %v64
  %v378 = vunpack.c.l.b16 %v65
  %v379 = vunpack.c.h.b16 %v65
  %v380 = vunpack.c.l.b16 %v66
  %v381 = vunpack.c.l.b16 %v67
  %v382 = vunpack.c.h.b16 %v67
  %v383 = vunpack.c.l.b16 %v68
  %v384 = vunpack.c.h.b16 %v68
  %v385 = vunpack.c.l.b16 %v69
  %v386 = vunpack.c.h.b16 %v69
  %v387 = vunpack.c.l.b16 %v70
  %v388 = vunpack.c.h.b16 %v70
  %v389 = vunpack.c.l.b16 %v71
  %v390 = vunpack.c.l.b16 %v72
  %v391 = vunpack.c.h.b16 %v72
  %v392 = vunpack.c.l.b16 %v73
  %v393 = vunpack.c.h.b16 %v73
  %v394 = vunpack.c.l.b16 %v74
  %v395 = vunpack.c.h.b16 %v74
  %v396 = vunpack.c.l.b16 %v75
  %v397 = vunpack.c.h.b16 %v75
  %v398 = vunpack.c.l.b16 %v76
  %v399 = vunpack.c.l.b16 %v77
  %v400 = vunpack.c.h.b16 %v77
  %v401 = vunpack.c.l.b16 %v78
  %v402 = vunpack.c.h.b16 %v78
  %v403 = vunpack.c.l.b16 %v79
  %v404 = vunpack.c.h.b16 %v79
  %v405 = vunpack.c.l.b16 %v80
  %v406 = vunpack.c.h.b16 %v80
  %v407 = vunpack.c.l.b16 %v81
  %v408 = vpack.c.b16 %v300, %v291
  %v409 = vpack.c.b16 %v301, %v292
  %v410 = vpack.c.b16 %v302, %v293
  %v411 = vpack.c.b16 %v303, %v294
  %v412 = vpack.c.b16 %v304, %v295
  %v413 = vpack.c.b16 %v305, %v296
  %v414 = vpack.c.b16 %v306, %v297
  %v415 = vpack.c.b16 %v307, %v298
  %v416 = vpack.c.b16 %v308, %v299
  %v417 = vpack.c.b16 %v318, %v309
  %v418 = vpack.c.b16 %v319, %v310
  %v419 = vpack.c.b16 %v320, %v311
  %v420 = vpack.c.b16 %v321, %v312
  %v421 = vpack.c.b16 %v322, %v313
  %v422 = vpack.c.b16 %v323, %v314
  %v423 = vpack.c.b16 %v324, %v315
  %v424 = vpack.c.b16 %v325, %v316
  %v425 = vpack.c.b16 %v326, %v317
  %v426 = vpack.c.b16 %v336, %v327
  %v427 = vpack.c.b16 %v337, %v328
  %v428 = vpack.c.b16 %v338, %v329
  %v429 = vpack.c.b16 %v339, %v330
  %v430 = vpack.c.b16 %v340, %v331
  %v431 = vpack.c.b16 %v341, %v332
  %v432 = vpack.c.b16 %v342, %v333
  %v433 = vpack.c.b16 %v343, %v334
  %v434 = vpack.c.b16 %v344, %v335
  %v435 = vpack.c.b16 %v354, %v345
  %v436 = vpack.c.b16 %v355, %v346
  %v437 = vpack.c.b16 %v356, %v347
  %v438 = vpack.c.b16 %v357, %v348
  %v439 = vpack.c.b16 %v358, %v349
  %v440 = vpack.c.b16 %v359, %v350
  %v441 = vpack.c.b16 %v360, %v351
  %v442 = vpack.c.b16 %v361, %v352
  %v443 = vpack.c.b16 %v362, %v353
  %v444 = vpack.c.b16 %v372, %v363
  %v445 = vpack.c.b16 %v373, %v364
  %v446 = vpack.c.b16 %v374, %v365
  %v447 = vpack.c.b16 %v375, %v366
  %v448 = vpack.c.b16 %v376, %v367
  %v449 = vpack.c.b16 %v377, %v368
  %v450 = vpack.c.b16 %v378, %v369
  %v451 = vpack.c.b16 %v379, %v370
  %v452 = vpack.c.b16 %v380, %v371
  %v453 = vpack.c.b16 %v390, %v381
  %v454 = vpack.c.b16 %v391, %v382
  %v455 = vpack.c.b16 %v392, %v383
  %v456 = vpack.c.b16 %v393, %v384
  %v457 = vpack.c.b16 %v394, %v385
  %v458 = vpack.c.b16 %v395, %v386
  %v459 = vpack.c.b16 %v396, %v387
  %v460 = vpack.c.b16 %v397, %v388
  %v461 = vpack.c.b16 %v398, %v389
  %v462 = vpack.c.b16 %v399, %v399
  %v463 = vpack.c.b16 %v400, %v400
  %v464 = vpack.c.b16 %v401, %v401
  %v465 = vpack.c.b16 %v402, %v402
  %v466 = vpack.c.b16 %v403, %v403
  %v467 = vpack.c.b16 %v404, %v404
  %v468 = vpack.c.b16 %v405, %v405
  %v469 = vpack.c.b16 %v406, %v406
  %v470 = vpack.c.b16 %v407, %v407
  %v678 = vunpack.c.l.b16 %v82
  %v679 = vunpack.c.h.b16 %v82
  %v680 = vunpack.c.l.b16 %v83
  %v681 = vunpack.c.h.b16 %v83
  %v682 = vunpack.c.l.b16 %v84
  %v683 = vunpack.c.h.b16 %v84
  %v684 = vunpack.c.l.b16 %v85
  %v685 = vunpack.c.h.b16 %v85
  %v686 = vunpack.c.l.b16 %v86
  %v687 = vunpack.c.h.b16 %v86
  %v688 = vunpack.c.l.b16 %v87
  %v689 = vunpack.c.h.b16 %v87
  %v690 = vunpack.c.l.b16 %v88
  %v691 = vunpack.c.h.b16 %v88
  %v692 = vunpack.c.l.b16 %v89
  %v693 = vunpack.c.h.b16 %v89
  %v694 = vunpack.c.l.b16 %v90
  %v695 = vunpack.c.h.b16 %v90
  %v696 = vunpack.c.l.b16 %v91
  %v697 = vunpack.c.h.b16 %v91
  %v698 = vunpack.c.l.b16 %v92
  %v699 = vunpack.c.h.b16 %v92
  %v700 = vunpack.c.l.b16 %v93
  %v701 = vunpack.c.h.b16 %v93
  %v702 = vunpack.c.l.b16 %v94
  %v703 = vunpack.c.h.b16 %v94
  %v704 = vunpack.c.l.b16 %v95
  %v705 = vunpack.c.h.b16 %v95
  %v706 = vunpack.c.l.b16 %v96
  %v707 = vunpack.c.h.b16 %v96
  %v708 = vunpack.c.l.b16 %v97
  %v709 = vunpack.c.h.b16 %v97
  %v710 = vunpack.c.l.b16 %v98
  %v711 = vunpack.c.h.b16 %v98
  %v712 = vunpack.c.l.b16 %v99
  %v713 = vunpack.c.h.b16 %v99
  %v714 = vunpack.c.l.b16 %v100
  %v715 = vunpack.c.h.b16 %v100
  %v716 = vunpack.c.l.b16 %v101
  %v717 = vunpack.c.h.b16 %v101
  %v718 = vunpack.c.l.b16 %v102
  %v719 = vunpack.c.h.b16 %v102
  %v720 = vunpack.c.l.b16 %v103
  %v721 = vunpack.c.h.b16 %v103
  %v722 = vunpack.c.l.b16 %v104
  %v723 = vunpack.c.h.b16 %v104
  %v724 = vunpack.c.l.b16 %v105
  %v725 = vunpack.c.h.b16 %v105
  %v726 = vunpack.c.l.b16 %v106
  %v727 = vunpack.c.h.b16 %v106
  %v728 = vunpack.c.l.b16 %v107
  %v729 = vunpack.c.h.b16 %v107
  %v730 = vunpack.c.l.b16 %v108
  %v731 = vunpack.c.h.b16 %v108
  %v732 = vunpack.c.l.b16 %v109
  %v733 = vunpack.c.h.b16 %v109
  %v734 = vunpack.c.l.b16 %v110
  %v735 = vunpack.c.h.b16 %v110
  %v736 = vunpack.c.l.b16 %v111
  %v737 = vunpack.c.h.b16 %v111
  %v738 = vunpack.c.l.b16 %v112
  %v739 = vunpack.c.h.b16 %v112
  %v740 = vunpack.c.l.b16 %v113
  %v741 = vunpack.c.h.b16 %v113
  %v742 = vunpack.c.l.b16 %v114
  %v743 = vunpack.c.h.b16 %v114
  %v744 = vunpack.c.l.b16 %v115
  %v745 = vunpack.c.h.b16 %v115
  %v746 = vunpack.c.l.b16 %v116
  %v747 = vunpack.c.h.b16 %v116
  %v748 = vunpack.c.l.b16 %v117
  %v749 = vunpack.c.h.b16 %v117
  %v750 = vunpack.c.l.b16 %v118
  %v751 = vunpack.c.h.b16 %v118
  %v752 = vunpack.c.l.b16 %v119
  %v753 = vunpack.c.h.b16 %v119
  %v754 = vunpack.c.l.b16 %v120
  %v755 = vunpack.c.h.b16 %v120
  %v756 = vunpack.c.l.b16 %v121
  %v757 = vunpack.c.h.b16 %v121
  %v758 = vunpack.c.l.b16 %v122
  %v759 = vunpack.c.h.b16 %v122
  %v760 = vunpack.c.l.b16 %v123
  %v761 = vunpack.c.h.b16 %v123
  %v762 = vunpack.c.l.b16 %v124
  %v763 = vunpack.c.h.b16 %v124
  %v764 = vunpack.c.l.b16 %v125
  %v765 = vunpack.c.h.b16 %v125
  %v766 = vunpack.c.l.b16 %v126
  %v767 = vunpack.c.h.b16 %v126
  %v768 = vunpack.c.l.b16 %v127
  %v769 = vunpack.c.h.b16 %v127
  %v770 = vunpack.c.l.b16 %v128
  %v771 = vunpack.c.h.b16 %v128
  %v772 = vunpack.c.l.b16 %v129
  %v773 = vunpack.c.h.b16 %v129
  %v774 = vunpack.c.l.b16 %v130
  %v775 = vunpack.c.h.b16 %v130
  %v776 = vunpack.c.l.b16 %v131
  %v777 = vunpack.c.h.b16 %v131
  %v778 = vunpack.c.l.b16 %v132
  %v779 = vunpack.c.h.b16 %v132
  %v780 = vunpack.c.l.b16 %v133
  %v781 = vunpack.c.h.b16 %v133
  %v782 = vunpack.c.l.b16 %v134
  %v783 = vunpack.c.h.b16 %v134
  %v784 = vunpack.c.l.b16 %v135
  %v785 = vunpack.c.h.b16 %v135
  %v786 = vunpack.c.l.b16 %v136
  %v787 = vunpack.c.h.b16 %v136
  %v788 = vunpack.c.l.b16 %v137
  %v789 = vunpack.c.h.b16 %v137
  %v790 = vunpack.c.l.b16 %v138
  %v791 = vunpack.c.h.b16 %v138
  %v792 = vunpack.c.l.b16 %v139
  %v793 = vunpack.c.h.b16 %v139
  %v794 = vunpack.c.l.b16 %v140
  %v795 = vunpack.c.h.b16 %v140
  %v796 = vunpack.c.l.b16 %v141
  %v797 = vunpack.c.h.b16 %v141
  %v798 = vunpack.c.l.b16 %v142
  %v799 = vunpack.c.h.b16 %v142
  %v800 = vunpack.c.l.b16 %v143
  %v801 = vunpack.c.h.b16 %v143
  %v802 = vunpack.c.l.b16 %v144
  %v803 = vunpack.c.h.b16 %v144
  %v804 = vunpack.c.l.b16 %v145
  %v805 = vunpack.c.h.b16 %v145
  %v806 = vunpack.c.l.b16 %v146
  %v807 = vunpack.c.h.b16 %v146
  %v808 = vunpack.c.l.b16 %v147
  %v809 = vunpack.c.h.b16 %v147
  %v810 = vunpack.c.l.b16 %v148
  %v811 = vunpack.c.h.b16 %v148
  %v812 = vunpack.c.l.b16 %v149
  %v813 = vunpack.c.h.b16 %v149
  %v814 = vunpack.c.l.b16 %v150
  %v815 = vunpack.c.h.b16 %v150
  %v816 = vunpack.c.l.b16 %v151
  %v817 = vunpack.c.h.b16 %v151
  %v818 = vunpack.c.l.b16 %v152
  %v819 = vunpack.c.h.b16 %v152
  %v820 = vunpack.c.l.b16 %v153
  %v821 = vunpack.c.h.b16 %v153
  %v822 = vunpack.c.l.b16 %v154
  %v823 = vunpack.c.h.b16 %v154
  %v824 = vunpack.c.l.b16 %v155
  %v825 = vunpack.c.h.b16 %v155
  %v826 = vunpack.c.l.b16 %v156
  %v827 = vunpack.c.h.b16 %v156
  %v828 = vunpack.c.l.b16 %v157
  %v829 = vunpack.c.h.b16 %v157
  %v830 = vunpack.c.l.b16 %v158
  %v831 = vunpack.c.h.b16 %v158
  %v832 = vunpack.c.l.b16 %v159
  %v833 = vunpack.c.h.b16 %v159
  %v834 = vunpack.c.l.b16 %v160
  %v835 = vunpack.c.h.b16 %v160
  %v836 = vunpack.c.l.b16 %v161
  %v837 = vunpack.c.h.b16 %v161
  %v838 = vunpack.c.l.b16 %v162
  %v839 = vunpack.c.h.b16 %v162
  %v840 = vunpack.c.l.b16 %v163
  %v841 = vunpack.c.h.b16 %v163
  %v842 = vunpack.c.l.b16 %v164
  %v843 = vunpack.c.h.b16 %v164
  %v844 = vunpack.c.l.b16 %v165
  %v845 = vunpack.c.h.b16 %v165
  %v846 = vunpack.c.l.b16 %v166
  %v847 = vunpack.c.h.b16 %v166
  %v848 = vunpack.c.l.b16 %v167
  %v849 = vunpack.c.h.b16 %v167
  %v850 = vunpack.c.l.b16 %v168
  %v851 = vunpack.c.h.b16 %v168
  %v852 = vunpack.c.l.b16 %v169
  %v853 = vunpack.c.h.b16 %v169
  %v854 = vunpack.c.l.b16 %v170
  %v855 = vunpack.c.h.b16 %v170
  %v856 = vunpack.c.l.b16 %v171
  %v857 = vunpack.c.h.b16 %v171
  %v858 = vunpack.c.l.b16 %v172
  %v859 = vunpack.c.h.b16 %v172
  %v860 = vunpack.c.l.b16 %v173
  %v861 = vunpack.c.h.b16 %v173
  %v862 = vunpack.c.l.b16 %v174
  %v863 = vunpack.c.h.b16 %v174
  %v864 = vunpack.c.l.b16 %v175
  %v865 = vunpack.c.h.b16 %v175
  %v866 = vunpack.c.l.b16 %v176
  %v867 = vunpack.c.h.b16 %v176
  %v868 = vunpack.c.l.b16 %v177
  %v869 = vunpack.c.h.b16 %v177
  %v870 = vunpack.c.l.b16 %v178
  %v871 = vunpack.c.h.b16 %v178
  %v872 = vunpack.c.l.b16 %v179
  %v873 = vunpack.c.h.b16 %v179
  %v874 = vunpack.c.l.b16 %v180
  %v875 = vunpack.c.h.b16 %v180
  %v876 = vunpack.c.l.b16 %v181
  %v877 = vunpack.c.h.b16 %v181
  %v878 = vunpack.c.l.b16 %v182
  %v879 = vunpack.c.h.b16 %v182
  %v880 = vunpack.c.l.b16 %v183
  %v881 = vunpack.c.h.b16 %v183
  %v882 = vunpack.c.l.b16 %v184
  %v883 = vunpack.c.h.b16 %v184
  %v884 = vunpack.c.l.b16 %v185
  %v885 = vunpack.c.h.b16 %v185
  %v886 = vunpack.c.l.b16 %v186
  %v887 = vunpack.c.h.b16 %v186
  %v888 = vunpack.c.l.b16 %v187
  %v889 = vunpack.c.h.b16 %v187
  %v890 = vunpack.c.l.b16 %v188
  %v891 = vunpack.c.h.b16 %v188
  %v892 = vunpack.c.l.b16 %v189
  %v893 = vunpack.c.h.b16 %v189
  %v894 = vunpack.c.l.b16 %v190
  %v895 = vunpack.c.h.b16 %v190
  %v896 = vunpack.c.l.b16 %v191
  %v897 = vunpack.c.h.b16 %v191
  %v898 = vunpack.c.l.b16 %v192
  %v899 = vunpack.c.h.b16 %v192
  %v900 = vunpack.c.l.b16 %v193
  %v901 = vunpack.c.h.b16 %v193
  %v902 = vunpack.c.l.b16 %v194
  %v903 = vunpack.c.h.b16 %v194
  %v904 = vunpack.c.l.b16 %v195
  %v905 = vunpack.c.h.b16 %v195
  %v906 = vunpack.c.l.b16 %v196
  %v907 = vunpack.c.h.b16 %v196
  %v908 = vunpack.c.l.b16 %v197
  %v909 = vunpack.c.h.b16 %v197
  %v910 = vunpack.c.l.b16 %v198
  %v911 = vunpack.c.h.b16 %v198
  %v912 = vunpack.c.l.b16 %v199
  %v913 = vunpack.c.h.b16 %v199
  %v914 = vunpack.c.l.b16 %v200
  %v915 = vunpack.c.h.b16 %v200
  %v916 = vunpack.c.l.b16 %v201
  %v917 = vunpack.c.h.b16 %v201
  %v918 = vunpack.c.l.b16 %v202
  %v919 = vunpack.c.h.b16 %v202
  %v920 = vunpack.c.l.b16 %v203
  %v921 = vunpack.c.h.b16 %v203
  %v922 = vunpack.c.l.b16 %v204
  %v923 = vunpack.c.h.b16 %v204
  %v924 = vunpack.c.l.b16 %v205
  %v925 = vunpack.c.h.b16 %v205
  %v926 = vunpack.c.l.b16 %v206
  %v927 = vunpack.c.h.b16 %v206
  %v928 = vunpack.c.l.b16 %v207
  %v929 = vunpack.c.h.b16 %v207
  %v930 = vunpack.c.l.b16 %v208
  %v931 = vunpack.c.h.b16 %v208
  %v932 = vunpack.c.l.b16 %v209
  %v933 = vunpack.c.h.b16 %v209
  %v934 = vunpack.c.l.b16 %v210
  %v935 = vunpack.c.h.b16 %v210
  %v936 = vunpack.c.l.b16 %v211
  %v937 = vunpack.c.h.b16 %v211
  %v938 = vunpack.c.l.b16 %v212
  %v939 = vunpack.c.h.b16 %v212
  %v940 = vunpack.c.l.b16 %v213
  %v941 = vunpack.c.h.b16 %v213
  %v942 = vunpack.c.l.b16 %v214
  %v943 = vunpack.c.h.b16 %v214
  %v944 = vunpack.c.l.b16 %v215
  %v945 = vunpack.c.h.b16 %v215
  %v946 = vunpack.c.l.b16 %v216
  %v947 = vunpack.c.h.b16 %v216
  %v948 = vunpack.c.l.b16 %v217
  %v949 = vunpack.c.h.b16 %v217
  %v950 = vunpack.c.l.b16 %v218
  %v951 = vunpack.c.h.b16 %v218
  %v952 = vunpack.c.l.b16 %v219
  %v953 = vunpack.c.h.b16 %v219
  %v954 = vunpack.c.l.b16 %v220
  %v955 = vunpack.c.h.b16 %v220
  %v956 = vunpack.c.l.b16 %v221
  %v957 = vunpack.c.h.b16 %v221
  %v958 = vunpack.c.l.b16 %v222
  %v959 = vunpack.c.h.b16 %v222
  %v960 = vunpack.c.l.b16 %v223
  %v961 = vunpack.c.h.b16 %v223
  %v962 = vunpack.c.l.b16 %v224
  %v963 = vunpack.c.h.b16 %v224
  %v964 = vunpack.c.l.b16 %v225
  %v965 = vunpack.c.h.b16 %v225
  %v966 = vpack.c.b16 %v680, %v678
  %v967 = vpack.c.b16 %v681, %v679
  %v968 = vpack.c.b16 %v684, %v682
  %v969 = vpack.c.b16 %v685, %v683
  %v970 = vpack.c.b16 %v688, %v686
  %v971 = vpack.c.b16 %v689, %v687
  %v972 = vpack.c.b16 %v692, %v690
  %v973 = vpack.c.b16 %v693, %v691
  %v974 = vpack.c.b16 %v696, %v694
  %v975 = vpack.c.b16 %v697, %v695
  %v976 = vpack.c.b16 %v700, %v698
  %v977 = vpack.c.b16 %v701, %v699
  %v978 = vpack.c.b16 %v704, %v702
  %v979 = vpack.c.b16 %v705, %v703
  %v980 = vpack.c.b16 %v708, %v706
  %v981 = vpack.c.b16 %v709, %v707
  %v982 = vpack.c.b16 %v712, %v710
  %v983 = vpack.c.b16 %v713, %v711
  %v984 = vpack.c.b16 %v716, %v714
  %v985 = vpack.c.b16 %v717, %v715
  %v986 = vpack.c.b16 %v720, %v718
  %v987 = vpack.c.b16 %v721, %v719
  %v988 = vpack.c.b16 %v724, %v722
  %v989 = vpack.c.b16 %v725, %v723
  %v990 = vpack.c.b16 %v728, %v726
  %v991 = vpack.c.b16 %v729, %v727
  %v992 = vpack.c.b16 %v732, %v730
  %v993 = vpack.c.b16 %v733, %v731
  %v994 = vpack.c.b16 %v736, %v734
  %v995 = vpack.c.b16 %v737, %v735
  %v996 = vpack.c.b16 %v740, %v738
  %v997 = vpack.c.b16 %v741, %v739
  %v998 = vpack.c.b16 %v744, %v742
  %v999 = vpack.c.b16 %v745, %v743
  %v1000 = vpack.c.b16 %v748, %v746
  %v1001 = vpack.c.b16 %v749, %v747
  %v1002 = vpack.c.b16 %v752, %v750
  %v1003 = vpack.c.b16 %v753, %v751
  %v1004 = vpack.c.b16 %v756, %v754
  %v1005 = vpack.c.b16 %v757, %v755
  %v1006 = vpack.c.b16 %v760, %v758
  %v1007 = vpack.c.b16 %v761, %v759
  %v1008 = vpack.c.b16 %v764, %v762
  %v1009 = vpack.c.b16 %v765, %v763
  %v1010 = vpack.c.b16 %v768, %v766
  %v1011 = vpack.c.b16 %v769, %v767
  %v1012 = vpack.c.b16 %v772, %v770
  %v1013 = vpack.c.b16 %v773, %v771
  %v1014 = vpack.c.b16 %v776, %v774
  %v1015 = vpack.c.b16 %v777, %v775
  %v1016 = vpack.c.b16 %v780, %v778
  %v1017 = vpack.c.b16 %v781, %v779
  %v1018 = vpack.c.b16 %v784, %v782
  %v1019 = vpack.c.b16 %v785, %v783
  %v1020 = vpack.c.b16 %v788, %v786
  %v1021 = vpack.c.b16 %v789, %v787
  %v1022 = vpack.c.b16 %v792, %v790
  %v1023 = vpack.c.b16 %v793, %v791
  %v1024 = vpack.c.b16 %v796, %v794
  %v1025 = vpack.c.b16 %v797, %v795
  %v1026 = vpack.c.b16 %v800, %v798
  %v1027 = vpack.c.b16 %v801, %v799
  %v1028 = vpack.c.b16 %v804, %v802
  %v1029 = vpack.c.b16 %v805, %v803
  %v1030 = vpack.c.b16 %v808, %v806
  %v1031 = vpack.c.b16 %v809, %v807
  %v1032 = vpack.c.b16 %v812, %v810
  %v1033 = vpack.c.b16 %v813, %v811
  %v1034 = vpack.c.b16 %v816, %v814
  %v1035 = vpack.c.b16 %v817, %v815
  %v1036 = vpack.c.b16 %v820, %v818
  %v1037 = vpack.c.b16 %v821, %v819
  %v1038 = vpack.c.b16 %v824, %v822
  %v1039 = vpack.c.b16 %v825, %v823
  %v1040 = vpack.c.b16 %v828, %v826
  %v1041 = vpack.c.b16 %v829, %v827
  %v1042 = vpack.c.b16 %v832, %v830
  %v1043 = vpack.c.b16 %v833, %v831
  %v1044 = vpack.c.b16 %v836, %v834
  %v1045 = vpack.c.b16 %v837, %v835
  %v1046 = vpack.c.b16 %v840, %v838
  %v1047 = vpack.c.b16 %v841, %v839
  %v1048 = vpack.c.b16 %v844, %v842
  %v1049 = vpack.c.b16 %v845, %v843
  %v1050 = vpack.c.b16 %v848, %v846
  %v1051 = vpack.c.b16 %v849, %v847
  %v1052 = vpack.c.b16 %v852, %v850
  %v1053 = vpack.c.b16 %v853, %v851
  %v1054 = vpack.c.b16 %v856, %v854
  %v1055 = vpack.c.b16 %v857, %v855
  %v1056 = vpack.c.b16 %v860, %v858
  %v1057 = vpack.c.b16 %v861, %v859
  %v1058 = vpack.c.b16 %v864, %v862
  %v1059 = vpack.c.b16 %v865, %v863
  %v1060 = vpack.c.b16 %v868, %v866
  %v1061 = vpack.c.b16 %v869, %v867
  %v1062 = vpack.c.b16 %v872, %v870
  %v1063 = vpack.c.b16 %v873, %v871
  %v1064 = vpack.c.b16 %v876, %v874
  %v1065 = vpack.c.b16 %v877, %v875
  %v1066 = vpack.c.b16 %v880, %v878
  %v1067 = vpack.c.b16 %v881, %v879
  %v1068 = vpack.c.b16 %v884, %v882
  %v1069 = vpack.c.b16 %v885, %v883
  %v1070 = vpack.c.b16 %v888, %v886
  %v1071 = vpack.c.b16 %v889, %v887
  %v1072 = vpack.c.b16 %v892, %v890
  %v1073 = vpack.c.b16 %v893, %v891
  %v1074 = vpack.c.b16 %v896, %v894
  %v1075 = vpack.c.b16 %v897, %v895
  %v1076 = vpack.c.b16 %v900, %v898
  %v1077 = vpack.c.b16 %v901, %v899
  %v1078 = vpack.c.b16 %v904, %v902
  %v1079 = vpack.c.b16 %v905, %v903
  %v1080 = vpack.c.b16 %v908, %v906
  %v1081 = vpack.c.b16 %v909, %v907
  %v1082 = vpack.c.b16 %v912, %v910
  %v1083 = vpack.c.b16 %v913, %v911
  %v1084 = vpack.c.b16 %v916, %v914
  %v1085 = vpack.c.b16 %v917, %v915
  %v1086 = vpack.c.b16 %v920, %v918
  %v1087 = vpack.c.b16 %v921, %v919
  %v1088 = vpack.c.b16 %v924, %v922
  %v1089 = vpack.c.b16 %v925, %v923
  %v1090 = vpack.c.b16 %v928, %v926
  %v1091 = vpack.c.b16 %v929, %v927
  %v1092 = vpack.c.b16 %v932, %v930
  %v1093 = vpack.c.b16 %v933, %v931
  %v1094 = vpack.c.b16 %v936, %v934
  %v1095 = vpack.c.b16 %v937, %v935
  %v1096 = vpack.c.b16 %v940, %v938
  %v1097 = vpack.c.b16 %v941, %v939
  %v1098 = vpack.c.b16 %v944, %v942
  %v1099 = vpack.c.b16 %v945, %v943
  %v1100 = vpack.c.b16 %v948, %v946
  %v1101 = vpack.c.b16 %v949, %v947
  %v1102 = vpack.c.b16 %v952, %v950
  %v1103 = vpack.c.b16 %v953, %v951
  %v1104 = vpack.c.b16 %v956, %v954
  %v1105 = vpack.c.b16 %v957, %v955
  %v1106 = vpack.c.b16 %v960, %v958
  %v1107 = vpack.c.b16 %v961, %v959
  %v1108 = vpack.c.b16 %v964, %v962
  %v1109 = vpack.c.b16 %v965, %v963
  %1254 = vmatpush.bf16.msra.mxu0 %v980
  %1255 = vmatpush.bf16.msra.mxu0 %v978
  %1256 = vmatpush.bf16.msra.mxu0 %v976
  %1257 = vmatpush.bf16.msra.mxu0 %v974
  %1258 = vmatpush.bf16.msra.mxu0 %v972
  %1259 = vmatpush.bf16.msra.mxu0 %v970
  %1260 = vmatpush.bf16.msra.mxu0 %v968
  %1261 = vmatpush.bf16.msra.mxu0 %v966
  %1262 = vmatmul.bf16.gmra.mxu0 %v408
  %v1263 = vpop.f32.mrf.mxu0
  %v1264 = vadd.f32 0.0, %v1263
  %v1265 = vpop.f32.mrf.mxu0
  %v1266 = vadd.f32 0.0, %v1265
  %1267 = vmatmul.bf16.gmra.mxu0 %v417
  %v1268 = vpop.f32.mrf.mxu0
  %v1269 = vadd.f32 0.0, %v1268
  %v1270 = vpop.f32.mrf.mxu0
  %v1271 = vadd.f32 0.0, %v1270
  %1272 = vmatmul.bf16.gmra.mxu0 %v426
  %v1273 = vpop.f32.mrf.mxu0
  %v1274 = vadd.f32 0.0, %v1273
  %v1275 = vpop.f32.mrf.mxu0
  %v1276 = vadd.f32 0.0, %v1275
  %1277 = vmatmul.bf16.gmra.mxu0 %v435
  %v1278 = vpop.f32.mrf.mxu0
  %v1279 = vadd.f32 0.0, %v1278
  %v1280 = vpop.f32.mrf.mxu0
  %v1281 = vadd.f32 0.0, %v1280
  %1282 = vmatmul.bf16.gmra.mxu0 %v444
  %v1283 = vpop.f32.mrf.mxu0
  %v1284 = vadd.f32 0.0, %v1283
  %v1285 = vpop.f32.mrf.mxu0
  %v1286 = vadd.f32 0.0, %v1285
  %1287 = vmatmul.bf16.gmra.mxu0 %v453
  %v1288 = vpop.f32.mrf.mxu0
  %v1289 = vadd.f32 0.0, %v1288
  %v1290 = vpop.f32.mrf.mxu0
  %v1291 = vadd.f32 0.0, %v1290
  %1292 = vmatmul.bf16.gmra.mxu0 %v462
  %v1293 = vpop.f32.mrf.mxu0
  %v1294 = vadd.f32 0.0, %v1293
  %v1295 = vpop.f32.mrf.mxu0
  %1296 = vdwg.mxu0
  %1297 = vmatpush.bf16.msra.mxu0 %v996
  %1298 = vmatpush.bf16.msra.mxu0 %v994
  %1299 = vmatpush.bf16.msra.mxu0 %v992
  %1300 = vmatpush.bf16.msra.mxu0 %v990
  %1301 = vmatpush.bf16.msra.mxu0 %v988
  %1302 = vmatpush.bf16.msra.mxu0 %v986
  %1303 = vmatpush.bf16.msra.mxu0 %v984
  %1304 = vmatpush.bf16.msra.mxu0 %v982
  %1305 = vmatmul.bf16.gmra.mxu0 %v409
  %v1306 = vpop.f32.mrf.mxu0
  %v1307 = vadd.f32 %v1264, %v1306
  %v1308 = vpop.f32.mrf.mxu0
  %v1309 = vadd.f32 %v1266, %v1308
  %1310 = vmatmul.bf16.gmra.mxu0 %v418
  %v1311 = vpop.f32.mrf.mxu0
  %v1312 = vadd.f32 %v1269, %v1311
  %v1313 = vpop.f32.mrf.mxu0
  %v1314 = vadd.f32 %v1271, %v1313
  %1315 = vmatmul.bf16.gmra.mxu0 %v427
  %v1316 = vpop.f32.mrf.mxu0
  %v1317 = vadd.f32 %v1274, %v1316
  %v1318 = vpop.f32.mrf.mxu0
  %v1319 = vadd.f32 %v1276, %v1318
  %1320 = vmatmul.bf16.gmra.mxu0 %v436
  %v1321 = vpop.f32.mrf.mxu0
  %v1322 = vadd.f32 %v1279, %v1321
  %v1323 = vpop.f32.mrf.mxu0
  %v1324 = vadd.f32 %v1281, %v1323
  %1325 = vmatmul.bf16.gmra.mxu0 %v445
  %v1326 = vpop.f32.mrf.mxu0
  %v1327 = vadd.f32 %v1284, %v1326
  %v1328 = vpop.f32.mrf.mxu0
  %v1329 = vadd.f32 %v1286, %v1328
  %1330 = vmatmul.bf16.gmra.mxu0 %v454
  %v1331 = vpop.f32.mrf.mxu0
  %v1332 = vadd.f32 %v1289, %v1331
  %v1333 = vpop.f32.mrf.mxu0
  %v1334 = vadd.f32 %v1291, %v1333
  %1335 = vmatmul.bf16.gmra.mxu0 %v463
  %v1336 = vpop.f32.mrf.mxu0
  %v1337 = vadd.f32 %v1294, %v1336
  %v1338 = vpop.f32.mrf.mxu0
  %1339 = vdwg.mxu0
  %1340 = vmatpush.bf16.msra.mxu0 %v1012
  %1341 = vmatpush.bf16.msra.mxu0 %v1010
  %1342 = vmatpush.bf16.msra.mxu0 %v1008
  %1343 = vmatpush.bf16.msra.mxu0 %v1006
  %1344 = vmatpush.bf16.msra.mxu0 %v1004
  %1345 = vmatpush.bf16.msra.mxu0 %v1002
  %1346 = vmatpush.bf16.msra.mxu0 %v1000
  %1347 = vmatpush.bf16.msra.mxu0 %v998
  %1348 = vmatmul.bf16.gmra.mxu0 %v410
  %v1349 = vpop.f32.mrf.mxu0
  %v1350 = vadd.f32 %v1307, %v1349
  %v1351 = vpop.f32.mrf.mxu0
  %v1352 = vadd.f32 %v1309, %v1351
  %1353 = vmatmul.bf16.gmra.mxu0 %v419
  %v1354 = vpop.f32.mrf.mxu0
  %v1355 = vadd.f32 %v1312, %v1354
  %v1356 = vpop.f32.mrf.mxu0
  %v1357 = vadd.f32 %v1314, %v1356
  %1358 = vmatmul.bf16.gmra.mxu0 %v428
  %v1359 = vpop.f32.mrf.mxu0
  %v1360 = vadd.f32 %v1317, %v1359
  %v1361 = vpop.f32.mrf.mxu0
  %v1362 = vadd.f32 %v1319, %v1361
  %1363 = vmatmul.bf16.gmra.mxu0 %v437
  %v1364 = vpop.f32.mrf.mxu0
  %v1365 = vadd.f32 %v1322, %v1364
  %v1366 = vpop.f32.mrf.mxu0
  %v1367 = vadd.f32 %v1324, %v1366
  %1368 = vmatmul.bf16.gmra.mxu0 %v446
  %v1369 = vpop.f32.mrf.mxu0
  %v1370 = vadd.f32 %v1327, %v1369
  %v1371 = vpop.f32.mrf.mxu0
  %v1372 = vadd.f32 %v1329, %v1371
  %1373 = vmatmul.bf16.gmra.mxu0 %v455
  %v1374 = vpop.f32.mrf.mxu0
  %v1375 = vadd.f32 %v1332, %v1374
  %v1376 = vpop.f32.mrf.mxu0
  %v1377 = vadd.f32 %v1334, %v1376
  %1378 = vmatmul.bf16.gmra.mxu0 %v464
  %v1379 = vpop.f32.mrf.mxu0
  %v1380 = vadd.f32 %v1337, %v1379
  %v1381 = vpop.f32.mrf.mxu0
  %1382 = vdwg.mxu0
  %1383 = vmatpush.bf16.msra.mxu0 %v1028
  %1384 = vmatpush.bf16.msra.mxu0 %v1026
  %1385 = vmatpush.bf16.msra.mxu0 %v1024
  %1386 = vmatpush.bf16.msra.mxu0 %v1022
  %1387 = vmatpush.bf16.msra.mxu0 %v1020
  %1388 = vmatpush.bf16.msra.mxu0 %v1018
  %1389 = vmatpush.bf16.msra.mxu0 %v1016
  %1390 = vmatpush.bf16.msra.mxu0 %v1014
  %1391 = vmatmul.bf16.gmra.mxu0 %v411
  %v1392 = vpop.f32.mrf.mxu0
  %v1393 = vadd.f32 %v1350, %v1392
  %v1394 = vpop.f32.mrf.mxu0
  %v1395 = vadd.f32 %v1352, %v1394
  %1396 = vmatmul.bf16.gmra.mxu0 %v420
  %v1397 = vpop.f32.mrf.mxu0
  %v1398 = vadd.f32 %v1355, %v1397
  %v1399 = vpop.f32.mrf.mxu0
  %v1400 = vadd.f32 %v1357, %v1399
  %1401 = vmatmul.bf16.gmra.mxu0 %v429
  %v1402 = vpop.f32.mrf.mxu0
  %v1403 = vadd.f32 %v1360, %v1402
  %v1404 = vpop.f32.mrf.mxu0
  %v1405 = vadd.f32 %v1362, %v1404
  %1406 = vmatmul.bf16.gmra.mxu0 %v438
  %v1407 = vpop.f32.mrf.mxu0
  %v1408 = vadd.f32 %v1365, %v1407
  %v1409 = vpop.f32.mrf.mxu0
  %v1410 = vadd.f32 %v1367, %v1409
  %1411 = vmatmul.bf16.gmra.mxu0 %v447
  %v1412 = vpop.f32.mrf.mxu0
  %v1413 = vadd.f32 %v1370, %v1412
  %v1414 = vpop.f32.mrf.mxu0
  %v1415 = vadd.f32 %v1372, %v1414
  %1416 = vmatmul.bf16.gmra.mxu0 %v456
  %v1417 = vpop.f32.mrf.mxu0
  %v1418 = vadd.f32 %v1375, %v1417
  %v1419 = vpop.f32.mrf.mxu0
  %v1420 = vadd.f32 %v1377, %v1419
  %1421 = vmatmul.bf16.gmra.mxu0 %v465
  %v1422 = vpop.f32.mrf.mxu0
  %v1423 = vadd.f32 %v1380, %v1422
  %v1424 = vpop.f32.mrf.mxu0
  %1425 = vdwg.mxu0
  %1426 = vmatpush.bf16.msra.mxu0 %v1044
  %1427 = vmatpush.bf16.msra.mxu0 %v1042
  %1428 = vmatpush.bf16.msra.mxu0 %v1040
  %1429 = vmatpush.bf16.msra.mxu0 %v1038
  %1430 = vmatpush.bf16.msra.mxu0 %v1036
  %1431 = vmatpush.bf16.msra.mxu0 %v1034
  %1432 = vmatpush.bf16.msra.mxu0 %v1032
  %1433 = vmatpush.bf16.msra.mxu0 %v1030
  %1434 = vmatmul.bf16.gmra.mxu0 %v412
  %v1435 = vpop.f32.mrf.mxu0
  %v1436 = vadd.f32 %v1393, %v1435
  %v1437 = vpop.f32.mrf.mxu0
  %v1438 = vadd.f32 %v1395, %v1437
  %1439 = vmatmul.bf16.gmra.mxu0 %v421
  %v1440 = vpop.f32.mrf.mxu0
  %v1441 = vadd.f32 %v1398, %v1440
  %v1442 = vpop.f32.mrf.mxu0
  %v1443 = vadd.f32 %v1400, %v1442
  %1444 = vmatmul.bf16.gmra.mxu0 %v430
  %v1445 = vpop.f32.mrf.mxu0
  %v1446 = vadd.f32 %v1403, %v1445
  %v1447 = vpop.f32.mrf.mxu0
  %v1448 = vadd.f32 %v1405, %v1447
  %1449 = vmatmul.bf16.gmra.mxu0 %v439
  %v1450 = vpop.f32.mrf.mxu0
  %v1451 = vadd.f32 %v1408, %v1450
  %v1452 = vpop.f32.mrf.mxu0
  %v1453 = vadd.f32 %v1410, %v1452
  %1454 = vmatmul.bf16.gmra.mxu0 %v448
  %v1455 = vpop.f32.mrf.mxu0
  %v1456 = vadd.f32 %v1413, %v1455
  %v1457 = vpop.f32.mrf.mxu0
  %v1458 = vadd.f32 %v1415, %v1457
  %1459 = vmatmul.bf16.gmra.mxu0 %v457
  %v1460 = vpop.f32.mrf.mxu0
  %v1461 = vadd.f32 %v1418, %v1460
  %v1462 = vpop.f32.mrf.mxu0
  %v1463 = vadd.f32 %v1420, %v1462
  %1464 = vmatmul.bf16.gmra.mxu0 %v466
  %v1465 = vpop.f32.mrf.mxu0
  %v1466 = vadd.f32 %v1423, %v1465
  %v1467 = vpop.f32.mrf.mxu0
  %1468 = vdwg.mxu0
  %1469 = vmatpush.bf16.msra.mxu0 %v1060
  %1470 = vmatpush.bf16.msra.mxu0 %v1058
  %1471 = vmatpush.bf16.msra.mxu0 %v1056
  %1472 = vmatpush.bf16.msra.mxu0 %v1054
  %1473 = vmatpush.bf16.msra.mxu0 %v1052
  %1474 = vmatpush.bf16.msra.mxu0 %v1050
  %1475 = vmatpush.bf16.msra.mxu0 %v1048
  %1476 = vmatpush.bf16.msra.mxu0 %v1046
  %1477 = vmatmul.bf16.gmra.mxu0 %v413
  %v1478 = vpop.f32.mrf.mxu0
  %v1479 = vadd.f32 %v1436, %v1478
  %v1480 = vpop.f32.mrf.mxu0
  %v1481 = vadd.f32 %v1438, %v1480
  %1482 = vmatmul.bf16.gmra.mxu0 %v422
  %v1483 = vpop.f32.mrf.mxu0
  %v1484 = vadd.f32 %v1441, %v1483
  %v1485 = vpop.f32.mrf.mxu0
  %v1486 = vadd.f32 %v1443, %v1485
  %1487 = vmatmul.bf16.gmra.mxu0 %v431
  %v1488 = vpop.f32.mrf.mxu0
  %v1489 = vadd.f32 %v1446, %v1488
  %v1490 = vpop.f32.mrf.mxu0
  %v1491 = vadd.f32 %v1448, %v1490
  %1492 = vmatmul.bf16.gmra.mxu0 %v440
  %v1493 = vpop.f32.mrf.mxu0
  %v1494 = vadd.f32 %v1451, %v1493
  %v1495 = vpop.f32.mrf.mxu0
  %v1496 = vadd.f32 %v1453, %v1495
  %1497 = vmatmul.bf16.gmra.mxu0 %v449
  %v1498 = vpop.f32.mrf.mxu0
  %v1499 = vadd.f32 %v1456, %v1498
  %v1500 = vpop.f32.mrf.mxu0
  %v1501 = vadd.f32 %v1458, %v1500
  %1502 = vmatmul.bf16.gmra.mxu0 %v458
  %v1503 = vpop.f32.mrf.mxu0
  %v1504 = vadd.f32 %v1461, %v1503
  %v1505 = vpop.f32.mrf.mxu0
  %v1506 = vadd.f32 %v1463, %v1505
  %1507 = vmatmul.bf16.gmra.mxu0 %v467
  %v1508 = vpop.f32.mrf.mxu0
  %v1509 = vadd.f32 %v1466, %v1508
  %v1510 = vpop.f32.mrf.mxu0
  %1511 = vdwg.mxu0
  %1512 = vmatpush.bf16.msra.mxu0 %v1076
  %1513 = vmatpush.bf16.msra.mxu0 %v1074
  %1514 = vmatpush.bf16.msra.mxu0 %v1072
  %1515 = vmatpush.bf16.msra.mxu0 %v1070
  %1516 = vmatpush.bf16.msra.mxu0 %v1068
  %1517 = vmatpush.bf16.msra.mxu0 %v1066
  %1518 = vmatpush.bf16.msra.mxu0 %v1064
  %1519 = vmatpush.bf16.msra.mxu0 %v1062
  %1520 = vmatmul.bf16.gmra.mxu0 %v414
  %v1521 = vpop.f32.mrf.mxu0
  %v1522 = vadd.f32 %v1479, %v1521
  %v1523 = vpop.f32.mrf.mxu0
  %v1524 = vadd.f32 %v1481, %v1523
  %1525 = vmatmul.bf16.gmra.mxu0 %v423
  %v1526 = vpop.f32.mrf.mxu0
  %v1527 = vadd.f32 %v1484, %v1526
  %v1528 = vpop.f32.mrf.mxu0
  %v1529 = vadd.f32 %v1486, %v1528
  %1530 = vmatmul.bf16.gmra.mxu0 %v432
  %v1531 = vpop.f32.mrf.mxu0
  %v1532 = vadd.f32 %v1489, %v1531
  %v1533 = vpop.f32.mrf.mxu0
  %v1534 = vadd.f32 %v1491, %v1533
  %1535 = vmatmul.bf16.gmra.mxu0 %v441
  %v1536 = vpop.f32.mrf.mxu0
  %v1537 = vadd.f32 %v1494, %v1536
  %v1538 = vpop.f32.mrf.mxu0
  %v1539 = vadd.f32 %v1496, %v1538
  %1540 = vmatmul.bf16.gmra.mxu0 %v450
  %v1541 = vpop.f32.mrf.mxu0
  %v1542 = vadd.f32 %v1499, %v1541
  %v1543 = vpop.f32.mrf.mxu0
  %v1544 = vadd.f32 %v1501, %v1543
  %1545 = vmatmul.bf16.gmra.mxu0 %v459
  %v1546 = vpop.f32.mrf.mxu0
  %v1547 = vadd.f32 %v1504, %v1546
  %v1548 = vpop.f32.mrf.mxu0
  %v1549 = vadd.f32 %v1506, %v1548
  %1550 = vmatmul.bf16.gmra.mxu0 %v468
  %v1551 = vpop.f32.mrf.mxu0
  %v1552 = vadd.f32 %v1509, %v1551
  %v1553 = vpop.f32.mrf.mxu0
  %1554 = vdwg.mxu0
  %1555 = vmatpush.bf16.msra.mxu0 %v1092
  %1556 = vmatpush.bf16.msra.mxu0 %v1090
  %1557 = vmatpush.bf16.msra.mxu0 %v1088
  %1558 = vmatpush.bf16.msra.mxu0 %v1086
  %1559 = vmatpush.bf16.msra.mxu0 %v1084
  %1560 = vmatpush.bf16.msra.mxu0 %v1082
  %1561 = vmatpush.bf16.msra.mxu0 %v1080
  %1562 = vmatpush.bf16.msra.mxu0 %v1078
  %1563 = vmatmul.bf16.gmra.mxu0 %v415
  %v1564 = vpop.f32.mrf.mxu0
  %v1565 = vadd.f32 %v1522, %v1564
  %v1566 = vpop.f32.mrf.mxu0
  %v1567 = vadd.f32 %v1524, %v1566
  %1568 = vmatmul.bf16.gmra.mxu0 %v424
  %v1569 = vpop.f32.mrf.mxu0
  %v1570 = vadd.f32 %v1527, %v1569
  %v1571 = vpop.f32.mrf.mxu0
  %v1572 = vadd.f32 %v1529, %v1571
  %1573 = vmatmul.bf16.gmra.mxu0 %v433
  %v1574 = vpop.f32.mrf.mxu0
  %v1575 = vadd.f32 %v1532, %v1574
  %v1576 = vpop.f32.mrf.mxu0
  %v1577 = vadd.f32 %v1534, %v1576
  %1578 = vmatmul.bf16.gmra.mxu0 %v442
  %v1579 = vpop.f32.mrf.mxu0
  %v1580 = vadd.f32 %v1537, %v1579
  %v1581 = vpop.f32.mrf.mxu0
  %v1582 = vadd.f32 %v1539, %v1581
  %1583 = vmatmul.bf16.gmra.mxu0 %v451
  %v1584 = vpop.f32.mrf.mxu0
  %v1585 = vadd.f32 %v1542, %v1584
  %v1586 = vpop.f32.mrf.mxu0
  %v1587 = vadd.f32 %v1544, %v1586
  %1588 = vmatmul.bf16.gmra.mxu0 %v460
  %v1589 = vpop.f32.mrf.mxu0
  %v1590 = vadd.f32 %v1547, %v1589
  %v1591 = vpop.f32.mrf.mxu0
  %v1592 = vadd.f32 %v1549, %v1591
  %1593 = vmatmul.bf16.gmra.mxu0 %v469
  %v1594 = vpop.f32.mrf.mxu0
  %v1595 = vadd.f32 %v1552, %v1594
  %v1596 = vpop.f32.mrf.mxu0
  %1597 = vdwg.mxu0
  %1598 = vmatpush.bf16.msra.mxu0 %v1108
  %1599 = vmatpush.bf16.msra.mxu0 %v1106
  %1600 = vmatpush.bf16.msra.mxu0 %v1104
  %1601 = vmatpush.bf16.msra.mxu0 %v1102
  %1602 = vmatpush.bf16.msra.mxu0 %v1100
  %1603 = vmatpush.bf16.msra.mxu0 %v1098
  %1604 = vmatpush.bf16.msra.mxu0 %v1096
  %1605 = vmatpush.bf16.msra.mxu0 %v1094
  %1606 = vmatmul.bf16.gmra.mxu0 %v416
  %v1607 = vpop.f32.mrf.mxu0
  %v1608 = vadd.f32 %v1565, %v1607
  %v1609 = vpop.f32.mrf.mxu0
  %v1610 = vadd.f32 %v1567, %v1609
  %1611 = vmatmul.bf16.gmra.mxu0 %v425
  %v1612 = vpop.f32.mrf.mxu0
  %v1613 = vadd.f32 %v1570, %v1612
  %v1614 = vpop.f32.mrf.mxu0
  %v1615 = vadd.f32 %v1572, %v1614
  %1616 = vmatmul.bf16.gmra.mxu0 %v434
  %v1617 = vpop.f32.mrf.mxu0
  %v1618 = vadd.f32 %v1575, %v1617
  %v1619 = vpop.f32.mrf.mxu0
  %v1620 = vadd.f32 %v1577, %v1619
  %1621 = vmatmul.bf16.gmra.mxu0 %v443
  %v1622 = vpop.f32.mrf.mxu0
  %v1623 = vadd.f32 %v1580, %v1622
  %v1624 = vpop.f32.mrf.mxu0
  %v1625 = vadd.f32 %v1582, %v1624
  %1626 = vmatmul.bf16.gmra.mxu0 %v452
  %v1627 = vpop.f32.mrf.mxu0
  %v1628 = vadd.f32 %v1585, %v1627
  %v1629 = vpop.f32.mrf.mxu0
  %v1630 = vadd.f32 %v1587, %v1629
  %1631 = vmatmul.bf16.gmra.mxu0 %v461
  %v1632 = vpop.f32.mrf.mxu0
  %v1633 = vadd.f32 %v1590, %v1632
  %v1634 = vpop.f32.mrf.mxu0
  %v1635 = vadd.f32 %v1592, %v1634
  %1636 = vmatmul.bf16.gmra.mxu0 %v470
  %v1637 = vpop.f32.mrf.mxu0
  %v1638 = vadd.f32 %v1595, %v1637
  %v1639 = vpop.f32.mrf.mxu0
  %1640 = vdwg.mxu0
  %1641 = vmatpush.bf16.msra.mxu0 %v981
  %1642 = vmatpush.bf16.msra.mxu0 %v979
  %1643 = vmatpush.bf16.msra.mxu0 %v977
  %1644 = vmatpush.bf16.msra.mxu0 %v975
  %1645 = vmatpush.bf16.msra.mxu0 %v973
  %1646 = vmatpush.bf16.msra.mxu0 %v971
  %1647 = vmatpush.bf16.msra.mxu0 %v969
  %1648 = vmatpush.bf16.msra.mxu0 %v967
  %1649 = vmatmul.bf16.gmra.mxu0 %v408
  %v1650 = vpop.f32.mrf.mxu0
  %v1651 = vadd.f32 0.0, %v1650
  %v1652 = vpop.f32.mrf.mxu0
  %v1653 = vadd.f32 0.0, %v1652
  %1654 = vmatmul.bf16.gmra.mxu0 %v417
  %v1655 = vpop.f32.mrf.mxu0
  %v1656 = vadd.f32 0.0, %v1655
  %v1657 = vpop.f32.mrf.mxu0
  %v1658 = vadd.f32 0.0, %v1657
  %1659 = vmatmul.bf16.gmra.mxu0 %v426
  %v1660 = vpop.f32.mrf.mxu0
  %v1661 = vadd.f32 0.0, %v1660
  %v1662 = vpop.f32.mrf.mxu0
  %v1663 = vadd.f32 0.0, %v1662
  %1664 = vmatmul.bf16.gmra.mxu0 %v435
  %v1665 = vpop.f32.mrf.mxu0
  %v1666 = vadd.f32 0.0, %v1665
  %v1667 = vpop.f32.mrf.mxu0
  %v1668 = vadd.f32 0.0, %v1667
  %1669 = vmatmul.bf16.gmra.mxu0 %v444
  %v1670 = vpop.f32.mrf.mxu0
  %v1671 = vadd.f32 0.0, %v1670
  %v1672 = vpop.f32.mrf.mxu0
  %v1673 = vadd.f32 0.0, %v1672
  %1674 = vmatmul.bf16.gmra.mxu0 %v453
  %v1675 = vpop.f32.mrf.mxu0
  %v1676 = vadd.f32 0.0, %v1675
  %v1677 = vpop.f32.mrf.mxu0
  %v1678 = vadd.f32 0.0, %v1677
  %1679 = vmatmul.bf16.gmra.mxu0 %v462
  %v1680 = vpop.f32.mrf.mxu0
  %v1681 = vadd.f32 0.0, %v1680
  %v1682 = vpop.f32.mrf.mxu0
  %1683 = vdwg.mxu0
  %1684 = vmatpush.bf16.msra.mxu0 %v997
  %1685 = vmatpush.bf16.msra.mxu0 %v995
  %1686 = vmatpush.bf16.msra.mxu0 %v993
  %1687 = vmatpush.bf16.msra.mxu0 %v991
  %1688 = vmatpush.bf16.msra.mxu0 %v989
  %1689 = vmatpush.bf16.msra.mxu0 %v987
  %1690 = vmatpush.bf16.msra.mxu0 %v985
  %1691 = vmatpush.bf16.msra.mxu0 %v983
  %1692 = vmatmul.bf16.gmra.mxu0 %v409
  %v1693 = vpop.f32.mrf.mxu0
  %v1694 = vadd.f32 %v1651, %v1693
  %v1695 = vpop.f32.mrf.mxu0
  %v1696 = vadd.f32 %v1653, %v1695
  %1697 = vmatmul.bf16.gmra.mxu0 %v418
  %v1698 = vpop.f32.mrf.mxu0
  %v1699 = vadd.f32 %v1656, %v1698
  %v1700 = vpop.f32.mrf.mxu0
  %v1701 = vadd.f32 %v1658, %v1700
  %1702 = vmatmul.bf16.gmra.mxu0 %v427
  %v1703 = vpop.f32.mrf.mxu0
  %v1704 = vadd.f32 %v1661, %v1703
  %v1705 = vpop.f32.mrf.mxu0
  %v1706 = vadd.f32 %v1663, %v1705
  %1707 = vmatmul.bf16.gmra.mxu0 %v436
  %v1708 = vpop.f32.mrf.mxu0
  %v1709 = vadd.f32 %v1666, %v1708
  %v1710 = vpop.f32.mrf.mxu0
  %v1711 = vadd.f32 %v1668, %v1710
  %1712 = vmatmul.bf16.gmra.mxu0 %v445
  %v1713 = vpop.f32.mrf.mxu0
  %v1714 = vadd.f32 %v1671, %v1713
  %v1715 = vpop.f32.mrf.mxu0
  %v1716 = vadd.f32 %v1673, %v1715
  %1717 = vmatmul.bf16.gmra.mxu0 %v454
  %v1718 = vpop.f32.mrf.mxu0
  %v1719 = vadd.f32 %v1676, %v1718
  %v1720 = vpop.f32.mrf.mxu0
  %v1721 = vadd.f32 %v1678, %v1720
  %1722 = vmatmul.bf16.gmra.mxu0 %v463
  %v1723 = vpop.f32.mrf.mxu0
  %v1724 = vadd.f32 %v1681, %v1723
  %v1725 = vpop.f32.mrf.mxu0
  %1726 = vdwg.mxu0
  %1727 = vmatpush.bf16.msra.mxu0 %v1013
  %1728 = vmatpush.bf16.msra.mxu0 %v1011
  %1729 = vmatpush.bf16.msra.mxu0 %v1009
  %1730 = vmatpush.bf16.msra.mxu0 %v1007
  %1731 = vmatpush.bf16.msra.mxu0 %v1005
  %1732 = vmatpush.bf16.msra.mxu0 %v1003
  %1733 = vmatpush.bf16.msra.mxu0 %v1001
  %1734 = vmatpush.bf16.msra.mxu0 %v999
  %1735 = vmatmul.bf16.gmra.mxu0 %v410
  %v1736 = vpop.f32.mrf.mxu0
  %v1737 = vadd.f32 %v1694, %v1736
  %v1738 = vpop.f32.mrf.mxu0
  %v1739 = vadd.f32 %v1696, %v1738
  %1740 = vmatmul.bf16.gmra.mxu0 %v419
  %v1741 = vpop.f32.mrf.mxu0
  %v1742 = vadd.f32 %v1699, %v1741
  %v1743 = vpop.f32.mrf.mxu0
  %v1744 = vadd.f32 %v1701, %v1743
  %1745 = vmatmul.bf16.gmra.mxu0 %v428
  %v1746 = vpop.f32.mrf.mxu0
  %v1747 = vadd.f32 %v1704, %v1746
  %v1748 = vpop.f32.mrf.mxu0
  %v1749 = vadd.f32 %v1706, %v1748
  %1750 = vmatmul.bf16.gmra.mxu0 %v437
  %v1751 = vpop.f32.mrf.mxu0
  %v1752 = vadd.f32 %v1709, %v1751
  %v1753 = vpop.f32.mrf.mxu0
  %v1754 = vadd.f32 %v1711, %v1753
  %1755 = vmatmul.bf16.gmra.mxu0 %v446
  %v1756 = vpop.f32.mrf.mxu0
  %v1757 = vadd.f32 %v1714, %v1756
  %v1758 = vpop.f32.mrf.mxu0
  %v1759 = vadd.f32 %v1716, %v1758
  %1760 = vmatmul.bf16.gmra.mxu0 %v455
  %v1761 = vpop.f32.mrf.mxu0
  %v1762 = vadd.f32 %v1719, %v1761
  %v1763 = vpop.f32.mrf.mxu0
  %v1764 = vadd.f32 %v1721, %v1763
  %1765 = vmatmul.bf16.gmra.mxu0 %v464
  %v1766 = vpop.f32.mrf.mxu0
  %v1767 = vadd.f32 %v1724, %v1766
  %v1768 = vpop.f32.mrf.mxu0
  %1769 = vdwg.mxu0
  %1770 = vmatpush.bf16.msra.mxu0 %v1029
  %1771 = vmatpush.bf16.msra.mxu0 %v1027
  %1772 = vmatpush.bf16.msra.mxu0 %v1025
  %1773 = vmatpush.bf16.msra.mxu0 %v1023
  %1774 = vmatpush.bf16.msra.mxu0 %v1021
  %1775 = vmatpush.bf16.msra.mxu0 %v1019
  %1776 = vmatpush.bf16.msra.mxu0 %v1017
  %1777 = vmatpush.bf16.msra.mxu0 %v1015
  %1778 = vmatmul.bf16.gmra.mxu0 %v411
  %v1779 = vpop.f32.mrf.mxu0
  %v1780 = vadd.f32 %v1737, %v1779
  %v1781 = vpop.f32.mrf.mxu0
  %v1782 = vadd.f32 %v1739, %v1781
  %1783 = vmatmul.bf16.gmra.mxu0 %v420
  %v1784 = vpop.f32.mrf.mxu0
  %v1785 = vadd.f32 %v1742, %v1784
  %v1786 = vpop.f32.mrf.mxu0
  %v1787 = vadd.f32 %v1744, %v1786
  %1788 = vmatmul.bf16.gmra.mxu0 %v429
  %v1789 = vpop.f32.mrf.mxu0
  %v1790 = vadd.f32 %v1747, %v1789
  %v1791 = vpop.f32.mrf.mxu0
  %v1792 = vadd.f32 %v1749, %v1791
  %1793 = vmatmul.bf16.gmra.mxu0 %v438
  %v1794 = vpop.f32.mrf.mxu0
  %v1795 = vadd.f32 %v1752, %v1794
  %v1796 = vpop.f32.mrf.mxu0
  %v1797 = vadd.f32 %v1754, %v1796
  %1798 = vmatmul.bf16.gmra.mxu0 %v447
  %v1799 = vpop.f32.mrf.mxu0
  %v1800 = vadd.f32 %v1757, %v1799
  %v1801 = vpop.f32.mrf.mxu0
  %v1802 = vadd.f32 %v1759, %v1801
  %1803 = vmatmul.bf16.gmra.mxu0 %v456
  %v1804 = vpop.f32.mrf.mxu0
  %v1805 = vadd.f32 %v1762, %v1804
  %v1806 = vpop.f32.mrf.mxu0
  %v1807 = vadd.f32 %v1764, %v1806
  %1808 = vmatmul.bf16.gmra.mxu0 %v465
  %v1809 = vpop.f32.mrf.mxu0
  %v1810 = vadd.f32 %v1767, %v1809
  %v1811 = vpop.f32.mrf.mxu0
  %1812 = vdwg.mxu0
  %1813 = vmatpush.bf16.msra.mxu0 %v1045
  %1814 = vmatpush.bf16.msra.mxu0 %v1043
  %1815 = vmatpush.bf16.msra.mxu0 %v1041
  %1816 = vmatpush.bf16.msra.mxu0 %v1039
  %1817 = vmatpush.bf16.msra.mxu0 %v1037
  %1818 = vmatpush.bf16.msra.mxu0 %v1035
  %1819 = vmatpush.bf16.msra.mxu0 %v1033
  %1820 = vmatpush.bf16.msra.mxu0 %v1031
  %1821 = vmatmul.bf16.gmra.mxu0 %v412
  %v1822 = vpop.f32.mrf.mxu0
  %v1823 = vadd.f32 %v1780, %v1822
  %v1824 = vpop.f32.mrf.mxu0
  %v1825 = vadd.f32 %v1782, %v1824
  %1826 = vmatmul.bf16.gmra.mxu0 %v421
  %v1827 = vpop.f32.mrf.mxu0
  %v1828 = vadd.f32 %v1785, %v1827
  %v1829 = vpop.f32.mrf.mxu0
  %v1830 = vadd.f32 %v1787, %v1829
  %1831 = vmatmul.bf16.gmra.mxu0 %v430
  %v1832 = vpop.f32.mrf.mxu0
  %v1833 = vadd.f32 %v1790, %v1832
  %v1834 = vpop.f32.mrf.mxu0
  %v1835 = vadd.f32 %v1792, %v1834
  %1836 = vmatmul.bf16.gmra.mxu0 %v439
  %v1837 = vpop.f32.mrf.mxu0
  %v1838 = vadd.f32 %v1795, %v1837
  %v1839 = vpop.f32.mrf.mxu0
  %v1840 = vadd.f32 %v1797, %v1839
  %1841 = vmatmul.bf16.gmra.mxu0 %v448
  %v1842 = vpop.f32.mrf.mxu0
  %v1843 = vadd.f32 %v1800, %v1842
  %v1844 = vpop.f32.mrf.mxu0
  %v1845 = vadd.f32 %v1802, %v1844
  %1846 = vmatmul.bf16.gmra.mxu0 %v457
  %v1847 = vpop.f32.mrf.mxu0
  %v1848 = vadd.f32 %v1805, %v1847
  %v1849 = vpop.f32.mrf.mxu0
  %v1850 = vadd.f32 %v1807, %v1849
  %1851 = vmatmul.bf16.gmra.mxu0 %v466
  %v1852 = vpop.f32.mrf.mxu0
  %v1853 = vadd.f32 %v1810, %v1852
  %v1854 = vpop.f32.mrf.mxu0
  %1855 = vdwg.mxu0
  %1856 = vmatpush.bf16.msra.mxu0 %v1061
  %1857 = vmatpush.bf16.msra.mxu0 %v1059
  %1858 = vmatpush.bf16.msra.mxu0 %v1057
  %1859 = vmatpush.bf16.msra.mxu0 %v1055
  %1860 = vmatpush.bf16.msra.mxu0 %v1053
  %1861 = vmatpush.bf16.msra.mxu0 %v1051
  %1862 = vmatpush.bf16.msra.mxu0 %v1049
  %1863 = vmatpush.bf16.msra.mxu0 %v1047
  %1864 = vmatmul.bf16.gmra.mxu0 %v413
  %v1865 = vpop.f32.mrf.mxu0
  %v1866 = vadd.f32 %v1823, %v1865
  %v1867 = vpop.f32.mrf.mxu0
  %v1868 = vadd.f32 %v1825, %v1867
  %1869 = vmatmul.bf16.gmra.mxu0 %v422
  %v1870 = vpop.f32.mrf.mxu0
  %v1871 = vadd.f32 %v1828, %v1870
  %v1872 = vpop.f32.mrf.mxu0
  %v1873 = vadd.f32 %v1830, %v1872
  %1874 = vmatmul.bf16.gmra.mxu0 %v431
  %v1875 = vpop.f32.mrf.mxu0
  %v1876 = vadd.f32 %v1833, %v1875
  %v1877 = vpop.f32.mrf.mxu0
  %v1878 = vadd.f32 %v1835, %v1877
  %1879 = vmatmul.bf16.gmra.mxu0 %v440
  %v1880 = vpop.f32.mrf.mxu0
  %v1881 = vadd.f32 %v1838, %v1880
  %v1882 = vpop.f32.mrf.mxu0
  %v1883 = vadd.f32 %v1840, %v1882
  %1884 = vmatmul.bf16.gmra.mxu0 %v449
  %v1885 = vpop.f32.mrf.mxu0
  %v1886 = vadd.f32 %v1843, %v1885
  %v1887 = vpop.f32.mrf.mxu0
  %v1888 = vadd.f32 %v1845, %v1887
  %1889 = vmatmul.bf16.gmra.mxu0 %v458
  %v1890 = vpop.f32.mrf.mxu0
  %v1891 = vadd.f32 %v1848, %v1890
  %v1892 = vpop.f32.mrf.mxu0
  %v1893 = vadd.f32 %v1850, %v1892
  %1894 = vmatmul.bf16.gmra.mxu0 %v467
  %v1895 = vpop.f32.mrf.mxu0
  %v1896 = vadd.f32 %v1853, %v1895
  %v1897 = vpop.f32.mrf.mxu0
  %1898 = vdwg.mxu0
  %1899 = vmatpush.bf16.msra.mxu0 %v1077
  %1900 = vmatpush.bf16.msra.mxu0 %v1075
  %1901 = vmatpush.bf16.msra.mxu0 %v1073
  %1902 = vmatpush.bf16.msra.mxu0 %v1071
  %1903 = vmatpush.bf16.msra.mxu0 %v1069
  %1904 = vmatpush.bf16.msra.mxu0 %v1067
  %1905 = vmatpush.bf16.msra.mxu0 %v1065
  %1906 = vmatpush.bf16.msra.mxu0 %v1063
  %1907 = vmatmul.bf16.gmra.mxu0 %v414
  %v1908 = vpop.f32.mrf.mxu0
  %v1909 = vadd.f32 %v1866, %v1908
  %v1910 = vpop.f32.mrf.mxu0
  %v1911 = vadd.f32 %v1868, %v1910
  %1912 = vmatmul.bf16.gmra.mxu0 %v423
  %v1913 = vpop.f32.mrf.mxu0
  %v1914 = vadd.f32 %v1871, %v1913
  %v1915 = vpop.f32.mrf.mxu0
  %v1916 = vadd.f32 %v1873, %v1915
  %1917 = vmatmul.bf16.gmra.mxu0 %v432
  %v1918 = vpop.f32.mrf.mxu0
  %v1919 = vadd.f32 %v1876, %v1918
  %v1920 = vpop.f32.mrf.mxu0
  %v1921 = vadd.f32 %v1878, %v1920
  %1922 = vmatmul.bf16.gmra.mxu0 %v441
  %v1923 = vpop.f32.mrf.mxu0
  %v1924 = vadd.f32 %v1881, %v1923
  %v1925 = vpop.f32.mrf.mxu0
  %v1926 = vadd.f32 %v1883, %v1925
  %1927 = vmatmul.bf16.gmra.mxu0 %v450
  %v1928 = vpop.f32.mrf.mxu0
  %v1929 = vadd.f32 %v1886, %v1928
  %v1930 = vpop.f32.mrf.mxu0
  %v1931 = vadd.f32 %v1888, %v1930
  %1932 = vmatmul.bf16.gmra.mxu0 %v459
  %v1933 = vpop.f32.mrf.mxu0
  %v1934 = vadd.f32 %v1891, %v1933
  %v1935 = vpop.f32.mrf.mxu0
  %v1936 = vadd.f32 %v1893, %v1935
  %1937 = vmatmul.bf16.gmra.mxu0 %v468
  %v1938 = vpop.f32.mrf.mxu0
  %v1939 = vadd.f32 %v1896, %v1938
  %v1940 = vpop.f32.mrf.mxu0
  %1941 = vdwg.mxu0
  %1942 = vmatpush.bf16.msra.mxu0 %v1093
  %1943 = vmatpush.bf16.msra.mxu0 %v1091
  %1944 = vmatpush.bf16.msra.mxu0 %v1089
  %1945 = vmatpush.bf16.msra.mxu0 %v1087
  %1946 = vmatpush.bf16.msra.mxu0 %v1085
  %1947 = vmatpush.bf16.msra.mxu0 %v1083
  %1948 = vmatpush.bf16.msra.mxu0 %v1081
  %1949 = vmatpush.bf16.msra.mxu0 %v1079
  %1950 = vmatmul.bf16.gmra.mxu0 %v415
  %v1951 = vpop.f32.mrf.mxu0
  %v1952 = vadd.f32 %v1909, %v1951
  %v1953 = vpop.f32.mrf.mxu0
  %v1954 = vadd.f32 %v1911, %v1953
  %1955 = vmatmul.bf16.gmra.mxu0 %v424
  %v1956 = vpop.f32.mrf.mxu0
  %v1957 = vadd.f32 %v1914, %v1956
  %v1958 = vpop.f32.mrf.mxu0
  %v1959 = vadd.f32 %v1916, %v1958
  %1960 = vmatmul.bf16.gmra.mxu0 %v433
  %v1961 = vpop.f32.mrf.mxu0
  %v1962 = vadd.f32 %v1919, %v1961
  %v1963 = vpop.f32.mrf.mxu0
  %v1964 = vadd.f32 %v1921, %v1963
  %1965 = vmatmul.bf16.gmra.mxu0 %v442
  %v1966 = vpop.f32.mrf.mxu0
  %v1967 = vadd.f32 %v1924, %v1966
  %v1968 = vpop.f32.mrf.mxu0
  %v1969 = vadd.f32 %v1926, %v1968
  %1970 = vmatmul.bf16.gmra.mxu0 %v451
  %v1971 = vpop.f32.mrf.mxu0
  %v1972 = vadd.f32 %v1929, %v1971
  %v1973 = vpop.f32.mrf.mxu0
  %v1974 = vadd.f32 %v1931, %v1973
  %1975 = vmatmul.bf16.gmra.mxu0 %v460
  %v1976 = vpop.f32.mrf.mxu0
  %v1977 = vadd.f32 %v1934, %v1976
  %v1978 = vpop.f32.mrf.mxu0
  %v1979 = vadd.f32 %v1936, %v1978
  %1980 = vmatmul.bf16.gmra.mxu0 %v469
  %v1981 = vpop.f32.mrf.mxu0
  %v1982 = vadd.f32 %v1939, %v1981
  %v1983 = vpop.f32.mrf.mxu0
  %1984 = vdwg.mxu0
  %1985 = vmatpush.bf16.msra.mxu0 %v1109
  %1986 = vmatpush.bf16.msra.mxu0 %v1107
  %1987 = vmatpush.bf16.msra.mxu0 %v1105
  %1988 = vmatpush.bf16.msra.mxu0 %v1103
  %1989 = vmatpush.bf16.msra.mxu0 %v1101
  %1990 = vmatpush.bf16.msra.mxu0 %v1099
  %1991 = vmatpush.bf16.msra.mxu0 %v1097
  %1992 = vmatpush.bf16.msra.mxu0 %v1095
  %1993 = vmatmul.bf16.gmra.mxu0 %v416
  %v1994 = vpop.f32.mrf.mxu0
  %v1995 = vadd.f32 %v1952, %v1994
  %v1996 = vpop.f32.mrf.mxu0
  %v1997 = vadd.f32 %v1954, %v1996
  %1998 = vmatmul.bf16.gmra.mxu0 %v425
  %v1999 = vpop.f32.mrf.mxu0
  %v2000 = vadd.f32 %v1957, %v1999
  %v2001 = vpop.f32.mrf.mxu0
  %v2002 = vadd.f32 %v1959, %v2001
  %2003 = vmatmul.bf16.gmra.mxu0 %v434
  %v2004 = vpop.f32.mrf.mxu0
  %v2005 = vadd.f32 %v1962, %v2004
  %v2006 = vpop.f32.mrf.mxu0
  %v2007 = vadd.f32 %v1964, %v2006
  %2008 = vmatmul.bf16.gmra.mxu0 %v443
  %v2009 = vpop.f32.mrf.mxu0
  %v2010 = vadd.f32 %v1967, %v2009
  %v2011 = vpop.f32.mrf.mxu0
  %v2012 = vadd.f32 %v1969, %v2011
  %2013 = vmatmul.bf16.gmra.mxu0 %v452
  %v2014 = vpop.f32.mrf.mxu0
  %v2015 = vadd.f32 %v1972, %v2014
  %v2016 = vpop.f32.mrf.mxu0
  %v2017 = vadd.f32 %v1974, %v2016
  %2018 = vmatmul.bf16.gmra.mxu0 %v461
  %v2019 = vpop.f32.mrf.mxu0
  %v2020 = vadd.f32 %v1977, %v2019
  %v2021 = vpop.f32.mrf.mxu0
  %v2022 = vadd.f32 %v1979, %v2021
  %2023 = vmatmul.bf16.gmra.mxu0 %v470
  %v2024 = vpop.f32.mrf.mxu0
  %v2025 = vadd.f32 %v1982, %v2024
  %v2026 = vpop.f32.mrf.mxu0
  %2027 = vdwg.mxu0
  %v2028 = vld [vmem:[%s2] sm:$0x3]
  %v2030 = vperm.slane %v2028, 0
  %v2031 = vperm.slane %v2028, 1
  %v2034 = vmul.f32 %v1608, %v2030
  %v2035 = vmul.f32 %v1995, %v2031
  %v2036 = vmul.f32 %v1610, %v2030
  %v2037 = vmul.f32 %v1997, %v2031
  %v2038 = vmul.f32 %v1613, %v2030
  %v2039 = vmul.f32 %v2000, %v2031
  %v2040 = vmul.f32 %v1615, %v2030
  %v2041 = vmul.f32 %v2002, %v2031
  %v2042 = vmul.f32 %v1618, %v2030
  %v2043 = vmul.f32 %v2005, %v2031
  %v2044 = vmul.f32 %v1620, %v2030
  %v2045 = vmul.f32 %v2007, %v2031
  %v2046 = vmul.f32 %v1623, %v2030
  %v2047 = vmul.f32 %v2010, %v2031
  %v2048 = vmul.f32 %v1625, %v2030
  %v2049 = vmul.f32 %v2012, %v2031
  %v2050 = vmul.f32 %v1628, %v2030
  %v2051 = vmul.f32 %v2015, %v2031
  %v2052 = vmul.f32 %v1630, %v2030
  %v2053 = vmul.f32 %v2017, %v2031
  %v2054 = vmul.f32 %v1633, %v2030
  %v2055 = vmul.f32 %v2020, %v2031
  %v2056 = vmul.f32 %v1635, %v2030
  %v2057 = vmul.f32 %v2022, %v2031
  %v2058 = vmul.f32 %v1638, %v2030
  %v2059 = vmul.f32 %v2025, %v2031
  %v2060 = vld [vmem:[%s3] sm:$0x3]
  %v2062 = vperm.slane %v2060, 0
  %v2063 = vperm.slane %v2060, 1
  %v2066 = vadd.f32 %v2034, %v2062
  %v2067 = vadd.f32 %v2035, %v2063
  %v2068 = vadd.f32 %v2036, %v2062
  %v2069 = vadd.f32 %v2037, %v2063
  %v2070 = vadd.f32 %v2038, %v2062
  %v2071 = vadd.f32 %v2039, %v2063
  %v2072 = vadd.f32 %v2040, %v2062
  %v2073 = vadd.f32 %v2041, %v2063
  %v2074 = vadd.f32 %v2042, %v2062
  %v2075 = vadd.f32 %v2043, %v2063
  %v2076 = vadd.f32 %v2044, %v2062
  %v2077 = vadd.f32 %v2045, %v2063
  %v2078 = vadd.f32 %v2046, %v2062
  %v2079 = vadd.f32 %v2047, %v2063
  %v2080 = vadd.f32 %v2048, %v2062
  %v2081 = vadd.f32 %v2049, %v2063
  %v2082 = vadd.f32 %v2050, %v2062
  %v2083 = vadd.f32 %v2051, %v2063
  %v2084 = vadd.f32 %v2052, %v2062
  %v2085 = vadd.f32 %v2053, %v2063
  %v2086 = vadd.f32 %v2054, %v2062
  %v2087 = vadd.f32 %v2055, %v2063
  %v2088 = vadd.f32 %v2056, %v2062
  %v2089 = vadd.f32 %v2057, %v2063
  %v2090 = vadd.f32 %v2058, %v2062
  %v2091 = vadd.f32 %v2059, %v2063
  %v2092 = vmax.f32 %v2066, 0.0
  %v2093 = vmax.f32 %v2067, 0.0
  %v2094 = vmax.f32 %v2068, 0.0
  %v2095 = vmax.f32 %v2069, 0.0
  %v2096 = vmax.f32 %v2070, 0.0
  %v2097 = vmax.f32 %v2071, 0.0
  %v2098 = vmax.f32 %v2072, 0.0
  %v2099 = vmax.f32 %v2073, 0.0
  %v2100 = vmax.f32 %v2074, 0.0
  %v2101 = vmax.f32 %v2075, 0.0
  %v2102 = vmax.f32 %v2076, 0.0
  %v2103 = vmax.f32 %v2077, 0.0
  %v2104 = vmax.f32 %v2078, 0.0
  %v2105 = vmax.f32 %v2079, 0.0
  %v2106 = vmax.f32 %v2080, 0.0
  %v2107 = vmax.f32 %v2081, 0.0
  %v2108 = vmax.f32 %v2082, 0.0
  %v2109 = vmax.f32 %v2083, 0.0
  %v2110 = vmax.f32 %v2084, 0.0
  %v2111 = vmax.f32 %v2085, 0.0
  %v2112 = vmax.f32 %v2086, 0.0
  %v2113 = vmax.f32 %v2087, 0.0
  %v2114 = vmax.f32 %v2088, 0.0
  %v2115 = vmax.f32 %v2089, 0.0
  %v2116 = vmax.f32 %v2090, 0.0
  %v2117 = vmax.f32 %v2091, 0.0
  %v2118 = vpack.c.bf16 %v2093, %v2092
  %v2119 = vpack.c.bf16 %v2095, %v2094
  %v2120 = vpack.c.bf16 %v2097, %v2096
  %v2121 = vpack.c.bf16 %v2099, %v2098
  %v2122 = vpack.c.bf16 %v2101, %v2100
  %v2123 = vpack.c.bf16 %v2103, %v2102
  %v2124 = vpack.c.bf16 %v2105, %v2104
  %v2125 = vpack.c.bf16 %v2107, %v2106
  %v2126 = vpack.c.bf16 %v2109, %v2108
  %v2127 = vpack.c.bf16 %v2111, %v2110
  %v2128 = vpack.c.bf16 %v2113, %v2112
  %v2129 = vpack.c.bf16 %v2115, %v2114
  %v2130 = vpack.c.bf16 %v2117, %v2116
  %2131 = vst [vmem:[%s4] sm:$0xff] %v2118
  %2132 = vst [vmem:[%s4 + $0x8] sm:$0xff] %v2119
  %2133 = vst [vmem:[%s4 + $0x10] sm:$0xff] %v2120
  %2134 = vst [vmem:[%s4 + $0x18] sm:$0xff] %v2121
  %2135 = vst [vmem:[%s4 + $0x20] sm:$0xff] %v2122
  %2136 = vst [vmem:[%s4 + $0x28] sm:$0xff] %v2123
  %2137 = vst [vmem:[%s4 + $0x30] sm:$0xff] %v2124
  %2138 = vst [vmem:[%s4 + $0x38] sm:$0xff] %v2125
  %2139 = vst [vmem:[%s4 + $0x40] sm:$0xff] %v2126
  %2140 = vst [vmem:[%s4 + $0x48] sm:$0xff] %v2127
  %2141 = vst [vmem:[%s4 + $0x50] sm:$0xff] %v2128
  %2142 = vst [vmem:[%s4 + $0x58] sm:$0xff] %v2129
  %2143 = vst [vmem:[%s4 + $0x60] sm:$0x11] %v2130
  // Predicated region
  $region18: #{generator_forward.4} parent=0 // pred_check
    _
  $region19: #{generator_forward.4} parent=0 // pred_check_branch
    %2145 = sbr.rel (0) target = $region21
  $region20: #{generator_forward.4} parent=0 // pred_region
    _
  $region21: #{generator_forward.4} parent=0 // pred_fallthru
    _
  // Predicated region
  $region22: #{generator_forward.4} parent=0 // pred_check
    _
  $region23: #{generator_forward.4} parent=0 // pred_check_branch
    %2147 = sbr.rel (0) target = $region25
  $region24: #{generator_forward.4} parent=0 // pred_region
    _
  $region25: #{generator_forward.4} parent=0 // pred_fallthru
    _

// kernel: generator_forward.5
$region0: #{generator_forward.5}
  #allocation0 [shape = 'u32[]', space=smem, size = 0x4, offset = 0x4, fixed_abs, tag = 'smem constant byte address 0x4 - core index']
  #allocation1 [shape = 'u32[72,128]{1,0:T(1,128)}', space=vmem, size = 0x9000, scoped, tag = 'internal scratch']
  %s0 = inlined_call_operand.vmem [shape: bf16[98,1024], index: 0, kind: input, shape index: {}]
  %s1 = inlined_call_operand.vmem [shape: bf16[1024,16], index: 1, kind: input, shape index: {}]
  %s2 = inlined_call_operand.vmem [shape: f32[1,16], index: 2, kind: input, shape index: {}]
  %s3 = inlined_call_operand.vmem [shape: f32[1,16], index: 3, kind: input, shape index: {}]
  %s4 = inlined_call_operand.vmem [shape: f32[98,16], index: 4, kind: output, shape index: {}]
  %s5 = sld [smem:[#allocation0]]
  $region26: #{generator_forward.5} parent=0
    _
  %s7 = ssub.s32 1, %s5
  %s8 = scalar_select 0, %s7, %s5
  // Predicated region
  $region2: #{generator_forward.5} parent=0 // pred_check
    _
  $region3: #{generator_forward.5} parent=0 // pred_check_branch
    %10 = sbr.rel (0) target = $region5
  $region4: #{generator_forward.5} parent=0 // pred_region
    _
  $region5: #{generator_forward.5} parent=0 // pred_fallthru
    _
  // Predicated region
  $region6: #{generator_forward.5} parent=0 // pred_check
    _
  $region7: #{generator_forward.5} parent=0 // pred_check_branch
    %12 = sbr.rel (0) target = $region9
  $region8: #{generator_forward.5} parent=0 // pred_region
    _
  $region9: #{generator_forward.5} parent=0 // pred_fallthru
    _
  // Predicated region
  $region10: #{generator_forward.5} parent=0 // pred_check
    _
  $region11: #{generator_forward.5} parent=0 // pred_check_branch
    %14 = sbr.rel (0) target = $region13
  $region12: #{generator_forward.5} parent=0 // pred_region
    _
  $region13: #{generator_forward.5} parent=0 // pred_fallthru
    _
  // Predicated region
  $region14: #{generator_forward.5} parent=0 // pred_check
    _
  $region15: #{generator_forward.5} parent=0 // pred_check_branch
    %16 = sbr.rel (0) target = $region17
  $region16: #{generator_forward.5} parent=0 // pred_region
    _
  $region17: #{generator_forward.5} parent=0 // pred_fallthru
    _
  %v17 = vld [vmem:[%s0] sm:$0xff]
  %v18 = vld [vmem:[%s0 + $0x8] sm:$0xff]
  %v19 = vld [vmem:[%s0 + $0x10] sm:$0xff]
  %v20 = vld [vmem:[%s0 + $0x18] sm:$0xff]
  %v21 = vld [vmem:[%s0 + $0x20] sm:$0xff]
  %v22 = vld [vmem:[%s0 + $0x28] sm:$0xff]
  %v23 = vld [vmem:[%s0 + $0x30] sm:$0xff]
  %v24 = vld [vmem:[%s0 + $0x38] sm:$0xff]
  %v25 = vld [vmem:[%s0 + $0x40] sm:$0xff]
  %v26 = vld [vmem:[%s0 + $0x48] sm:$0xff]
  %v27 = vld [vmem:[%s0 + $0x50] sm:$0xff]
  %v28 = vld [vmem:[%s0 + $0x58] sm:$0xff]
  %v29 = vld [vmem:[%s0 + $0x60] sm:$0xff]
  %v30 = vld [vmem:[%s0 + $0x68] sm:$0xff]
  %v31 = vld [vmem:[%s0 + $0x70] sm:$0xff]
  %v32 = vld [vmem:[%s0 + $0x78] sm:$0xff]
  %v33 = vld [vmem:[%s0 + $0x80] sm:$0xff]
  %v34 = vld [vmem:[%s0 + $0x88] sm:$0xff]
  %v35 = vld [vmem:[%s0 + $0x90] sm:$0xff]
  %v36 = vld [vmem:[%s0 + $0x98] sm:$0xff]
  %v37 = vld [vmem:[%s0 + $0xa0] sm:$0xff]
  %v38 = vld [vmem:[%s0 + $0xa8] sm:$0xff]
  %v39 = vld [vmem:[%s0 + $0xb0] sm:$0xff]
  %v40 = vld [vmem:[%s0 + $0xb8] sm:$0xff]
  %v41 = vld [vmem:[%s0 + $0xc0] sm:$0xff]
  %v42 = vld [vmem:[%s0 + $0xc8] sm:$0xff]
  %v43 = vld [vmem:[%s0 + $0xd0] sm:$0xff]
  %v44 = vld [vmem:[%s0 + $0xd8] sm:$0xff]
  %v45 = vld [vmem:[%s0 + $0xe0] sm:$0xff]
  %v46 = vld [vmem:[%s0 + $0xe8] sm:$0xff]
  %v47 = vld [vmem:[%s0 + $0xf0] sm:$0xff]
  %v48 = vld [vmem:[%s0 + $0xf8] sm:$0xff]
  %v49 = vld [vmem:[%s0 + $0x100] sm:$0xff]
  %v50 = vld [vmem:[%s0 + $0x108] sm:$0xff]
  %v51 = vld [vmem:[%s0 + $0x110] sm:$0xff]
  %v52 = vld [vmem:[%s0 + $0x118] sm:$0xff]
  %v53 = vld [vmem:[%s0 + $0x120] sm:$0xff]
  %v54 = vld [vmem:[%s0 + $0x128] sm:$0xff]
  %v55 = vld [vmem:[%s0 + $0x130] sm:$0xff]
  %v56 = vld [vmem:[%s0 + $0x138] sm:$0xff]
  %v57 = vld [vmem:[%s0 + $0x140] sm:$0xff]
  %v58 = vld [vmem:[%s0 + $0x148] sm:$0xff]
  %v59 = vld [vmem:[%s0 + $0x150] sm:$0xff]
  %v60 = vld [vmem:[%s0 + $0x158] sm:$0xff]
  %v61 = vld [vmem:[%s0 + $0x160] sm:$0xff]
  %v62 = vld [vmem:[%s0 + $0x168] sm:$0xff]
  %v63 = vld [vmem:[%s0 + $0x170] sm:$0xff]
  %v64 = vld [vmem:[%s0 + $0x178] sm:$0xff]
  %v65 = vld [vmem:[%s0 + $0x180] sm:$0x11]
  %v66 = vld [vmem:[%s0 + $0x188] sm:$0x11]
  %v67 = vld [vmem:[%s0 + $0x190] sm:$0x11]
  %v68 = vld [vmem:[%s0 + $0x198] sm:$0x11]
  %v69 = vld [vmem:[%s1] sm:$0xf]
  %v70 = vld [vmem:[%s1 + $0x4] sm:$0xf]
  %v71 = vld [vmem:[%s1 + $0x8] sm:$0xf]
  %v72 = vld [vmem:[%s1 + $0xc] sm:$0xf]
  %v73 = vld [vmem:[%s1 + $0x10] sm:$0xf]
  %v74 = vld [vmem:[%s1 + $0x14] sm:$0xf]
  %v75 = vld [vmem:[%s1 + $0x18] sm:$0xf]
  %v76 = vld [vmem:[%s1 + $0x1c] sm:$0xf]
  %v77 = vld [vmem:[%s1 + $0x20] sm:$0xf]
  %v78 = vld [vmem:[%s1 + $0x24] sm:$0xf]
  %v79 = vld [vmem:[%s1 + $0x28] sm:$0xf]
  %v80 = vld [vmem:[%s1 + $0x2c] sm:$0xf]
  %v81 = vld [vmem:[%s1 + $0x30] sm:$0xf]
  %v82 = vld [vmem:[%s1 + $0x34] sm:$0xf]
  %v83 = vld [vmem:[%s1 + $0x38] sm:$0xf]
  %v84 = vld [vmem:[%s1 + $0x3c] sm:$0xf]
  %v85 = vld [vmem:[%s1 + $0x40] sm:$0xf]
  %v86 = vld [vmem:[%s1 + $0x44] sm:$0xf]
  %v87 = vld [vmem:[%s1 + $0x48] sm:$0xf]
  %v88 = vld [vmem:[%s1 + $0x4c] sm:$0xf]
  %v89 = vld [vmem:[%s1 + $0x50] sm:$0xf]
  %v90 = vld [vmem:[%s1 + $0x54] sm:$0xf]
  %v91 = vld [vmem:[%s1 + $0x58] sm:$0xf]
  %v92 = vld [vmem:[%s1 + $0x5c] sm:$0xf]
  %v93 = vld [vmem:[%s1 + $0x60] sm:$0xf]
  %v94 = vld [vmem:[%s1 + $0x64] sm:$0xf]
  %v95 = vld [vmem:[%s1 + $0x68] sm:$0xf]
  %v96 = vld [vmem:[%s1 + $0x6c] sm:$0xf]
  %v97 = vld [vmem:[%s1 + $0x70] sm:$0xf]
  %v98 = vld [vmem:[%s1 + $0x74] sm:$0xf]
  %v99 = vld [vmem:[%s1 + $0x78] sm:$0xf]
  %v100 = vld [vmem:[%s1 + $0x7c] sm:$0xf]
  %v101 = vld [vmem:[%s1 + $0x80] sm:$0xf]
  %v102 = vld [vmem:[%s1 + $0x84] sm:$0xf]
  %v103 = vld [vmem:[%s1 + $0x88] sm:$0xf]
  %v104 = vld [vmem:[%s1 + $0x8c] sm:$0xf]
  %v105 = vld [vmem:[%s1 + $0x90] sm:$0xf]
  %v106 = vld [vmem:[%s1 + $0x94] sm:$0xf]
  %v107 = vld [vmem:[%s1 + $0x98] sm:$0xf]
  %v108 = vld [vmem:[%s1 + $0x9c] sm:$0xf]
  %v109 = vld [vmem:[%s1 + $0xa0] sm:$0xf]
  %v110 = vld [vmem:[%s1 + $0xa4] sm:$0xf]
  %v111 = vld [vmem:[%s1 + $0xa8] sm:$0xf]
  %v112 = vld [vmem:[%s1 + $0xac] sm:$0xf]
  %v113 = vld [vmem:[%s1 + $0xb0] sm:$0xf]
  %v114 = vld [vmem:[%s1 + $0xb4] sm:$0xf]
  %v115 = vld [vmem:[%s1 + $0xb8] sm:$0xf]
  %v116 = vld [vmem:[%s1 + $0xbc] sm:$0xf]
  %v117 = vld [vmem:[%s1 + $0xc0] sm:$0xf]
  %v118 = vld [vmem:[%s1 + $0xc4] sm:$0xf]
  %v119 = vld [vmem:[%s1 + $0xc8] sm:$0xf]
  %v120 = vld [vmem:[%s1 + $0xcc] sm:$0xf]
  %v121 = vld [vmem:[%s1 + $0xd0] sm:$0xf]
  %v122 = vld [vmem:[%s1 + $0xd4] sm:$0xf]
  %v123 = vld [vmem:[%s1 + $0xd8] sm:$0xf]
  %v124 = vld [vmem:[%s1 + $0xdc] sm:$0xf]
  %v125 = vld [vmem:[%s1 + $0xe0] sm:$0xf]
  %v126 = vld [vmem:[%s1 + $0xe4] sm:$0xf]
  %v127 = vld [vmem:[%s1 + $0xe8] sm:$0xf]
  %v128 = vld [vmem:[%s1 + $0xec] sm:$0xf]
  %v129 = vld [vmem:[%s1 + $0xf0] sm:$0xf]
  %v130 = vld [vmem:[%s1 + $0xf4] sm:$0xf]
  %v131 = vld [vmem:[%s1 + $0xf8] sm:$0xf]
  %v132 = vld [vmem:[%s1 + $0xfc] sm:$0xf]
  %v133 = vld [vmem:[%s1 + $0x100] sm:$0xf]
  %v134 = vld [vmem:[%s1 + $0x104] sm:$0xf]
  %v135 = vld [vmem:[%s1 + $0x108] sm:$0xf]
  %v136 = vld [vmem:[%s1 + $0x10c] sm:$0xf]
  %v137 = vld [vmem:[%s1 + $0x110] sm:$0xf]
  %v138 = vld [vmem:[%s1 + $0x114] sm:$0xf]
  %v139 = vld [vmem:[%s1 + $0x118] sm:$0xf]
  %v140 = vld [vmem:[%s1 + $0x11c] sm:$0xf]
  %v141 = vld [vmem:[%s1 + $0x120] sm:$0xf]
  %v142 = vld [vmem:[%s1 + $0x124] sm:$0xf]
  %v143 = vld [vmem:[%s1 + $0x128] sm:$0xf]
  %v144 = vld [vmem:[%s1 + $0x12c] sm:$0xf]
  %v145 = vld [vmem:[%s1 + $0x130] sm:$0xf]
  %v146 = vld [vmem:[%s1 + $0x134] sm:$0xf]
  %v147 = vld [vmem:[%s1 + $0x138] sm:$0xf]
  %v148 = vld [vmem:[%s1 + $0x13c] sm:$0xf]
  %v149 = vld [vmem:[%s1 + $0x140] sm:$0xf]
  %v150 = vld [vmem:[%s1 + $0x144] sm:$0xf]
  %v151 = vld [vmem:[%s1 + $0x148] sm:$0xf]
  %v152 = vld [vmem:[%s1 + $0x14c] sm:$0xf]
  %v153 = vld [vmem:[%s1 + $0x150] sm:$0xf]
  %v154 = vld [vmem:[%s1 + $0x154] sm:$0xf]
  %v155 = vld [vmem:[%s1 + $0x158] sm:$0xf]
  %v156 = vld [vmem:[%s1 + $0x15c] sm:$0xf]
  %v157 = vld [vmem:[%s1 + $0x160] sm:$0xf]
  %v158 = vld [vmem:[%s1 + $0x164] sm:$0xf]
  %v159 = vld [vmem:[%s1 + $0x168] sm:$0xf]
  %v160 = vld [vmem:[%s1 + $0x16c] sm:$0xf]
  %v161 = vld [vmem:[%s1 + $0x170] sm:$0xf]
  %v162 = vld [vmem:[%s1 + $0x174] sm:$0xf]
  %v163 = vld [vmem:[%s1 + $0x178] sm:$0xf]
  %v164 = vld [vmem:[%s1 + $0x17c] sm:$0xf]
  %v165 = vld [vmem:[%s1 + $0x180] sm:$0xf]
  %v166 = vld [vmem:[%s1 + $0x184] sm:$0xf]
  %v167 = vld [vmem:[%s1 + $0x188] sm:$0xf]
  %v168 = vld [vmem:[%s1 + $0x18c] sm:$0xf]
  %v169 = vld [vmem:[%s1 + $0x190] sm:$0xf]
  %v170 = vld [vmem:[%s1 + $0x194] sm:$0xf]
  %v171 = vld [vmem:[%s1 + $0x198] sm:$0xf]
  %v172 = vld [vmem:[%s1 + $0x19c] sm:$0xf]
  %v173 = vld [vmem:[%s1 + $0x1a0] sm:$0xf]
  %v174 = vld [vmem:[%s1 + $0x1a4] sm:$0xf]
  %v175 = vld [vmem:[%s1 + $0x1a8] sm:$0xf]
  %v176 = vld [vmem:[%s1 + $0x1ac] sm:$0xf]
  %v177 = vld [vmem:[%s1 + $0x1b0] sm:$0xf]
  %v178 = vld [vmem:[%s1 + $0x1b4] sm:$0xf]
  %v179 = vld [vmem:[%s1 + $0x1b8] sm:$0xf]
  %v180 = vld [vmem:[%s1 + $0x1bc] sm:$0xf]
  %v181 = vld [vmem:[%s1 + $0x1c0] sm:$0xf]
  %v182 = vld [vmem:[%s1 + $0x1c4] sm:$0xf]
  %v183 = vld [vmem:[%s1 + $0x1c8] sm:$0xf]
  %v184 = vld [vmem:[%s1 + $0x1cc] sm:$0xf]
  %v185 = vld [vmem:[%s1 + $0x1d0] sm:$0xf]
  %v186 = vld [vmem:[%s1 + $0x1d4] sm:$0xf]
  %v187 = vld [vmem:[%s1 + $0x1d8] sm:$0xf]
  %v188 = vld [vmem:[%s1 + $0x1dc] sm:$0xf]
  %v189 = vld [vmem:[%s1 + $0x1e0] sm:$0xf]
  %v190 = vld [vmem:[%s1 + $0x1e4] sm:$0xf]
  %v191 = vld [vmem:[%s1 + $0x1e8] sm:$0xf]
  %v192 = vld [vmem:[%s1 + $0x1ec] sm:$0xf]
  %v193 = vld [vmem:[%s1 + $0x1f0] sm:$0xf]
  %v194 = vld [vmem:[%s1 + $0x1f4] sm:$0xf]
  %v195 = vld [vmem:[%s1 + $0x1f8] sm:$0xf]
  %v196 = vld [vmem:[%s1 + $0x1fc] sm:$0xf]
  %v249 = vunpack.c.l.b16 %v17
  %v250 = vunpack.c.h.b16 %v17
  %v251 = vunpack.c.l.b16 %v18
  %v252 = vunpack.c.h.b16 %v18
  %v253 = vunpack.c.l.b16 %v19
  %v254 = vunpack.c.h.b16 %v19
  %v255 = vunpack.c.l.b16 %v20
  %v256 = vunpack.c.h.b16 %v20
  %v257 = vunpack.c.l.b16 %v21
  %v258 = vunpack.c.h.b16 %v21
  %v259 = vunpack.c.l.b16 %v22
  %v260 = vunpack.c.h.b16 %v22
  %v261 = vunpack.c.l.b16 %v23
  %v262 = vunpack.c.h.b16 %v23
  %v263 = vunpack.c.l.b16 %v24
  %v264 = vunpack.c.h.b16 %v24
  %v265 = vunpack.c.l.b16 %v25
  %v266 = vunpack.c.h.b16 %v25
  %v267 = vunpack.c.l.b16 %v26
  %v268 = vunpack.c.h.b16 %v26
  %v269 = vunpack.c.l.b16 %v27
  %v270 = vunpack.c.h.b16 %v27
  %v271 = vunpack.c.l.b16 %v28
  %v272 = vunpack.c.h.b16 %v28
  %v273 = vunpack.c.l.b16 %v29
  %v274 = vunpack.c.h.b16 %v29
  %v275 = vunpack.c.l.b16 %v30
  %v276 = vunpack.c.h.b16 %v30
  %v277 = vunpack.c.l.b16 %v31
  %v278 = vunpack.c.h.b16 %v31
  %v279 = vunpack.c.l.b16 %v32
  %v280 = vunpack.c.h.b16 %v32
  %v281 = vunpack.c.l.b16 %v33
  %v282 = vunpack.c.h.b16 %v33
  %v283 = vunpack.c.l.b16 %v34
  %v284 = vunpack.c.h.b16 %v34
  %v285 = vunpack.c.l.b16 %v35
  %v286 = vunpack.c.h.b16 %v35
  %v287 = vunpack.c.l.b16 %v36
  %v288 = vunpack.c.h.b16 %v36
  %v289 = vunpack.c.l.b16 %v37
  %v290 = vunpack.c.h.b16 %v37
  %v291 = vunpack.c.l.b16 %v38
  %v292 = vunpack.c.h.b16 %v38
  %v293 = vunpack.c.l.b16 %v39
  %v294 = vunpack.c.h.b16 %v39
  %v295 = vunpack.c.l.b16 %v40
  %v296 = vunpack.c.h.b16 %v40
  %v297 = vunpack.c.l.b16 %v41
  %v298 = vunpack.c.h.b16 %v41
  %v299 = vunpack.c.l.b16 %v42
  %v300 = vunpack.c.h.b16 %v42
  %v301 = vunpack.c.l.b16 %v43
  %v302 = vunpack.c.h.b16 %v43
  %v303 = vunpack.c.l.b16 %v44
  %v304 = vunpack.c.h.b16 %v44
  %v305 = vunpack.c.l.b16 %v45
  %v306 = vunpack.c.h.b16 %v45
  %v307 = vunpack.c.l.b16 %v46
  %v308 = vunpack.c.h.b16 %v46
  %v309 = vunpack.c.l.b16 %v47
  %v310 = vunpack.c.h.b16 %v47
  %v311 = vunpack.c.l.b16 %v48
  %v312 = vunpack.c.h.b16 %v48
  %v313 = vunpack.c.l.b16 %v49
  %v314 = vunpack.c.h.b16 %v49
  %v315 = vunpack.c.l.b16 %v50
  %v316 = vunpack.c.h.b16 %v50
  %v317 = vunpack.c.l.b16 %v51
  %v318 = vunpack.c.h.b16 %v51
  %v319 = vunpack.c.l.b16 %v52
  %v320 = vunpack.c.h.b16 %v52
  %v321 = vunpack.c.l.b16 %v53
  %v322 = vunpack.c.h.b16 %v53
  %v323 = vunpack.c.l.b16 %v54
  %v324 = vunpack.c.h.b16 %v54
  %v325 = vunpack.c.l.b16 %v55
  %v326 = vunpack.c.h.b16 %v55
  %v327 = vunpack.c.l.b16 %v56
  %v328 = vunpack.c.h.b16 %v56
  %v329 = vunpack.c.l.b16 %v57
  %v330 = vunpack.c.h.b16 %v57
  %v331 = vunpack.c.l.b16 %v58
  %v332 = vunpack.c.h.b16 %v58
  %v333 = vunpack.c.l.b16 %v59
  %v334 = vunpack.c.h.b16 %v59
  %v335 = vunpack.c.l.b16 %v60
  %v336 = vunpack.c.h.b16 %v60
  %v337 = vunpack.c.l.b16 %v61
  %v338 = vunpack.c.h.b16 %v61
  %v339 = vunpack.c.l.b16 %v62
  %v340 = vunpack.c.h.b16 %v62
  %v341 = vunpack.c.l.b16 %v63
  %v342 = vunpack.c.h.b16 %v63
  %v343 = vunpack.c.l.b16 %v64
  %v344 = vunpack.c.h.b16 %v64
  %v345 = vunpack.c.l.b16 %v65
  %v346 = vunpack.c.h.b16 %v65
  %v347 = vunpack.c.l.b16 %v66
  %v348 = vunpack.c.h.b16 %v66
  %v349 = vunpack.c.l.b16 %v67
  %v350 = vunpack.c.h.b16 %v67
  %v351 = vunpack.c.l.b16 %v68
  %v352 = vunpack.c.h.b16 %v68
  %v353 = vpack.c.b16 %v257, %v249
  %v354 = vpack.c.b16 %v258, %v250
  %v355 = vpack.c.b16 %v259, %v251
  %v356 = vpack.c.b16 %v260, %v252
  %v357 = vpack.c.b16 %v261, %v253
  %v358 = vpack.c.b16 %v262, %v254
  %v359 = vpack.c.b16 %v263, %v255
  %v360 = vpack.c.b16 %v264, %v256
  %v361 = vpack.c.b16 %v273, %v265
  %v362 = vpack.c.b16 %v274, %v266
  %v363 = vpack.c.b16 %v275, %v267
  %v364 = vpack.c.b16 %v276, %v268
  %v365 = vpack.c.b16 %v277, %v269
  %v366 = vpack.c.b16 %v278, %v270
  %v367 = vpack.c.b16 %v279, %v271
  %v368 = vpack.c.b16 %v280, %v272
  %v369 = vpack.c.b16 %v289, %v281
  %v370 = vpack.c.b16 %v290, %v282
  %v371 = vpack.c.b16 %v291, %v283
  %v372 = vpack.c.b16 %v292, %v284
  %v373 = vpack.c.b16 %v293, %v285
  %v374 = vpack.c.b16 %v294, %v286
  %v375 = vpack.c.b16 %v295, %v287
  %v376 = vpack.c.b16 %v296, %v288
  %v377 = vpack.c.b16 %v305, %v297
  %v378 = vpack.c.b16 %v306, %v298
  %v379 = vpack.c.b16 %v307, %v299
  %v380 = vpack.c.b16 %v308, %v300
  %v381 = vpack.c.b16 %v309, %v301
  %v382 = vpack.c.b16 %v310, %v302
  %v383 = vpack.c.b16 %v311, %v303
  %v384 = vpack.c.b16 %v312, %v304
  %v385 = vpack.c.b16 %v321, %v313
  %v386 = vpack.c.b16 %v322, %v314
  %v387 = vpack.c.b16 %v323, %v315
  %v388 = vpack.c.b16 %v324, %v316
  %v389 = vpack.c.b16 %v325, %v317
  %v390 = vpack.c.b16 %v326, %v318
  %v391 = vpack.c.b16 %v327, %v319
  %v392 = vpack.c.b16 %v328, %v320
  %v393 = vpack.c.b16 %v337, %v329
  %v394 = vpack.c.b16 %v338, %v330
  %v395 = vpack.c.b16 %v339, %v331
  %v396 = vpack.c.b16 %v340, %v332
  %v397 = vpack.c.b16 %v341, %v333
  %v398 = vpack.c.b16 %v342, %v334
  %v399 = vpack.c.b16 %v343, %v335
  %v400 = vpack.c.b16 %v344, %v336
  %v401 = vpack.c.b16 %v345, %v345
  %v402 = vpack.c.b16 %v346, %v346
  %v403 = vpack.c.b16 %v347, %v347
  %v404 = vpack.c.b16 %v348, %v348
  %v405 = vpack.c.b16 %v349, %v349
  %v406 = vpack.c.b16 %v350, %v350
  %v407 = vpack.c.b16 %v351, %v351
  %v408 = vpack.c.b16 %v352, %v352
  %v593 = vunpack.c.l.b16 %v69
  %v594 = vunpack.c.l.b16 %v70
  %v595 = vunpack.c.l.b16 %v71
  %v596 = vunpack.c.l.b16 %v72
  %v597 = vunpack.c.l.b16 %v73
  %v598 = vunpack.c.l.b16 %v74
  %v599 = vunpack.c.l.b16 %v75
  %v600 = vunpack.c.l.b16 %v76
  %v601 = vunpack.c.l.b16 %v77
  %v602 = vunpack.c.l.b16 %v78
  %v603 = vunpack.c.l.b16 %v79
  %v604 = vunpack.c.l.b16 %v80
  %v605 = vunpack.c.l.b16 %v81
  %v606 = vunpack.c.l.b16 %v82
  %v607 = vunpack.c.l.b16 %v83
  %v608 = vunpack.c.l.b16 %v84
  %v609 = vunpack.c.l.b16 %v85
  %v610 = vunpack.c.l.b16 %v86
  %v611 = vunpack.c.l.b16 %v87
  %v612 = vunpack.c.l.b16 %v88
  %v613 = vunpack.c.l.b16 %v89
  %v614 = vunpack.c.l.b16 %v90
  %v615 = vunpack.c.l.b16 %v91
  %v616 = vunpack.c.l.b16 %v92
  %v617 = vunpack.c.l.b16 %v93
  %v618 = vunpack.c.l.b16 %v94
  %v619 = vunpack.c.l.b16 %v95
  %v620 = vunpack.c.l.b16 %v96
  %v621 = vunpack.c.l.b16 %v97
  %v622 = vunpack.c.l.b16 %v98
  %v623 = vunpack.c.l.b16 %v99
  %v624 = vunpack.c.l.b16 %v100
  %v625 = vunpack.c.l.b16 %v101
  %v626 = vunpack.c.l.b16 %v102
  %v627 = vunpack.c.l.b16 %v103
  %v628 = vunpack.c.l.b16 %v104
  %v629 = vunpack.c.l.b16 %v105
  %v630 = vunpack.c.l.b16 %v106
  %v631 = vunpack.c.l.b16 %v107
  %v632 = vunpack.c.l.b16 %v108
  %v633 = vunpack.c.l.b16 %v109
  %v634 = vunpack.c.l.b16 %v110
  %v635 = vunpack.c.l.b16 %v111
  %v636 = vunpack.c.l.b16 %v112
  %v637 = vunpack.c.l.b16 %v113
  %v638 = vunpack.c.l.b16 %v114
  %v639 = vunpack.c.l.b16 %v115
  %v640 = vunpack.c.l.b16 %v116
  %v641 = vunpack.c.l.b16 %v117
  %v642 = vunpack.c.l.b16 %v118
  %v643 = vunpack.c.l.b16 %v119
  %v644 = vunpack.c.l.b16 %v120
  %v645 = vunpack.c.l.b16 %v121
  %v646 = vunpack.c.l.b16 %v122
  %v647 = vunpack.c.l.b16 %v123
  %v648 = vunpack.c.l.b16 %v124
  %v649 = vunpack.c.l.b16 %v125
  %v650 = vunpack.c.l.b16 %v126
  %v651 = vunpack.c.l.b16 %v127
  %v652 = vunpack.c.l.b16 %v128
  %v653 = vunpack.c.l.b16 %v129
  %v654 = vunpack.c.l.b16 %v130
  %v655 = vunpack.c.l.b16 %v131
  %v656 = vunpack.c.l.b16 %v132
  %v657 = vunpack.c.l.b16 %v133
  %v658 = vunpack.c.l.b16 %v134
  %v659 = vunpack.c.l.b16 %v135
  %v660 = vunpack.c.l.b16 %v136
  %v661 = vunpack.c.l.b16 %v137
  %v662 = vunpack.c.l.b16 %v138
  %v663 = vunpack.c.l.b16 %v139
  %v664 = vunpack.c.l.b16 %v140
  %v665 = vunpack.c.l.b16 %v141
  %v666 = vunpack.c.l.b16 %v142
  %v667 = vunpack.c.l.b16 %v143
  %v668 = vunpack.c.l.b16 %v144
  %v669 = vunpack.c.l.b16 %v145
  %v670 = vunpack.c.l.b16 %v146
  %v671 = vunpack.c.l.b16 %v147
  %v672 = vunpack.c.l.b16 %v148
  %v673 = vunpack.c.l.b16 %v149
  %v674 = vunpack.c.l.b16 %v150
  %v675 = vunpack.c.l.b16 %v151
  %v676 = vunpack.c.l.b16 %v152
  %v677 = vunpack.c.l.b16 %v153
  %v678 = vunpack.c.l.b16 %v154
  %v679 = vunpack.c.l.b16 %v155
  %v680 = vunpack.c.l.b16 %v156
  %v681 = vunpack.c.l.b16 %v157
  %v682 = vunpack.c.l.b16 %v158
  %v683 = vunpack.c.l.b16 %v159
  %v684 = vunpack.c.l.b16 %v160
  %v685 = vunpack.c.l.b16 %v161
  %v686 = vunpack.c.l.b16 %v162
  %v687 = vunpack.c.l.b16 %v163
  %v688 = vunpack.c.l.b16 %v164
  %v689 = vunpack.c.l.b16 %v165
  %v690 = vunpack.c.l.b16 %v166
  %v691 = vunpack.c.l.b16 %v167
  %v692 = vunpack.c.l.b16 %v168
  %v693 = vunpack.c.l.b16 %v169
  %v694 = vunpack.c.l.b16 %v170
  %v695 = vunpack.c.l.b16 %v171
  %v696 = vunpack.c.l.b16 %v172
  %v697 = vunpack.c.l.b16 %v173
  %v698 = vunpack.c.l.b16 %v174
  %v699 = vunpack.c.l.b16 %v175
  %v700 = vunpack.c.l.b16 %v176
  %v701 = vunpack.c.l.b16 %v177
  %v702 = vunpack.c.l.b16 %v178
  %v703 = vunpack.c.l.b16 %v179
  %v704 = vunpack.c.l.b16 %v180
  %v705 = vunpack.c.l.b16 %v181
  %v706 = vunpack.c.l.b16 %v182
  %v707 = vunpack.c.l.b16 %v183
  %v708 = vunpack.c.l.b16 %v184
  %v709 = vunpack.c.l.b16 %v185
  %v710 = vunpack.c.l.b16 %v186
  %v711 = vunpack.c.l.b16 %v187
  %v712 = vunpack.c.l.b16 %v188
  %v713 = vunpack.c.l.b16 %v189
  %v714 = vunpack.c.l.b16 %v190
  %v715 = vunpack.c.l.b16 %v191
  %v716 = vunpack.c.l.b16 %v192
  %v717 = vunpack.c.l.b16 %v193
  %v718 = vunpack.c.l.b16 %v194
  %v719 = vunpack.c.l.b16 %v195
  %v720 = vunpack.c.l.b16 %v196
  %v721 = vpack.c.b16 %v594, %v593
  %v722 = vpack.c.b16 %v596, %v595
  %v723 = vpack.c.b16 %v598, %v597
  %v724 = vpack.c.b16 %v600, %v599
  %v725 = vpack.c.b16 %v602, %v601
  %v726 = vpack.c.b16 %v604, %v603
  %v727 = vpack.c.b16 %v606, %v605
  %v728 = vpack.c.b16 %v608, %v607
  %v729 = vpack.c.b16 %v610, %v609
  %v730 = vpack.c.b16 %v612, %v611
  %v731 = vpack.c.b16 %v614, %v613
  %v732 = vpack.c.b16 %v616, %v615
  %v733 = vpack.c.b16 %v618, %v617
  %v734 = vpack.c.b16 %v620, %v619
  %v735 = vpack.c.b16 %v622, %v621
  %v736 = vpack.c.b16 %v624, %v623
  %v737 = vpack.c.b16 %v626, %v625
  %v738 = vpack.c.b16 %v628, %v627
  %v739 = vpack.c.b16 %v630, %v629
  %v740 = vpack.c.b16 %v632, %v631
  %v741 = vpack.c.b16 %v634, %v633
  %v742 = vpack.c.b16 %v636, %v635
  %v743 = vpack.c.b16 %v638, %v637
  %v744 = vpack.c.b16 %v640, %v639
  %v745 = vpack.c.b16 %v642, %v641
  %v746 = vpack.c.b16 %v644, %v643
  %v747 = vpack.c.b16 %v646, %v645
  %v748 = vpack.c.b16 %v648, %v647
  %v749 = vpack.c.b16 %v650, %v649
  %v750 = vpack.c.b16 %v652, %v651
  %v751 = vpack.c.b16 %v654, %v653
  %v752 = vpack.c.b16 %v656, %v655
  %v753 = vpack.c.b16 %v658, %v657
  %v754 = vpack.c.b16 %v660, %v659
  %v755 = vpack.c.b16 %v662, %v661
  %v756 = vpack.c.b16 %v664, %v663
  %v757 = vpack.c.b16 %v666, %v665
  %v758 = vpack.c.b16 %v668, %v667
  %v759 = vpack.c.b16 %v670, %v669
  %v760 = vpack.c.b16 %v672, %v671
  %v761 = vpack.c.b16 %v674, %v673
  %v762 = vpack.c.b16 %v676, %v675
  %v763 = vpack.c.b16 %v678, %v677
  %v764 = vpack.c.b16 %v680, %v679
  %v765 = vpack.c.b16 %v682, %v681
  %v766 = vpack.c.b16 %v684, %v683
  %v767 = vpack.c.b16 %v686, %v685
  %v768 = vpack.c.b16 %v688, %v687
  %v769 = vpack.c.b16 %v690, %v689
  %v770 = vpack.c.b16 %v692, %v691
  %v771 = vpack.c.b16 %v694, %v693
  %v772 = vpack.c.b16 %v696, %v695
  %v773 = vpack.c.b16 %v698, %v697
  %v774 = vpack.c.b16 %v700, %v699
  %v775 = vpack.c.b16 %v702, %v701
  %v776 = vpack.c.b16 %v704, %v703
  %v777 = vpack.c.b16 %v706, %v705
  %v778 = vpack.c.b16 %v708, %v707
  %v779 = vpack.c.b16 %v710, %v709
  %v780 = vpack.c.b16 %v712, %v711
  %v781 = vpack.c.b16 %v714, %v713
  %v782 = vpack.c.b16 %v716, %v715
  %v783 = vpack.c.b16 %v718, %v717
  %v784 = vpack.c.b16 %v720, %v719
  %849 = vmatpush.bf16.msra.mxu0 %v728
  %850 = vmatpush.bf16.msra.mxu0 %v727
  %851 = vmatpush.bf16.msra.mxu0 %v726
  %852 = vmatpush.bf16.msra.mxu0 %v725
  %853 = vmatpush.bf16.msra.mxu0 %v724
  %854 = vmatpush.bf16.msra.mxu0 %v723
  %855 = vmatpush.bf16.msra.mxu0 %v722
  %856 = vmatpush.bf16.msra.mxu0 %v721
  %857 = vmatmul.bf16.gmra.mxu0 %v353
  %v858 = vpop.f32.mrf.mxu0
  %v859 = vadd.f32 0.0, %v858
  %v860 = vpop.f32.mrf.mxu0
  %v861 = vadd.f32 0.0, %v860
  %862 = vmatmul.bf16.gmra.mxu0 %v361
  %v863 = vpop.f32.mrf.mxu0
  %v864 = vadd.f32 0.0, %v863
  %v865 = vpop.f32.mrf.mxu0
  %v866 = vadd.f32 0.0, %v865
  %867 = vmatmul.bf16.gmra.mxu0 %v369
  %v868 = vpop.f32.mrf.mxu0
  %v869 = vadd.f32 0.0, %v868
  %v870 = vpop.f32.mrf.mxu0
  %v871 = vadd.f32 0.0, %v870
  %872 = vmatmul.bf16.gmra.mxu0 %v377
  %v873 = vpop.f32.mrf.mxu0
  %v874 = vadd.f32 0.0, %v873
  %v875 = vpop.f32.mrf.mxu0
  %v876 = vadd.f32 0.0, %v875
  %877 = vmatmul.bf16.gmra.mxu0 %v385
  %v878 = vpop.f32.mrf.mxu0
  %v879 = vadd.f32 0.0, %v878
  %v880 = vpop.f32.mrf.mxu0
  %v881 = vadd.f32 0.0, %v880
  %882 = vmatmul.bf16.gmra.mxu0 %v393
  %v883 = vpop.f32.mrf.mxu0
  %v884 = vadd.f32 0.0, %v883
  %v885 = vpop.f32.mrf.mxu0
  %v886 = vadd.f32 0.0, %v885
  %887 = vmatmul.bf16.gmra.mxu0 %v401
  %v888 = vpop.f32.mrf.mxu0
  %v889 = vadd.f32 0.0, %v888
  %v890 = vpop.f32.mrf.mxu0
  %891 = vdwg.mxu0
  %892 = vmatpush.bf16.msra.mxu0 %v736
  %893 = vmatpush.bf16.msra.mxu0 %v735
  %894 = vmatpush.bf16.msra.mxu0 %v734
  %895 = vmatpush.bf16.msra.mxu0 %v733
  %896 = vmatpush.bf16.msra.mxu0 %v732
  %897 = vmatpush.bf16.msra.mxu0 %v731
  %898 = vmatpush.bf16.msra.mxu0 %v730
  %899 = vmatpush.bf16.msra.mxu0 %v729
  %900 = vmatmul.bf16.gmra.mxu0 %v354
  %v901 = vpop.f32.mrf.mxu0
  %v902 = vadd.f32 %v859, %v901
  %v903 = vpop.f32.mrf.mxu0
  %v904 = vadd.f32 %v861, %v903
  %905 = vmatmul.bf16.gmra.mxu0 %v362
  %v906 = vpop.f32.mrf.mxu0
  %v907 = vadd.f32 %v864, %v906
  %v908 = vpop.f32.mrf.mxu0
  %v909 = vadd.f32 %v866, %v908
  %910 = vmatmul.bf16.gmra.mxu0 %v370
  %v911 = vpop.f32.mrf.mxu0
  %v912 = vadd.f32 %v869, %v911
  %v913 = vpop.f32.mrf.mxu0
  %v914 = vadd.f32 %v871, %v913
  %915 = vmatmul.bf16.gmra.mxu0 %v378
  %v916 = vpop.f32.mrf.mxu0
  %v917 = vadd.f32 %v874, %v916
  %v918 = vpop.f32.mrf.mxu0
  %v919 = vadd.f32 %v876, %v918
  %920 = vmatmul.bf16.gmra.mxu0 %v386
  %v921 = vpop.f32.mrf.mxu0
  %v922 = vadd.f32 %v879, %v921
  %v923 = vpop.f32.mrf.mxu0
  %v924 = vadd.f32 %v881, %v923
  %925 = vmatmul.bf16.gmra.mxu0 %v394
  %v926 = vpop.f32.mrf.mxu0
  %v927 = vadd.f32 %v884, %v926
  %v928 = vpop.f32.mrf.mxu0
  %v929 = vadd.f32 %v886, %v928
  %930 = vmatmul.bf16.gmra.mxu0 %v402
  %v931 = vpop.f32.mrf.mxu0
  %v932 = vadd.f32 %v889, %v931
  %v933 = vpop.f32.mrf.mxu0
  %934 = vdwg.mxu0
  %935 = vmatpush.bf16.msra.mxu0 %v744
  %936 = vmatpush.bf16.msra.mxu0 %v743
  %937 = vmatpush.bf16.msra.mxu0 %v742
  %938 = vmatpush.bf16.msra.mxu0 %v741
  %939 = vmatpush.bf16.msra.mxu0 %v740
  %940 = vmatpush.bf16.msra.mxu0 %v739
  %941 = vmatpush.bf16.msra.mxu0 %v738
  %942 = vmatpush.bf16.msra.mxu0 %v737
  %943 = vmatmul.bf16.gmra.mxu0 %v355
  %v944 = vpop.f32.mrf.mxu0
  %v945 = vadd.f32 %v902, %v944
  %v946 = vpop.f32.mrf.mxu0
  %v947 = vadd.f32 %v904, %v946
  %948 = vmatmul.bf16.gmra.mxu0 %v363
  %v949 = vpop.f32.mrf.mxu0
  %v950 = vadd.f32 %v907, %v949
  %v951 = vpop.f32.mrf.mxu0
  %v952 = vadd.f32 %v909, %v951
  %953 = vmatmul.bf16.gmra.mxu0 %v371
  %v954 = vpop.f32.mrf.mxu0
  %v955 = vadd.f32 %v912, %v954
  %v956 = vpop.f32.mrf.mxu0
  %v957 = vadd.f32 %v914, %v956
  %958 = vmatmul.bf16.gmra.mxu0 %v379
  %v959 = vpop.f32.mrf.mxu0
  %v960 = vadd.f32 %v917, %v959
  %v961 = vpop.f32.mrf.mxu0
  %v962 = vadd.f32 %v919, %v961
  %963 = vmatmul.bf16.gmra.mxu0 %v387
  %v964 = vpop.f32.mrf.mxu0
  %v965 = vadd.f32 %v922, %v964
  %v966 = vpop.f32.mrf.mxu0
  %v967 = vadd.f32 %v924, %v966
  %968 = vmatmul.bf16.gmra.mxu0 %v395
  %v969 = vpop.f32.mrf.mxu0
  %v970 = vadd.f32 %v927, %v969
  %v971 = vpop.f32.mrf.mxu0
  %v972 = vadd.f32 %v929, %v971
  %973 = vmatmul.bf16.gmra.mxu0 %v403
  %v974 = vpop.f32.mrf.mxu0
  %v975 = vadd.f32 %v932, %v974
  %v976 = vpop.f32.mrf.mxu0
  %977 = vdwg.mxu0
  %978 = vmatpush.bf16.msra.mxu0 %v752
  %979 = vmatpush.bf16.msra.mxu0 %v751
  %980 = vmatpush.bf16.msra.mxu0 %v750
  %981 = vmatpush.bf16.msra.mxu0 %v749
  %982 = vmatpush.bf16.msra.mxu0 %v748
  %983 = vmatpush.bf16.msra.mxu0 %v747
  %984 = vmatpush.bf16.msra.mxu0 %v746
  %985 = vmatpush.bf16.msra.mxu0 %v745
  %986 = vmatmul.bf16.gmra.mxu0 %v356
  %v987 = vpop.f32.mrf.mxu0
  %v988 = vadd.f32 %v945, %v987
  %v989 = vpop.f32.mrf.mxu0
  %v990 = vadd.f32 %v947, %v989
  %991 = vmatmul.bf16.gmra.mxu0 %v364
  %v992 = vpop.f32.mrf.mxu0
  %v993 = vadd.f32 %v950, %v992
  %v994 = vpop.f32.mrf.mxu0
  %v995 = vadd.f32 %v952, %v994
  %996 = vmatmul.bf16.gmra.mxu0 %v372
  %v997 = vpop.f32.mrf.mxu0
  %v998 = vadd.f32 %v955, %v997
  %v999 = vpop.f32.mrf.mxu0
  %v1000 = vadd.f32 %v957, %v999
  %1001 = vmatmul.bf16.gmra.mxu0 %v380
  %v1002 = vpop.f32.mrf.mxu0
  %v1003 = vadd.f32 %v960, %v1002
  %v1004 = vpop.f32.mrf.mxu0
  %v1005 = vadd.f32 %v962, %v1004
  %1006 = vmatmul.bf16.gmra.mxu0 %v388
  %v1007 = vpop.f32.mrf.mxu0
  %v1008 = vadd.f32 %v965, %v1007
  %v1009 = vpop.f32.mrf.mxu0
  %v1010 = vadd.f32 %v967, %v1009
  %1011 = vmatmul.bf16.gmra.mxu0 %v396
  %v1012 = vpop.f32.mrf.mxu0
  %v1013 = vadd.f32 %v970, %v1012
  %v1014 = vpop.f32.mrf.mxu0
  %v1015 = vadd.f32 %v972, %v1014
  %1016 = vmatmul.bf16.gmra.mxu0 %v404
  %v1017 = vpop.f32.mrf.mxu0
  %v1018 = vadd.f32 %v975, %v1017
  %v1019 = vpop.f32.mrf.mxu0
  %1020 = vdwg.mxu0
  %1021 = vmatpush.bf16.msra.mxu0 %v760
  %1022 = vmatpush.bf16.msra.mxu0 %v759
  %1023 = vmatpush.bf16.msra.mxu0 %v758
  %1024 = vmatpush.bf16.msra.mxu0 %v757
  %1025 = vmatpush.bf16.msra.mxu0 %v756
  %1026 = vmatpush.bf16.msra.mxu0 %v755
  %1027 = vmatpush.bf16.msra.mxu0 %v754
  %1028 = vmatpush.bf16.msra.mxu0 %v753
  %1029 = vmatmul.bf16.gmra.mxu0 %v357
  %v1030 = vpop.f32.mrf.mxu0
  %v1031 = vadd.f32 %v988, %v1030
  %v1032 = vpop.f32.mrf.mxu0
  %v1033 = vadd.f32 %v990, %v1032
  %1034 = vmatmul.bf16.gmra.mxu0 %v365
  %v1035 = vpop.f32.mrf.mxu0
  %v1036 = vadd.f32 %v993, %v1035
  %v1037 = vpop.f32.mrf.mxu0
  %v1038 = vadd.f32 %v995, %v1037
  %1039 = vmatmul.bf16.gmra.mxu0 %v373
  %v1040 = vpop.f32.mrf.mxu0
  %v1041 = vadd.f32 %v998, %v1040
  %v1042 = vpop.f32.mrf.mxu0
  %v1043 = vadd.f32 %v1000, %v1042
  %1044 = vmatmul.bf16.gmra.mxu0 %v381
  %v1045 = vpop.f32.mrf.mxu0
  %v1046 = vadd.f32 %v1003, %v1045
  %v1047 = vpop.f32.mrf.mxu0
  %v1048 = vadd.f32 %v1005, %v1047
  %1049 = vmatmul.bf16.gmra.mxu0 %v389
  %v1050 = vpop.f32.mrf.mxu0
  %v1051 = vadd.f32 %v1008, %v1050
  %v1052 = vpop.f32.mrf.mxu0
  %v1053 = vadd.f32 %v1010, %v1052
  %1054 = vmatmul.bf16.gmra.mxu0 %v397
  %v1055 = vpop.f32.mrf.mxu0
  %v1056 = vadd.f32 %v1013, %v1055
  %v1057 = vpop.f32.mrf.mxu0
  %v1058 = vadd.f32 %v1015, %v1057
  %1059 = vmatmul.bf16.gmra.mxu0 %v405
  %v1060 = vpop.f32.mrf.mxu0
  %v1061 = vadd.f32 %v1018, %v1060
  %v1062 = vpop.f32.mrf.mxu0
  %1063 = vdwg.mxu0
  %1064 = vmatpush.bf16.msra.mxu0 %v768
  %1065 = vmatpush.bf16.msra.mxu0 %v767
  %1066 = vmatpush.bf16.msra.mxu0 %v766
  %1067 = vmatpush.bf16.msra.mxu0 %v765
  %1068 = vmatpush.bf16.msra.mxu0 %v764
  %1069 = vmatpush.bf16.msra.mxu0 %v763
  %1070 = vmatpush.bf16.msra.mxu0 %v762
  %1071 = vmatpush.bf16.msra.mxu0 %v761
  %1072 = vmatmul.bf16.gmra.mxu0 %v358
  %v1073 = vpop.f32.mrf.mxu0
  %v1074 = vadd.f32 %v1031, %v1073
  %v1075 = vpop.f32.mrf.mxu0
  %v1076 = vadd.f32 %v1033, %v1075
  %1077 = vmatmul.bf16.gmra.mxu0 %v366
  %v1078 = vpop.f32.mrf.mxu0
  %v1079 = vadd.f32 %v1036, %v1078
  %v1080 = vpop.f32.mrf.mxu0
  %v1081 = vadd.f32 %v1038, %v1080
  %1082 = vmatmul.bf16.gmra.mxu0 %v374
  %v1083 = vpop.f32.mrf.mxu0
  %v1084 = vadd.f32 %v1041, %v1083
  %v1085 = vpop.f32.mrf.mxu0
  %v1086 = vadd.f32 %v1043, %v1085
  %1087 = vmatmul.bf16.gmra.mxu0 %v382
  %v1088 = vpop.f32.mrf.mxu0
  %v1089 = vadd.f32 %v1046, %v1088
  %v1090 = vpop.f32.mrf.mxu0
  %v1091 = vadd.f32 %v1048, %v1090
  %1092 = vmatmul.bf16.gmra.mxu0 %v390
  %v1093 = vpop.f32.mrf.mxu0
  %v1094 = vadd.f32 %v1051, %v1093
  %v1095 = vpop.f32.mrf.mxu0
  %v1096 = vadd.f32 %v1053, %v1095
  %1097 = vmatmul.bf16.gmra.mxu0 %v398
  %v1098 = vpop.f32.mrf.mxu0
  %v1099 = vadd.f32 %v1056, %v1098
  %v1100 = vpop.f32.mrf.mxu0
  %v1101 = vadd.f32 %v1058, %v1100
  %1102 = vmatmul.bf16.gmra.mxu0 %v406
  %v1103 = vpop.f32.mrf.mxu0
  %v1104 = vadd.f32 %v1061, %v1103
  %v1105 = vpop.f32.mrf.mxu0
  %1106 = vdwg.mxu0
  %1107 = vmatpush.bf16.msra.mxu0 %v776
  %1108 = vmatpush.bf16.msra.mxu0 %v775
  %1109 = vmatpush.bf16.msra.mxu0 %v774
  %1110 = vmatpush.bf16.msra.mxu0 %v773
  %1111 = vmatpush.bf16.msra.mxu0 %v772
  %1112 = vmatpush.bf16.msra.mxu0 %v771
  %1113 = vmatpush.bf16.msra.mxu0 %v770
  %1114 = vmatpush.bf16.msra.mxu0 %v769
  %1115 = vmatmul.bf16.gmra.mxu0 %v359
  %v1116 = vpop.f32.mrf.mxu0
  %v1117 = vadd.f32 %v1074, %v1116
  %v1118 = vpop.f32.mrf.mxu0
  %v1119 = vadd.f32 %v1076, %v1118
  %1120 = vmatmul.bf16.gmra.mxu0 %v367
  %v1121 = vpop.f32.mrf.mxu0
  %v1122 = vadd.f32 %v1079, %v1121
  %v1123 = vpop.f32.mrf.mxu0
  %v1124 = vadd.f32 %v1081, %v1123
  %1125 = vmatmul.bf16.gmra.mxu0 %v375
  %v1126 = vpop.f32.mrf.mxu0
  %v1127 = vadd.f32 %v1084, %v1126
  %v1128 = vpop.f32.mrf.mxu0
  %v1129 = vadd.f32 %v1086, %v1128
  %1130 = vmatmul.bf16.gmra.mxu0 %v383
  %v1131 = vpop.f32.mrf.mxu0
  %v1132 = vadd.f32 %v1089, %v1131
  %v1133 = vpop.f32.mrf.mxu0
  %v1134 = vadd.f32 %v1091, %v1133
  %1135 = vmatmul.bf16.gmra.mxu0 %v391
  %v1136 = vpop.f32.mrf.mxu0
  %v1137 = vadd.f32 %v1094, %v1136
  %v1138 = vpop.f32.mrf.mxu0
  %v1139 = vadd.f32 %v1096, %v1138
  %1140 = vmatmul.bf16.gmra.mxu0 %v399
  %v1141 = vpop.f32.mrf.mxu0
  %v1142 = vadd.f32 %v1099, %v1141
  %v1143 = vpop.f32.mrf.mxu0
  %v1144 = vadd.f32 %v1101, %v1143
  %1145 = vmatmul.bf16.gmra.mxu0 %v407
  %v1146 = vpop.f32.mrf.mxu0
  %v1147 = vadd.f32 %v1104, %v1146
  %v1148 = vpop.f32.mrf.mxu0
  %1149 = vdwg.mxu0
  %1150 = vmatpush.bf16.msra.mxu0 %v784
  %1151 = vmatpush.bf16.msra.mxu0 %v783
  %1152 = vmatpush.bf16.msra.mxu0 %v782
  %1153 = vmatpush.bf16.msra.mxu0 %v781
  %1154 = vmatpush.bf16.msra.mxu0 %v780
  %1155 = vmatpush.bf16.msra.mxu0 %v779
  %1156 = vmatpush.bf16.msra.mxu0 %v778
  %1157 = vmatpush.bf16.msra.mxu0 %v777
  %1158 = vmatmul.bf16.gmra.mxu0 %v360
  %v1159 = vpop.f32.mrf.mxu0
  %v1160 = vadd.f32 %v1117, %v1159
  %v1161 = vpop.f32.mrf.mxu0
  %v1162 = vadd.f32 %v1119, %v1161
  %1163 = vmatmul.bf16.gmra.mxu0 %v368
  %v1164 = vpop.f32.mrf.mxu0
  %v1165 = vadd.f32 %v1122, %v1164
  %v1166 = vpop.f32.mrf.mxu0
  %v1167 = vadd.f32 %v1124, %v1166
  %1168 = vmatmul.bf16.gmra.mxu0 %v376
  %v1169 = vpop.f32.mrf.mxu0
  %v1170 = vadd.f32 %v1127, %v1169
  %v1171 = vpop.f32.mrf.mxu0
  %v1172 = vadd.f32 %v1129, %v1171
  %1173 = vmatmul.bf16.gmra.mxu0 %v384
  %v1174 = vpop.f32.mrf.mxu0
  %v1175 = vadd.f32 %v1132, %v1174
  %v1176 = vpop.f32.mrf.mxu0
  %v1177 = vadd.f32 %v1134, %v1176
  %1178 = vmatmul.bf16.gmra.mxu0 %v392
  %v1179 = vpop.f32.mrf.mxu0
  %v1180 = vadd.f32 %v1137, %v1179
  %v1181 = vpop.f32.mrf.mxu0
  %v1182 = vadd.f32 %v1139, %v1181
  %1183 = vmatmul.bf16.gmra.mxu0 %v400
  %v1184 = vpop.f32.mrf.mxu0
  %v1185 = vadd.f32 %v1142, %v1184
  %v1186 = vpop.f32.mrf.mxu0
  %v1187 = vadd.f32 %v1144, %v1186
  %1188 = vmatmul.bf16.gmra.mxu0 %v408
  %v1189 = vpop.f32.mrf.mxu0
  %v1190 = vadd.f32 %v1147, %v1189
  %v1191 = vpop.f32.mrf.mxu0
  %1192 = vdwg.mxu0
  %v1193 = vld [vmem:[%s2] sm:$0x1]
  %v1195 = vperm.slane %v1193, 0
  %v1197 = vmul.f32 %v1160, %v1195
  %v1198 = vmul.f32 %v1162, %v1195
  %v1199 = vmul.f32 %v1165, %v1195
  %v1200 = vmul.f32 %v1167, %v1195
  %v1201 = vmul.f32 %v1170, %v1195
  %v1202 = vmul.f32 %v1172, %v1195
  %v1203 = vmul.f32 %v1175, %v1195
  %v1204 = vmul.f32 %v1177, %v1195
  %v1205 = vmul.f32 %v1180, %v1195
  %v1206 = vmul.f32 %v1182, %v1195
  %v1207 = vmul.f32 %v1185, %v1195
  %v1208 = vmul.f32 %v1187, %v1195
  %v1209 = vmul.f32 %v1190, %v1195
  %v1210 = vld [vmem:[%s3] sm:$0x1]
  %v1212 = vperm.slane %v1210, 0
  %v1214 = vadd.f32 %v1197, %v1212
  %v1215 = vadd.f32 %v1198, %v1212
  %v1216 = vadd.f32 %v1199, %v1212
  %v1217 = vadd.f32 %v1200, %v1212
  %v1218 = vadd.f32 %v1201, %v1212
  %v1219 = vadd.f32 %v1202, %v1212
  %v1220 = vadd.f32 %v1203, %v1212
  %v1221 = vadd.f32 %v1204, %v1212
  %v1222 = vadd.f32 %v1205, %v1212
  %v1223 = vadd.f32 %v1206, %v1212
  %v1224 = vadd.f32 %v1207, %v1212
  %v1225 = vadd.f32 %v1208, %v1212
  %v1226 = vadd.f32 %v1209, %v1212
  %v1227 = vtanh.pop %v1214
  %v1228 = vtanh.pop %v1215
  %v1229 = vtanh.pop %v1216
  %v1230 = vtanh.pop %v1217
  %v1231 = vtanh.pop %v1218
  %v1232 = vtanh.pop %v1219
  %v1233 = vtanh.pop %v1220
  %v1234 = vtanh.pop %v1221
  %v1235 = vtanh.pop %v1222
  %v1236 = vtanh.pop %v1223
  %v1237 = vtanh.pop %v1224
  %v1238 = vtanh.pop %v1225
  %v1239 = vtanh.pop %v1226
  %vm1240 = vcmask 130048
  %1241 = vst.msk [vmem:[%s4] sm:$0xff] %vm1240, %v1227
  %1242 = vst.msk [vmem:[%s4 + $0x8] sm:$0xff] %vm1240, %v1228
  %1243 = vst.msk [vmem:[%s4 + $0x10] sm:$0xff] %vm1240, %v1229
  %1244 = vst.msk [vmem:[%s4 + $0x18] sm:$0xff] %vm1240, %v1230
  %1245 = vst.msk [vmem:[%s4 + $0x20] sm:$0xff] %vm1240, %v1231
  %1246 = vst.msk [vmem:[%s4 + $0x28] sm:$0xff] %vm1240, %v1232
  %1247 = vst.msk [vmem:[%s4 + $0x30] sm:$0xff] %vm1240, %v1233
  %1248 = vst.msk [vmem:[%s4 + $0x38] sm:$0xff] %vm1240, %v1234
  %1249 = vst.msk [vmem:[%s4 + $0x40] sm:$0xff] %vm1240, %v1235
  %1250 = vst.msk [vmem:[%s4 + $0x48] sm:$0xff] %vm1240, %v1236
  %1251 = vst.msk [vmem:[%s4 + $0x50] sm:$0xff] %vm1240, %v1237
  %1252 = vst.msk [vmem:[%s4 + $0x58] sm:$0xff] %vm1240, %v1238
  %vm1253 = vcmask 123904
  %1254 = vst.msk [vmem:[%s4 + $0x60] sm:$0x3] %vm1253, %v1239
  // Predicated region
  $region18: #{generator_forward.5} parent=0 // pred_check
    _
  $region19: #{generator_forward.5} parent=0 // pred_check_branch
    %1256 = sbr.rel (0) target = $region21
  $region20: #{generator_forward.5} parent=0 // pred_region
    _
  $region21: #{generator_forward.5} parent=0 // pred_fallthru
    _
  // Predicated region
  $region22: #{generator_forward.5} parent=0 // pred_check
    _
  $region23: #{generator_forward.5} parent=0 // pred_check_branch
    %1258 = sbr.rel (0) target = $region25
  $region24: #{generator_forward.5} parent=0 // pred_region
    _
  $region25: #{generator_forward.5} parent=0 // pred_fallthru
    _

</llo_original>
